<compile_context>
chip_gen: v5e
topology: v5e:2x2
jax: 0.10.0
libtpu: 0.0.40
codegen_flags: <defaults>
</compile_context>

<pallas_src>
import functools
import math

import jax
import jax.numpy as jnp
from jax.experimental import pallas as pl
from jax.experimental.pallas import tpu as pltpu

_LANE = 128
_SUBLANE = 8


def _round_up(x, m):
    return ((x + m - 1) // m) * m


def _pad2d(a, rows, cols):
    r, c = a.shape
    if r == rows and c == cols:
        return a
    return jnp.pad(a, ((0, rows - r), (0, cols - c)))


def _vmem_limit_bytes():
    """Generation-aware VMEM limit: ~3/4 of physical, capped at 96 MiB, floor 32 MiB."""
    default = 32 * 1024 * 1024
    try:
        info = pltpu.get_tpu_info()
        cap = getattr(info, "vmem_capacity_bytes", None)
        if not cap:
            return default
        return max(default, min(int(cap) * 3 // 4, 96 * 1024 * 1024))
    except Exception:
        return default


# --------------------------------------------------------------------------------------
# Fused kernel: first Fourier layer + all used BaconLayers, per row tile.
# --------------------------------------------------------------------------------------
def _fused_bacon_kernel(x_ref, w1t_ref, b1_ref, wft_ref, bf_ref, wlt_ref, wot_ref,
                        bo_ref, out_ref, *, n_layers, relu, all_out, out_size):
    tn, k = x_ref.shape
    hp = w1t_ref.shape[1]

    # Hoist the coords lane-broadcasts out of the layer loop; reused by every filter.
    x = x_ref[...]
    xb = [jnp.broadcast_to(x[:, j:j + 1], (tn, hp)) for j in range(k)]

    def fourier_phase(wt, b):            # wt: (k, hp) value; b: (1, hp) value
        acc = xb[0] * wt[0:1, :] + b
        for j in range(1, k):
            acc = acc + xb[j] * wt[j:j + 1, :]
        return acc

    # first_filter: z = sin(coords @ W1^T + b1)
    z = jnp.sin(fourier_phase(w1t_ref[...], b1_ref[...]))

    output = None
    for l in range(n_layers):            # statically unrolled; weights stay VMEM-resident
        filt = jnp.sin(fourier_phase(wft_ref[l], bf_ref[l]))
        new_z = jnp.dot(z, wlt_ref[l], preferred_element_type=jnp.float32) * filt
        out = jnp.dot(new_z, wot_ref[l], preferred_element_type=jnp.float32) + bo_ref[l]
        if relu:
            out = jnp.maximum(out, 0.0)
        output = out if output is None else output + out
        z = new_z
        if all_out:
            out_ref[l] = output[:, :out_size].astype(out_ref.dtype)
    if not all_out:
        out_ref[...] = output[:, :out_size].astype(out_ref.dtype)


# --------------------------------------------------------------------------------------
# Parameter preparation (transpose + zero-pad once, reused by every forward call)
# --------------------------------------------------------------------------------------
def prepare_params(params):
    hidden, in_f = params["first_w"].shape
    out_size = params["layers"][0]["wo"].shape[0]
    hp = _round_up(hidden, _LANE)
    op = _round_up(out_size, _LANE)

    w1t = _pad2d(params["first_w"].T.astype(jnp.float32), in_f, hp)
    b1 = _pad2d(params["first_b"].reshape(1, -1).astype(jnp.float32), 1, hp)
    wft = jnp.stack([_pad2d(lp["wf"].T.astype(jnp.float32), in_f, hp)
                     for lp in params["layers"]])
    bf = jnp.stack([_pad2d(lp["bf"].reshape(1, -1).astype(jnp.float32), 1, hp)
                    for lp in params["layers"]])
    wlt = jnp.stack([_pad2d(lp["wl"].T.astype(jnp.float32), hp, hp)
                     for lp in params["layers"]])
    wot = jnp.stack([_pad2d(lp["wo"].T.astype(jnp.float32), hp, op)
                     for lp in params["layers"]])
    bo = jnp.stack([_pad2d(lp["bo"].reshape(1, -1).astype(jnp.float32), 1, op)
                    for lp in params["layers"]])
    return dict(w1t=w1t, b1=b1, wft=wft, bf=bf, wlt=wlt, wot=wot, bo=bo,
                in_size=in_f, hidden=hidden, out_size=out_size,
                n_layers=len(params["layers"]))


# --------------------------------------------------------------------------------------
# Module-level forward
# --------------------------------------------------------------------------------------
def frequency_marching_bacon_forward(coords, params, *, stop_after=0, all_out=False,
                                     relu=False, row_tile=1024):
    """FrequencyMarchingBACON.forward. coords: [N, in_size] float32.

    `params` may be the raw dict from init_frequency_marching_bacon or (preferably) the
    pre-padded dict from prepare_params.
    """
    prep = params if "w1t" in params else prepare_params(params)

    n, in_f = coords.shape
    assert in_f == prep["in_size"]
    hp = prep["w1t"].shape[1]
    op = prep["wot"].shape[2]
    out_size = prep["out_size"]
    total_layers = prep["n_layers"]
    n_layers = total_layers if all_out else min(stop_after + 1, total_layers)

    tn = _round_up(max(min(row_tile, n), _SUBLANE), _SUBLANE)
    n_pad = _round_up(n, tn)
    x_pad = _pad2d(coords.astype(jnp.float32), n_pad, in_f)

    # Only ship the layers actually used into VMEM.
    wft, bf = prep["wft"][:n_layers], prep["bf"][:n_layers]
    wlt, wot, bo = prep["wlt"][:n_layers], prep["wot"][:n_layers], prep["bo"][:n_layers]

    kern = functools.partial(_fused_bacon_kernel, n_layers=n_layers, relu=relu,
                             all_out=all_out, out_size=out_size)

    out_rows = n_pad * (n_layers if all_out else 1)
    ce = pl.CostEstimate(
        flops=2 * n_pad * ((n_layers + 1) * in_f * hp + n_layers * (hp * hp + hp * op)),
        transcendentals=n_pad * hp * (n_layers + 1),
        bytes_accessed=4 * (n_pad * in_f + in_f * hp + hp
                            + n_layers * (in_f * hp + hp + hp * hp + hp * op + op)
                            + out_rows * out_size))

    if all_out:
        out_shape = jax.ShapeDtypeStruct((n_layers, n_pad, out_size), jnp.float32)
        out_spec = pl.BlockSpec((n_layers, tn, out_size), lambda i: (0, i, 0))
    else:
        out_shape = jax.ShapeDtypeStruct((n_pad, out_size), jnp.float32)
        out_spec = pl.BlockSpec((tn, out_size), lambda i: (i, 0))

    out = pl.pallas_call(
        kern,
        out_shape=out_shape,
        grid=(n_pad // tn,),
        in_specs=[
            pl.BlockSpec((tn, in_f), lambda i: (i, 0)),                # coords tile (pipelined)
            pl.BlockSpec((in_f, hp), lambda i: (0, 0)),                # W1^T   (VMEM-resident)
            pl.BlockSpec((1, hp), lambda i: (0, 0)),                   # b1     (resident)
            pl.BlockSpec((n_layers, in_f, hp), lambda i: (0, 0, 0)),   # Wf^T stack (resident)
            pl.BlockSpec((n_layers, 1, hp), lambda i: (0, 0, 0)),      # bf stack   (resident)
            pl.BlockSpec((n_layers, hp, hp), lambda i: (0, 0, 0)),     # Wl^T stack (resident)
            pl.BlockSpec((n_layers, hp, op), lambda i: (0, 0, 0)),     # Wo^T stack (resident)
            pl.BlockSpec((n_layers, 1, op), lambda i: (0, 0, 0)),      # bo stack   (resident)
        ],
        out_specs=out_spec,
        compiler_params=pltpu.CompilerParams(
            dimension_semantics=("parallel",),
            vmem_limit_bytes=_vmem_limit_bytes()),
        cost_estimate=ce,
    )(x_pad, prep["w1t"], prep["b1"], wft, bf, wlt, wot, bo)

    if all_out:
        return out[:, :n, :]
    return out[:n, :]


# --------------------------------------------------------------------------------------
# Deterministic synthetic init matching the PyTorch __init__ distributions
# --------------------------------------------------------------------------------------
def init_frequency_marching_bacon(key, in_size, hidden_size, out_size,
                                  hidden_layers=3, frequency=(128, 128),
                                  lambdas=(0.3, 2.0)):
    lambda1, lambda2 = lambdas
    keys = iter(jax.random.split(key, 2 + 6 * hidden_layers))

    def uni(k, shape, lo, hi):
        return jax.random.uniform(k, shape, dtype=jnp.float32, minval=lo, maxval=hi)

    band = jnp.asarray(
        [math.pi * f / (1 + lambda1 + lambda2) ** hidden_layers for f in frequency],
        dtype=jnp.float32)

    # first_filter: W1[:, i] ~ U(-band[i], band[i]); b1 ~ U(-pi, pi)
    u = jax.random.uniform(next(keys), (hidden_size, in_size), dtype=jnp.float32)
    first_w = u * 2.0 * band[None, :] - band[None, :]
    first_b = uni(next(keys), (hidden_size,), -math.pi, math.pi)

    if in_size == 2:
        p = jnp.array([[0, 1], [1, 0], [1, 1], [-1, 1]], dtype=jnp.float32)
    elif in_size == 3:
        lst = [[i, j, 1] for i in range(-1, 2) for j in range(-1, 2)]
        lst += [[i, 1, 0] for i in range(-1, 2)]
        lst.append([1, 0, 0])
        p = jnp.array(lst, dtype=jnp.float32)
    else:
        raise NotImplementedError("in_size must be 2 or 3")

    mfn_bound = math.sqrt(6.0 / hidden_size)
    bias_bound = 1.0 / math.sqrt(hidden_size)     # torch default Linear bias init
    layers = []
    cur_band = band
    for li in range(1, hidden_layers + 1):
        idx = jax.random.randint(next(keys), (hidden_size,), 0, p.shape[0])
        r = p[idx]                                               # [hidden, in_size]
        u = jax.random.uniform(next(keys), (hidden_size, in_size), dtype=jnp.float32)
        wf = ((u * 2.0 * cur_band[None, :] - cur_band[None, :]) * lambda1
              + lambda2 * cur_band[None, :] * r)
        bf = uni(next(keys), (hidden_size,), -math.pi, math.pi)
        wl = uni(next(keys), (hidden_size, hidden_size), -mfn_bound, mfn_bound)
        wo = uni(next(keys), (out_size, hidden_size), -mfn_bound, mfn_bound)
        bo = uni(next(keys), (out_size,), -bias_bound, bias_bound)
        layers.append(dict(wf=wf, bf=bf, wl=wl, wo=wo, bo=bo))
        cur_band = jnp.asarray(
            [math.pi * f / (1 + lambda1 + lambda2) ** (hidden_layers - li)
             for f in frequency], dtype=jnp.float32)

    return dict(first_w=first_w, first_b=first_b, layers=layers)


if __name__ == "__main__":
    IN, HIDDEN, OUT, LAYERS = 2, 128, 2, 3
    SIDE = 16
    FREQ = (SIDE, SIDE)

    params = init_frequency_marching_bacon(
        jax.random.PRNGKey(0), IN, HIDDEN, OUT,
        hidden_layers=LAYERS, frequency=FREQ, lambdas=(0.3, 2.0))
    prep = prepare_params(params)   # transpose + pad once; reused by every forward

    # Coordinate grid in [-0.5, 0.5], as used by BACON image fitting.
    lin = jnp.linspace(-0.5, 0.5, SIDE, dtype=jnp.float32)
    xx, yy = jnp.meshgrid(lin, lin, indexing="ij")
    coords = jnp.stack([xx.ravel(), yy.ravel()], axis=-1)        # [256, 2]

    # Default forward (forward_just_one, stop_after=0). row_tile=128 -> 2 grid steps,
    # exercising the pipelined/parallel row tiling.
    y = frequency_marching_bacon_forward(coords, prep, row_tile=128)
    y = jax.block_until_ready(y)

    # forward_all path: single fused call writing cumulative per-layer outputs [L, N, out].
    y_all = frequency_marching_bacon_forward(coords, prep, all_out=True, row_tile=128)
    y_all = jax.block_until_ready(y_all)

    # Pure-JAX reference.
    hdot = functools.partial(jnp.dot, precision=jax.lax.Precision.HIGHEST)

    def ref_forward(coords, params, stop_after=0, all_out=False):
        z = jnp.sin(hdot(coords, params["first_w"].T) + params["first_b"])
        output = 0.0
        outs = []
        upper = len(params["layers"]) if all_out else stop_after + 1
        for i in range(upper):
            lp = params["layers"][i]
            filt = jnp.sin(hdot(coords, lp["wf"].T) + lp["bf"])
            new_z = hdot(z, lp["wl"].T) * filt
            output = output + hdot(new_z, lp["wo"].T) + lp["bo"]
            outs.append(output)
            z = new_z
        return jnp.stack(outs, axis=0) if all_out else output

    y_ref = ref_forward(coords, params)
    y_all_ref = ref_forward(coords, params, all_out=True)

    assert y.shape == (SIDE * SIDE, OUT), y.shape
    assert y_all.shape == (LAYERS, SIDE * SIDE, OUT), y_all.shape
    err1 = float(jnp.max(jnp.abs(y - y_ref)))
    err2 = float(jnp.max(jnp.abs(y_all - y_all_ref)))
    assert jnp.allclose(y, y_ref, atol=2e-3, rtol=2e-3), err1
    assert jnp.allclose(y_all, y_all_ref, atol=2e-3, rtol=2e-3), err2

    print("KERNEL_OK")
</pallas_src>

<mosaic_0001>
module attributes {stable_mosaic.version = 11 : i64} {
  func.func @_fused_bacon_kernel(%arg0: i32, %arg1: memref<128x2xf32, #tpu.memory_space<vmem>>, %arg2: memref<2x128xf32, #tpu.memory_space<vmem>>, %arg3: memref<1x128xf32, #tpu.memory_space<vmem>>, %arg4: memref<1x2x128xf32, #tpu.memory_space<vmem>>, %arg5: memref<1x1x128xf32, #tpu.memory_space<vmem>>, %arg6: memref<1x128x128xf32, #tpu.memory_space<vmem>>, %arg7: memref<1x128x128xf32, #tpu.memory_space<vmem>>, %arg8: memref<1x1x128xf32, #tpu.memory_space<vmem>>, %arg9: memref<128x2xf32, #tpu.memory_space<vmem>>) attributes {dimension_semantics = [#tpu.dimension_semantics<parallel>], iteration_bounds = array<i64: 2>, scalar_prefetch = 0 : i64, scratch_operands = 0 : i64, tpu.core_type = #tpu.core_type<tc>, window_params = [{transform_indices = @transform_0, window_bounds = array<i64: 128, 2>}, {pipeline_mode = #tpu.pipeline_mode<synchronous>, transform_indices = @transform_1, window_bounds = array<i64: 2, 128>}, {pipeline_mode = #tpu.pipeline_mode<synchronous>, transform_indices = @transform_2, window_bounds = array<i64: 1, 128>}, {pipeline_mode = #tpu.pipeline_mode<synchronous>, transform_indices = @transform_3, window_bounds = array<i64: 1, 2, 128>}, {pipeline_mode = #tpu.pipeline_mode<synchronous>, transform_indices = @transform_4, window_bounds = array<i64: 1, 1, 128>}, {pipeline_mode = #tpu.pipeline_mode<synchronous>, transform_indices = @transform_5, window_bounds = array<i64: 1, 128, 128>}, {pipeline_mode = #tpu.pipeline_mode<synchronous>, transform_indices = @transform_6, window_bounds = array<i64: 1, 128, 128>}, {pipeline_mode = #tpu.pipeline_mode<synchronous>, transform_indices = @transform_7, window_bounds = array<i64: 1, 1, 128>}, {transform_indices = @transform_8, window_bounds = array<i64: 128, 2>}]} {
    %c0 = arith.constant 0 : index
    %c0_0 = arith.constant 0 : index
    %0 = vector.load %arg1[%c0, %c0_0] : memref<128x2xf32, #tpu.memory_space<vmem>>, vector<128x2xf32>
    %1 = vector.extract_strided_slice %0 {offsets = [0, 0], sizes = [128, 1], strides = [1, 1]} : vector<128x2xf32> to vector<128x1xf32>
    %2 = vector.shape_cast %1 : vector<128x1xf32> to vector<128x1xf32>
    %3 = vector.broadcast %2 : vector<128x1xf32> to vector<128x128xf32>
    %4 = vector.extract_strided_slice %0 {offsets = [0, 1], sizes = [128, 1], strides = [1, 1]} : vector<128x2xf32> to vector<128x1xf32>
    %5 = vector.shape_cast %4 : vector<128x1xf32> to vector<128x1xf32>
    %6 = vector.broadcast %5 : vector<128x1xf32> to vector<128x128xf32>
    %c0_1 = arith.constant 0 : index
    %c0_2 = arith.constant 0 : index
    %7 = vector.load %arg2[%c0_1, %c0_2] : memref<2x128xf32, #tpu.memory_space<vmem>>, vector<2x128xf32>
    %c0_3 = arith.constant 0 : index
    %c0_4 = arith.constant 0 : index
    %8 = vector.load %arg3[%c0_3, %c0_4] : memref<1x128xf32, #tpu.memory_space<vmem>>, vector<1x128xf32>
    %9 = vector.extract_strided_slice %7 {offsets = [0, 0], sizes = [1, 128], strides = [1, 1]} : vector<2x128xf32> to vector<1x128xf32>
    %10 = vector.broadcast %9 : vector<1x128xf32> to vector<128x128xf32>
    %11 = arith.mulf %3, %10 : vector<128x128xf32>
    %12 = vector.broadcast %8 : vector<1x128xf32> to vector<128x128xf32>
    %13 = arith.addf %11, %12 : vector<128x128xf32>
    %14 = vector.extract_strided_slice %7 {offsets = [1, 0], sizes = [1, 128], strides = [1, 1]} : vector<2x128xf32> to vector<1x128xf32>
    %15 = vector.broadcast %14 : vector<1x128xf32> to vector<128x128xf32>
    %16 = arith.mulf %6, %15 : vector<128x128xf32>
    %17 = arith.addf %13, %16 : vector<128x128xf32>
    %18 = math.sin %17 : vector<128x128xf32>
    %c0_5 = arith.constant 0 : index
    %c0_6 = arith.constant 0 : index
    %c0_7 = arith.constant 0 : index
    %19 = vector.load %arg4[%c0_5, %c0_6, %c0_7] : memref<1x2x128xf32, #tpu.memory_space<vmem>>, vector<1x2x128xf32>
    %20 = vector.shape_cast %19 : vector<1x2x128xf32> to vector<2x128xf32>
    %c0_8 = arith.constant 0 : index
    %c0_9 = arith.constant 0 : index
    %c0_10 = arith.constant 0 : index
    %21 = vector.load %arg5[%c0_8, %c0_9, %c0_10] : memref<1x1x128xf32, #tpu.memory_space<vmem>>, vector<1x1x128xf32>
    %22 = vector.shape_cast %21 : vector<1x1x128xf32> to vector<1x128xf32>
    %23 = vector.extract_strided_slice %20 {offsets = [0, 0], sizes = [1, 128], strides = [1, 1]} : vector<2x128xf32> to vector<1x128xf32>
    %24 = vector.broadcast %23 : vector<1x128xf32> to vector<128x128xf32>
    %25 = arith.mulf %3, %24 : vector<128x128xf32>
    %26 = vector.broadcast %22 : vector<1x128xf32> to vector<128x128xf32>
    %27 = arith.addf %25, %26 : vector<128x128xf32>
    %28 = vector.extract_strided_slice %20 {offsets = [1, 0], sizes = [1, 128], strides = [1, 1]} : vector<2x128xf32> to vector<1x128xf32>
    %29 = vector.broadcast %28 : vector<1x128xf32> to vector<128x128xf32>
    %30 = arith.mulf %6, %29 : vector<128x128xf32>
    %31 = arith.addf %27, %30 : vector<128x128xf32>
    %32 = math.sin %31 : vector<128x128xf32>
    %c0_11 = arith.constant 0 : index
    %c0_12 = arith.constant 0 : index
    %c0_13 = arith.constant 0 : index
    %33 = vector.load %arg6[%c0_11, %c0_12, %c0_13] : memref<1x128x128xf32, #tpu.memory_space<vmem>>, vector<1x128x128xf32>
    %34 = vector.shape_cast %33 : vector<1x128x128xf32> to vector<128x128xf32>
    %cst = arith.constant dense<0.000000e+00> : vector<128x128xf32>
    %35 = tpu.matmul %18, %34, %cst {dimension_numbers = #tpu.dot_dimension_numbers<[1], [0], [0], [1], [0, 0, 1, 1], [], []>} : vector<128x128xf32>, vector<128x128xf32>, vector<128x128xf32> -> vector<128x128xf32>
    %36 = arith.mulf %35, %32 : vector<128x128xf32>
    %c0_14 = arith.constant 0 : index
    %c0_15 = arith.constant 0 : index
    %c0_16 = arith.constant 0 : index
    %37 = vector.load %arg7[%c0_14, %c0_15, %c0_16] : memref<1x128x128xf32, #tpu.memory_space<vmem>>, vector<1x128x128xf32>
    %38 = vector.shape_cast %37 : vector<1x128x128xf32> to vector<128x128xf32>
    %cst_17 = arith.constant dense<0.000000e+00> : vector<128x128xf32>
    %39 = tpu.matmul %36, %38, %cst_17 {dimension_numbers = #tpu.dot_dimension_numbers<[1], [0], [0], [1], [0, 0, 1, 1], [], []>} : vector<128x128xf32>, vector<128x128xf32>, vector<128x128xf32> -> vector<128x128xf32>
    %c0_18 = arith.constant 0 : index
    %c0_19 = arith.constant 0 : index
    %c0_20 = arith.constant 0 : index
    %40 = vector.load %arg8[%c0_18, %c0_19, %c0_20] : memref<1x1x128xf32, #tpu.memory_space<vmem>>, vector<1x1x128xf32>
    %41 = vector.shape_cast %40 : vector<1x1x128xf32> to vector<1x128xf32>
    %42 = vector.broadcast %41 : vector<1x128xf32> to vector<128x128xf32>
    %43 = arith.addf %39, %42 : vector<128x128xf32>
    %44 = vector.extract_strided_slice %43 {offsets = [0, 0], sizes = [128, 2], strides = [1, 1]} : vector<128x128xf32> to vector<128x2xf32>
    %c0_21 = arith.constant 0 : index
    %c0_22 = arith.constant 0 : index
    %45 = vector.load %arg9[%c0_21, %c0_22] : memref<128x2xf32, #tpu.memory_space<vmem>>, vector<128x2xf32>
    tpu.vector_store %arg9[%c0_21, %c0_22], %44 {strides = array<i32>} : memref<128x2xf32, #tpu.memory_space<vmem>>, vector<128x2xf32>,
    return
  }
  func.func @transform_0(%arg0: i32) -> (i32, i32) {
    %c0_i32 = arith.constant 0 : i32
    %c0_i32_0 = arith.constant 0 : i32
    return %arg0, %c0_i32 : i32, i32
  }
  func.func @transform_1(%arg0: i32) -> (i32, i32) {
    %c0_i32 = arith.constant 0 : i32
    %c0_i32_0 = arith.constant 0 : i32
    %c0_i32_1 = arith.constant 0 : i32
    return %c0_i32, %c0_i32_0 : i32, i32
  }
  func.func @transform_2(%arg0: i32) -> (i32, i32) {
    %c0_i32 = arith.constant 0 : i32
    %c0_i32_0 = arith.constant 0 : i32
    %c0_i32_1 = arith.constant 0 : i32
    return %c0_i32, %c0_i32_0 : i32, i32
  }
  func.func @transform_3(%arg0: i32) -> (i32, i32, i32) {
    %c0_i32 = arith.constant 0 : i32
    %c0_i32_0 = arith.constant 0 : i32
    %c0_i32_1 = arith.constant 0 : i32
    %c0_i32_2 = arith.constant 0 : i32
    return %c0_i32, %c0_i32_0, %c0_i32_1 : i32, i32, i32
  }
  func.func @transform_4(%arg0: i32) -> (i32, i32, i32) {
    %c0_i32 = arith.constant 0 : i32
    %c0_i32_0 = arith.constant 0 : i32
    %c0_i32_1 = arith.constant 0 : i32
    %c0_i32_2 = arith.constant 0 : i32
    return %c0_i32, %c0_i32_0, %c0_i32_1 : i32, i32, i32
  }
  func.func @transform_5(%arg0: i32) -> (i32, i32, i32) {
    %c0_i32 = arith.constant 0 : i32
    %c0_i32_0 = arith.constant 0 : i32
    %c0_i32_1 = arith.constant 0 : i32
    %c0_i32_2 = arith.constant 0 : i32
    return %c0_i32, %c0_i32_0, %c0_i32_1 : i32, i32, i32
  }
  func.func @transform_6(%arg0: i32) -> (i32, i32, i32) {
    %c0_i32 = arith.constant 0 : i32
    %c0_i32_0 = arith.constant 0 : i32
    %c0_i32_1 = arith.constant 0 : i32
    %c0_i32_2 = arith.constant 0 : i32
    return %c0_i32, %c0_i32_0, %c0_i32_1 : i32, i32, i32
  }
  func.func @transform_7(%arg0: i32) -> (i32, i32, i32) {
    %c0_i32 = arith.constant 0 : i32
    %c0_i32_0 = arith.constant 0 : i32
    %c0_i32_1 = arith.constant 0 : i32
    %c0_i32_2 = arith.constant 0 : i32
    return %c0_i32, %c0_i32_0, %c0_i32_1 : i32, i32, i32
  }
  func.func @transform_8(%arg0: i32) -> (i32, i32) {
    %c0_i32 = arith.constant 0 : i32
    %c0_i32_0 = arith.constant 0 : i32
    return %arg0, %c0_i32 : i32, i32
  }
}

</mosaic_0001>

<llo_original>
// kernel: tpu_custom_call.1
$region0: #{tpu_custom_call.1}
  #allocation0 [shape = 'u32[]', space=smem, size = 0x4, offset = 0x4, fixed_abs, tag = 'smem constant byte address 0x4 - core index']
  #allocation1 [shape = 'u32[72,128]{1,0:T(1,128)}', space=vmem, size = 0x9000, scoped, tag = 'internal scratch']
  %s0 = inlined_call_operand.vmem [shape: f32[256,2], index: 0, kind: input, shape index: {}]
  %s1 = inlined_call_operand.vmem [shape: f32[2,128], index: 1, kind: input, shape index: {}]
  %s2 = inlined_call_operand.hbm [shape: f32[1,128], index: 2, kind: input, shape index: {}]
  %s3 = inlined_call_operand.vmem [shape: f32[1,2,128], index: 3, kind: input, shape index: {}]
  %s4 = inlined_call_operand.vmem [shape: f32[1,1,128], index: 4, kind: input, shape index: {}]
  %s5 = inlined_call_operand.vmem [shape: f32[1,128,128], index: 5, kind: input, shape index: {}]
  %s6 = inlined_call_operand.vmem [shape: f32[1,128,128], index: 6, kind: input, shape index: {}]
  %s7 = inlined_call_operand.vmem [shape: f32[1,1,128], index: 7, kind: input, shape index: {}]
  %s8 = inlined_call_operand.vmem [shape: f32[256,2], index: 8, kind: output, shape index: {}]
  %s9 = sld [smem:[#allocation0]]
  $region69: #{tpu_custom_call.1} parent=0
    _
  %s11 = ssub.s32 1, %s9
  %s12 = scalar_select 0, %s11, %s9
  $region1: #{tpu_custom_call.1} parent=0
    #allocation2 [shape = 'u8[512]{0}', space=vmem, size = 0x400, scoped, tag = 'input window, operand 2, single buffered']
    #allocation3 [shape = 's32[2]{0}', space=sflag, size = 0x8, scoped, tag = 'scoped memory for tpu_custom_call.1']
    %13 = vsyncpa [#allocation3], 0
    loop: start=0, step=1, limit=4
    $region2: #{tpu_custom_call.1} parent=1 // loop_pre_header
      _
    $region3: #{tpu_custom_call.1} parent=1 // loop_header
      %s15 = sphi 0, %s19
      %p16 = scmp.ge.s32.totalorder %s15, 4
      %s25 = sphi 0, %s27
      %s28 = sphi 0, %s25
      %s29 = sphi 0, %s28
      %s45 = sphi 0, %s29
      %s49 = sphi 0, %s49
      %s51 = sphi 0, %s49
      %s52 = sphi 0, %s51
      %s66 = sphi 0, %s52
      %s70 = sphi 0, %s70
      %s72 = sphi 0, %s70
      %s73 = sphi 0, %s72
      %s87 = sphi 0, %s73
      %s91 = sphi 0, %s91
      %s93 = sphi 0, %s91
      %s94 = sphi 0, %s93
      %s108 = sphi 0, %s94
      %s112 = sphi 0, %s112
      %s114 = sphi 0, %s112
      %s115 = sphi 0, %s114
      %s129 = sphi 0, %s115
      %s133 = sphi 0, %s133
      %s135 = sphi 0, %s133
      %s136 = sphi 0, %s135
      %s150 = sphi 0, %s136
      %s154 = sphi 0, %s154
      %s156 = sphi 0, %s154
      %s157 = sphi 0, %s156
      %s171 = sphi 0, %s157
      %s175 = sphi 0, %s175
      %s177 = sphi 0, %s175
      %s178 = sphi 0, %s177
      %s192 = sphi 0, %s178
      %s198 = sphi 0, %s200
      %s201 = sphi 0, %s198
      %s202 = sphi 0, %s201
      %s218 = sphi 0, %s202
    $region4: #{tpu_custom_call.1} parent=1 // loop_header_branch
      %18 = sbr.rel (%p16) target = $region8
    $region5: #{tpu_custom_call.1} parent=1 // loop_body
      %s20 = ssub.s32 %s15, 1
      %s21 = ssub.s32 %s15, 2
      %s22 = sadd.s32 %s15, 1
      %s23 = ssub.s32 %s15, %s22
      %p24 = scmp.eq.s32.totalorder %s23, 0
      %s26 = sadd.s32 %s25, 1
      %s27 = scalar_select %p24, %s25, %s26
      %p30 = pneg %p24
      %p31 = scmp.eq.s32.totalorder %s15, 1
      %p32 = por %p30, %p31
      %p33 = scmp.ne.s32.totalorder %s25, %s28
      %p34 = scmp.eq.s32.totalorder %s15, 0
      %p35 = por %p33, %p34
      %p36 = scmp.ne.s32.totalorder %s25, %s28
      %p37 = scmp.eq.s32.totalorder %s20, 1
      %p38 = por %p36, %p37
      %p39 = scmp.ne.s32.totalorder %s28, %s29
      %p40 = scmp.eq.s32.totalorder %s20, 0
      %p41 = por %p39, %p40
      %p42 = scmp.ne.s32.totalorder %s28, %s29
      %p43 = scmp.eq.s32.totalorder %s21, 1
      %p44 = por %p42, %p43
      %p46 = scmp.ne.s32.totalorder %s29, %s45
      %p47 = scmp.eq.s32.totalorder %s21, 0
      %p48 = por %p46, %p47
      %s50 = sadd.s32 %s49, 1
      %p53 = scmp.eq.s32.totalorder %s15, 1
      %p54 = scmp.ne.s32.totalorder %s49, %s51
      %p55 = scmp.eq.s32.totalorder %s15, 0
      %p56 = por %p54, %p55
      %p57 = scmp.ne.s32.totalorder %s49, %s51
      %p58 = scmp.eq.s32.totalorder %s20, 1
      %p59 = por %p57, %p58
      %p60 = scmp.ne.s32.totalorder %s51, %s52
      %p61 = scmp.eq.s32.totalorder %s20, 0
      %p62 = por %p60, %p61
      %p63 = scmp.ne.s32.totalorder %s51, %s52
      %p64 = scmp.eq.s32.totalorder %s21, 1
      %p65 = por %p63, %p64
      %p67 = scmp.ne.s32.totalorder %s52, %s66
      %p68 = scmp.eq.s32.totalorder %s21, 0
      %p69 = por %p67, %p68
      %s71 = sadd.s32 %s70, 1
      %p74 = scmp.eq.s32.totalorder %s15, 1
      %p75 = scmp.ne.s32.totalorder %s70, %s72
      %p76 = scmp.eq.s32.totalorder %s15, 0
      %p77 = por %p75, %p76
      %p78 = scmp.ne.s32.totalorder %s70, %s72
      %p79 = scmp.eq.s32.totalorder %s20, 1
      %p80 = por %p78, %p79
      %p81 = scmp.ne.s32.totalorder %s72, %s73
      %p82 = scmp.eq.s32.totalorder %s20, 0
      %p83 = por %p81, %p82
      %p84 = scmp.ne.s32.totalorder %s72, %s73
      %p85 = scmp.eq.s32.totalorder %s21, 1
      %p86 = por %p84, %p85
      %p88 = scmp.ne.s32.totalorder %s73, %s87
      %p89 = scmp.eq.s32.totalorder %s21, 0
      %p90 = por %p88, %p89
      %s92 = sadd.s32 %s91, 1
      %p95 = scmp.eq.s32.totalorder %s15, 1
      %p96 = scmp.ne.s32.totalorder %s91, %s93
      %p97 = scmp.eq.s32.totalorder %s15, 0
      %p98 = por %p96, %p97
      %p99 = scmp.ne.s32.totalorder %s91, %s93
      %p100 = scmp.eq.s32.totalorder %s20, 1
      %p101 = por %p99, %p100
      %p102 = scmp.ne.s32.totalorder %s93, %s94
      %p103 = scmp.eq.s32.totalorder %s20, 0
      %p104 = por %p102, %p103
      %p105 = scmp.ne.s32.totalorder %s93, %s94
      %p106 = scmp.eq.s32.totalorder %s21, 1
      %p107 = por %p105, %p106
      %p109 = scmp.ne.s32.totalorder %s94, %s108
      %p110 = scmp.eq.s32.totalorder %s21, 0
      %p111 = por %p109, %p110
      %s113 = sadd.s32 %s112, 1
      %p116 = scmp.eq.s32.totalorder %s15, 1
      %p117 = scmp.ne.s32.totalorder %s112, %s114
      %p118 = scmp.eq.s32.totalorder %s15, 0
      %p119 = por %p117, %p118
      %p120 = scmp.ne.s32.totalorder %s112, %s114
      %p121 = scmp.eq.s32.totalorder %s20, 1
      %p122 = por %p120, %p121
      %p123 = scmp.ne.s32.totalorder %s114, %s115
      %p124 = scmp.eq.s32.totalorder %s20, 0
      %p125 = por %p123, %p124
      %p126 = scmp.ne.s32.totalorder %s114, %s115
      %p127 = scmp.eq.s32.totalorder %s21, 1
      %p128 = por %p126, %p127
      %p130 = scmp.ne.s32.totalorder %s115, %s129
      %p131 = scmp.eq.s32.totalorder %s21, 0
      %p132 = por %p130, %p131
      %s134 = sadd.s32 %s133, 1
      %p137 = scmp.eq.s32.totalorder %s15, 1
      %p138 = scmp.ne.s32.totalorder %s133, %s135
      %p139 = scmp.eq.s32.totalorder %s15, 0
      %p140 = por %p138, %p139
      %p141 = scmp.ne.s32.totalorder %s133, %s135
      %p142 = scmp.eq.s32.totalorder %s20, 1
      %p143 = por %p141, %p142
      %p144 = scmp.ne.s32.totalorder %s135, %s136
      %p145 = scmp.eq.s32.totalorder %s20, 0
      %p146 = por %p144, %p145
      %p147 = scmp.ne.s32.totalorder %s135, %s136
      %p148 = scmp.eq.s32.totalorder %s21, 1
      %p149 = por %p147, %p148
      %p151 = scmp.ne.s32.totalorder %s136, %s150
      %p152 = scmp.eq.s32.totalorder %s21, 0
      %p153 = por %p151, %p152
      %s155 = sadd.s32 %s154, 1
      %p158 = scmp.eq.s32.totalorder %s15, 1
      %p159 = scmp.ne.s32.totalorder %s154, %s156
      %p160 = scmp.eq.s32.totalorder %s15, 0
      %p161 = por %p159, %p160
      %p162 = scmp.ne.s32.totalorder %s154, %s156
      %p163 = scmp.eq.s32.totalorder %s20, 1
      %p164 = por %p162, %p163
      %p165 = scmp.ne.s32.totalorder %s156, %s157
      %p166 = scmp.eq.s32.totalorder %s20, 0
      %p167 = por %p165, %p166
      %p168 = scmp.ne.s32.totalorder %s156, %s157
      %p169 = scmp.eq.s32.totalorder %s21, 1
      %p170 = por %p168, %p169
      %p172 = scmp.ne.s32.totalorder %s157, %s171
      %p173 = scmp.eq.s32.totalorder %s21, 0
      %p174 = por %p172, %p173
      %s176 = sadd.s32 %s175, 1
      %p179 = scmp.eq.s32.totalorder %s15, 1
      %p180 = scmp.ne.s32.totalorder %s175, %s177
      %p181 = scmp.eq.s32.totalorder %s15, 0
      %p182 = por %p180, %p181
      %p183 = scmp.ne.s32.totalorder %s175, %s177
      %p184 = scmp.eq.s32.totalorder %s20, 1
      %p185 = por %p183, %p184
      %p186 = scmp.ne.s32.totalorder %s177, %s178
      %p187 = scmp.eq.s32.totalorder %s20, 0
      %p188 = por %p186, %p187
      %p189 = scmp.ne.s32.totalorder %s177, %s178
      %p190 = scmp.eq.s32.totalorder %s21, 1
      %p191 = por %p189, %p190
      %p193 = scmp.ne.s32.totalorder %s178, %s192
      %p194 = scmp.eq.s32.totalorder %s21, 0
      %p195 = por %p193, %p194
      %s196 = ssub.s32 %s15, %s22
      %p197 = scmp.eq.s32.totalorder %s196, 0
      %s199 = sadd.s32 %s198, 1
      %s200 = scalar_select %p197, %s198, %s199
      %p203 = pneg %p197
      %p204 = scmp.eq.s32.totalorder %s15, 1
      %p205 = por %p203, %p204
      %p206 = scmp.ne.s32.totalorder %s198, %s201
      %p207 = scmp.eq.s32.totalorder %s15, 0
      %p208 = por %p206, %p207
      %p209 = scmp.ne.s32.totalorder %s198, %s201
      %p210 = scmp.eq.s32.totalorder %s20, 1
      %p211 = por %p209, %p210
      %p212 = scmp.ne.s32.totalorder %s201, %s202
      %p213 = scmp.eq.s32.totalorder %s20, 0
      %p214 = por %p212, %p213
      %p215 = scmp.ne.s32.totalorder %s201, %s202
      %p216 = scmp.eq.s32.totalorder %s21, 1
      %p217 = por %p215, %p216
      %p219 = scmp.ne.s32.totalorder %s202, %s218
      %p220 = scmp.eq.s32.totalorder %s21, 0
      %p221 = por %p219, %p220
      %p222 = scmp.le.s32.totalorder 1, %s15
      %p223 = scmp.lt.s32.totalorder %s15, 3
      %p224 = pnand %p222, %p223
      %p225 = pneg %p224
      // Predicated region
      $region9: #{tpu_custom_call.1} parent=5 // pred_check
        _
      $region10: #{tpu_custom_call.1} parent=5 // pred_check_branch
        %227 = sbr.rel (%p224) target = $region12
      $region11: #{tpu_custom_call.1} parent=5 // pred_region
        %s228 = ssub.s32 %s15, 1
        // Predicated region
        $region13: #{tpu_custom_call.1} parent=11 // pred_check
          %p229 = pneg %p62
        $region14: #{tpu_custom_call.1} parent=11 // pred_check_branch
          %231 = sbr.rel (%p229) target = $region16
        $region15: #{tpu_custom_call.1} parent=11 // pred_region
          _
        $region16: #{tpu_custom_call.1} parent=11 // pred_fallthru
          _
        // Predicated region
        $region17: #{tpu_custom_call.1} parent=11 // pred_check
          %p232 = pneg %p83
        $region18: #{tpu_custom_call.1} parent=11 // pred_check_branch
          %234 = sbr.rel (%p232) target = $region20
        $region19: #{tpu_custom_call.1} parent=11 // pred_region
          %236 = vsyncadd [#allocation3], 0
          %s238 = sshll.u32 %s2, 4
          %s239 = int_to_ptr.hbm [resolvable:$true] %s238
          %s240 = sshll.u32 [#allocation2], 4
          %s241 = int_to_ptr.vmem [resolvable:$true] %s240
          %243 = dma.hbm_to_vmem [thread:$0]  %s239, 16, %s241, [#allocation3]
        $region20: #{tpu_custom_call.1} parent=11 // pred_fallthru
          _
        // Predicated region
        $region21: #{tpu_custom_call.1} parent=11 // pred_check
          %p244 = pneg %p104
        $region22: #{tpu_custom_call.1} parent=11 // pred_check_branch
          %246 = sbr.rel (%p244) target = $region24
        $region23: #{tpu_custom_call.1} parent=11 // pred_region
          _
        $region24: #{tpu_custom_call.1} parent=11 // pred_fallthru
          _
        // Predicated region
        $region25: #{tpu_custom_call.1} parent=11 // pred_check
          %p247 = pneg %p125
        $region26: #{tpu_custom_call.1} parent=11 // pred_check_branch
          %249 = sbr.rel (%p247) target = $region28
        $region27: #{tpu_custom_call.1} parent=11 // pred_region
          _
        $region28: #{tpu_custom_call.1} parent=11 // pred_fallthru
          _
        // Predicated region
        $region29: #{tpu_custom_call.1} parent=11 // pred_check
          %p250 = pneg %p146
        $region30: #{tpu_custom_call.1} parent=11 // pred_check_branch
          %252 = sbr.rel (%p250) target = $region32
        $region31: #{tpu_custom_call.1} parent=11 // pred_region
          _
        $region32: #{tpu_custom_call.1} parent=11 // pred_fallthru
          _
        // Predicated region
        $region33: #{tpu_custom_call.1} parent=11 // pred_check
          %p253 = pneg %p167
        $region34: #{tpu_custom_call.1} parent=11 // pred_check_branch
          %255 = sbr.rel (%p253) target = $region36
        $region35: #{tpu_custom_call.1} parent=11 // pred_region
          _
        $region36: #{tpu_custom_call.1} parent=11 // pred_fallthru
          _
        // Predicated region
        $region37: #{tpu_custom_call.1} parent=11 // pred_check
          %p256 = pneg %p188
        $region38: #{tpu_custom_call.1} parent=11 // pred_check_branch
          %258 = sbr.rel (%p256) target = $region40
        $region39: #{tpu_custom_call.1} parent=11 // pred_region
          _
        $region40: #{tpu_custom_call.1} parent=11 // pred_fallthru
          _
      $region12: #{tpu_custom_call.1} parent=5 // pred_fallthru
        _
      %p259 = scmp.lt.s32.totalorder %s15, 2
      // Predicated region
      $region41: #{tpu_custom_call.1} parent=5 // pred_check
        %p260 = pneg %p259
      $region42: #{tpu_custom_call.1} parent=5 // pred_check_branch
        %262 = sbr.rel (%p260) target = $region44
      $region43: #{tpu_custom_call.1} parent=5 // pred_region
        // Predicated region
        $region45: #{tpu_custom_call.1} parent=43 // pred_check
          %p263 = pneg %p35
        $region46: #{tpu_custom_call.1} parent=43 // pred_check_branch
          %265 = sbr.rel (%p263) target = $region48
        $region47: #{tpu_custom_call.1} parent=43 // pred_region
          %s266 = smul.u32 16, %s15
          %p267 = scmp.lt.s32.totalorder %s266, 31
          %s268 = scalar_select %p267, %s266, 31
          %s269 = smul.addr %s268, 8
          %s270 = scalar_lea.vmem %s0, %s269
          %s271 = smul.u32 16, %s15
        $region48: #{tpu_custom_call.1} parent=43 // pred_fallthru
          _
      $region44: #{tpu_custom_call.1} parent=5 // pred_fallthru
        _
      %p272 = scmp.le.s32.totalorder 1, %s15
      %p273 = scmp.lt.s32.totalorder %s15, 3
      %p274 = pnand %p272, %p273
      %p275 = pneg %p274
      // Predicated region
      $region49: #{tpu_custom_call.1} parent=5 // pred_check
        _
      $region50: #{tpu_custom_call.1} parent=5 // pred_check_branch
        %277 = sbr.rel (%p274) target = $region52
      $region51: #{tpu_custom_call.1} parent=5 // pred_region
        %s278 = ssub.s32 %s15, 1
        // Predicated region
        $region53: #{tpu_custom_call.1} parent=51 // pred_check
          %p279 = pneg %p83
        $region54: #{tpu_custom_call.1} parent=51 // pred_check_branch
          %281 = sbr.rel (%p279) target = $region56
        $region55: #{tpu_custom_call.1} parent=51 // pred_region
          %283 = dma.done [#allocation3], 16
        $region56: #{tpu_custom_call.1} parent=51 // pred_fallthru
          _
        %s284 = smul.u32 16, %s20
        %p285 = scmp.lt.s32.totalorder %s284, 31
        %s286 = scalar_select %p285, %s284, 31
        %s287 = smul.addr %s286, 8
        %s288 = scalar_lea.vmem %s0, %s287
        %p289 = pneg %p41
        %p290 = pneg %p38
        %p291 = pneg %p62
        %p292 = pneg %p59
        %p293 = pneg %p83
        %p294 = pneg %p80
        %p295 = pneg %p104
        %p296 = pneg %p101
        %p297 = pneg %p125
        %p298 = pneg %p122
        %p299 = pneg %p146
        %p300 = pneg %p143
        %p301 = pneg %p167
        %p302 = pneg %p164
        %p303 = pneg %p188
        %p304 = pneg %p185
        %p305 = pneg %p214
        %p306 = pneg %p211
        %s307 = smul.u32 16, %s20
        %p308 = scmp.lt.s32.totalorder %s307, 31
        %s309 = scalar_select %p308, %s307, 31
        %s310 = smul.addr %s309, 8
        %s311 = scalar_lea.vmem %s8, %s310
        %s312 = smul.u32 16, %s20
        %p313 = scmp.lt.s32.totalorder %s312, 31
        %s314 = scalar_select %p313, %s312, 31
        %s315 = smul.addr %s314, 8
        %s316 = scalar_lea.vmem %s0, %s315
        %s317 = smul.u32 16, %s20
        %s318 = smul.u32 16, %s20
        %p319 = scmp.lt.s32.totalorder %s318, 31
        %s320 = scalar_select %p319, %s318, 31
        %s321 = smul.addr %s320, 8
        %s322 = scalar_lea.vmem %s8, %s321
        %s323 = smul.u32 16, %s20
        %v324 = vld [vmem:[%s316] sm:$0xff]
        %v325 = vld [vmem:[%s316 + $0x8] sm:$0xff]
        %v326 = vld [vmem:[%s316 + $0x10] sm:$0xff]
        %v327 = vld [vmem:[%s316 + $0x18] sm:$0xff]
        %v328 = vld [vmem:[%s316 + $0x20] sm:$0xff]
        %v329 = vld [vmem:[%s316 + $0x28] sm:$0xff]
        %v330 = vld [vmem:[%s316 + $0x30] sm:$0xff]
        %v331 = vld [vmem:[%s316 + $0x38] sm:$0xff]
        %v332 = vld [vmem:[%s316 + $0x40] sm:$0xff]
        %v333 = vld [vmem:[%s316 + $0x48] sm:$0xff]
        %v334 = vld [vmem:[%s316 + $0x50] sm:$0xff]
        %v335 = vld [vmem:[%s316 + $0x58] sm:$0xff]
        %v336 = vld [vmem:[%s316 + $0x60] sm:$0xff]
        %v337 = vld [vmem:[%s316 + $0x68] sm:$0xff]
        %v338 = vld [vmem:[%s316 + $0x70] sm:$0xff]
        %v339 = vld [vmem:[%s316 + $0x78] sm:$0xff]
        %341 = vset.pattern.permute.xlu0 0
        %342 = vperm.xlu0 %341, %v324
        %v343 = vpop.permute.xlu0 %342
        %346 = vset.pattern.permute.xlu0 0
        %347 = vperm.xlu0 %346, %v325
        %v348 = vpop.permute.xlu0 %347
        %351 = vset.pattern.permute.xlu0 0
        %352 = vperm.xlu0 %351, %v326
        %v353 = vpop.permute.xlu0 %352
        %356 = vset.pattern.permute.xlu0 0
        %357 = vperm.xlu0 %356, %v327
        %v358 = vpop.permute.xlu0 %357
        %361 = vset.pattern.permute.xlu0 0
        %362 = vperm.xlu0 %361, %v328
        %v363 = vpop.permute.xlu0 %362
        %366 = vset.pattern.permute.xlu0 0
        %367 = vperm.xlu0 %366, %v329
        %v368 = vpop.permute.xlu0 %367
        %371 = vset.pattern.permute.xlu0 0
        %372 = vperm.xlu0 %371, %v330
        %v373 = vpop.permute.xlu0 %372
        %376 = vset.pattern.permute.xlu0 0
        %377 = vperm.xlu0 %376, %v331
        %v378 = vpop.permute.xlu0 %377
        %381 = vset.pattern.permute.xlu0 0
        %382 = vperm.xlu0 %381, %v332
        %v383 = vpop.permute.xlu0 %382
        %386 = vset.pattern.permute.xlu0 0
        %387 = vperm.xlu0 %386, %v333
        %v388 = vpop.permute.xlu0 %387
        %391 = vset.pattern.permute.xlu0 0
        %392 = vperm.xlu0 %391, %v334
        %v393 = vpop.permute.xlu0 %392
        %396 = vset.pattern.permute.xlu0 0
        %397 = vperm.xlu0 %396, %v335
        %v398 = vpop.permute.xlu0 %397
        %401 = vset.pattern.permute.xlu0 0
        %402 = vperm.xlu0 %401, %v336
        %v403 = vpop.permute.xlu0 %402
        %406 = vset.pattern.permute.xlu0 0
        %407 = vperm.xlu0 %406, %v337
        %v408 = vpop.permute.xlu0 %407
        %411 = vset.pattern.permute.xlu0 0
        %412 = vperm.xlu0 %411, %v338
        %v413 = vpop.permute.xlu0 %412
        %416 = vset.pattern.permute.xlu0 0
        %417 = vperm.xlu0 %416, %v339
        %v418 = vpop.permute.xlu0 %417
        %420 = vset.pattern.permute.xlu0 1
        %421 = vperm.xlu0 %420, %v324
        %v422 = vpop.permute.xlu0 %421
        %424 = vset.pattern.permute.xlu0 1
        %425 = vperm.xlu0 %424, %v325
        %v426 = vpop.permute.xlu0 %425
        %428 = vset.pattern.permute.xlu0 1
        %429 = vperm.xlu0 %428, %v326
        %v430 = vpop.permute.xlu0 %429
        %432 = vset.pattern.permute.xlu0 1
        %433 = vperm.xlu0 %432, %v327
        %v434 = vpop.permute.xlu0 %433
        %436 = vset.pattern.permute.xlu0 1
        %437 = vperm.xlu0 %436, %v328
        %v438 = vpop.permute.xlu0 %437
        %440 = vset.pattern.permute.xlu0 1
        %441 = vperm.xlu0 %440, %v329
        %v442 = vpop.permute.xlu0 %441
        %444 = vset.pattern.permute.xlu0 1
        %445 = vperm.xlu0 %444, %v330
        %v446 = vpop.permute.xlu0 %445
        %448 = vset.pattern.permute.xlu0 1
        %449 = vperm.xlu0 %448, %v331
        %v450 = vpop.permute.xlu0 %449
        %452 = vset.pattern.permute.xlu0 1
        %453 = vperm.xlu0 %452, %v332
        %v454 = vpop.permute.xlu0 %453
        %456 = vset.pattern.permute.xlu0 1
        %457 = vperm.xlu0 %456, %v333
        %v458 = vpop.permute.xlu0 %457
        %460 = vset.pattern.permute.xlu0 1
        %461 = vperm.xlu0 %460, %v334
        %v462 = vpop.permute.xlu0 %461
        %464 = vset.pattern.permute.xlu0 1
        %465 = vperm.xlu0 %464, %v335
        %v466 = vpop.permute.xlu0 %465
        %468 = vset.pattern.permute.xlu0 1
        %469 = vperm.xlu0 %468, %v336
        %v470 = vpop.permute.xlu0 %469
        %472 = vset.pattern.permute.xlu0 1
        %473 = vperm.xlu0 %472, %v337
        %v474 = vpop.permute.xlu0 %473
        %476 = vset.pattern.permute.xlu0 1
        %477 = vperm.xlu0 %476, %v338
        %v478 = vpop.permute.xlu0 %477
        %480 = vset.pattern.permute.xlu0 1
        %481 = vperm.xlu0 %480, %v339
        %v482 = vpop.permute.xlu0 %481
        %v484 = vld [vmem:[%s1] sm:$0x3]
        %v485 = vld [vmem:[#allocation2] sm:$0x1]
        %v486 = vperm.slane %v484, 0
        %v487 = vmul.f32 %v343, %v486
        %v488 = vmul.f32 %v348, %v486
        %v489 = vmul.f32 %v353, %v486
        %v490 = vmul.f32 %v358, %v486
        %v491 = vmul.f32 %v363, %v486
        %v492 = vmul.f32 %v368, %v486
        %v493 = vmul.f32 %v373, %v486
        %v494 = vmul.f32 %v378, %v486
        %v495 = vmul.f32 %v383, %v486
        %v496 = vmul.f32 %v388, %v486
        %v497 = vmul.f32 %v393, %v486
        %v498 = vmul.f32 %v398, %v486
        %v499 = vmul.f32 %v403, %v486
        %v500 = vmul.f32 %v408, %v486
        %v501 = vmul.f32 %v413, %v486
        %v502 = vmul.f32 %v418, %v486
        %v504 = vperm.slane %v485, 0
        %v506 = vadd.f32 %v487, %v504
        %v507 = vadd.f32 %v488, %v504
        %v508 = vadd.f32 %v489, %v504
        %v509 = vadd.f32 %v490, %v504
        %v510 = vadd.f32 %v491, %v504
        %v511 = vadd.f32 %v492, %v504
        %v512 = vadd.f32 %v493, %v504
        %v513 = vadd.f32 %v494, %v504
        %v514 = vadd.f32 %v495, %v504
        %v515 = vadd.f32 %v496, %v504
        %v516 = vadd.f32 %v497, %v504
        %v517 = vadd.f32 %v498, %v504
        %v518 = vadd.f32 %v499, %v504
        %v519 = vadd.f32 %v500, %v504
        %v520 = vadd.f32 %v501, %v504
        %v521 = vadd.f32 %v502, %v504
        %v522 = vperm.slane %v484, 1
        %v523 = vmul.f32 %v422, %v522
        %v524 = vmul.f32 %v426, %v522
        %v525 = vmul.f32 %v430, %v522
        %v526 = vmul.f32 %v434, %v522
        %v527 = vmul.f32 %v438, %v522
        %v528 = vmul.f32 %v442, %v522
        %v529 = vmul.f32 %v446, %v522
        %v530 = vmul.f32 %v450, %v522
        %v531 = vmul.f32 %v454, %v522
        %v532 = vmul.f32 %v458, %v522
        %v533 = vmul.f32 %v462, %v522
        %v534 = vmul.f32 %v466, %v522
        %v535 = vmul.f32 %v470, %v522
        %v536 = vmul.f32 %v474, %v522
        %v537 = vmul.f32 %v478, %v522
        %v538 = vmul.f32 %v482, %v522
        %v539 = vadd.f32 %v506, %v523
        %v540 = vadd.f32 %v507, %v524
        %v541 = vadd.f32 %v508, %v525
        %v542 = vadd.f32 %v509, %v526
        %v543 = vadd.f32 %v510, %v527
        %v544 = vadd.f32 %v511, %v528
        %v545 = vadd.f32 %v512, %v529
        %v546 = vadd.f32 %v513, %v530
        %v547 = vadd.f32 %v514, %v531
        %v548 = vadd.f32 %v515, %v532
        %v549 = vadd.f32 %v516, %v533
        %v550 = vadd.f32 %v517, %v534
        %v551 = vadd.f32 %v518, %v535
        %v552 = vadd.f32 %v519, %v536
        %v553 = vadd.f32 %v520, %v537
        %v554 = vadd.f32 %v521, %v538
        %v555 = vand.u32 2147483647, %v539
        %vm556 = vcmp.le.f32.partialorder %v555, 0.7853982
        %vm557 = vcmp.lt.s32.totalorder %v539, 0
        %v558 = vand.u32 %v539, 2139095040
        %v559 = vshrl.u32 %v558, 23
        %v560 = vsub.s32 %v559, 127
        %v561 = vand.u32 2147483647, %v539
        %v562 = vand.u32 %v561, 8388607
        %v563 = vor.u32 %v562, 8388608
        %v564 = vsub.s32 0, %v563
        %v565 = vadd.s32 %v560, 1
        %vm566 = vcmp.gt.s32.totalorder %v565, 0
        %v567 = vsel %vm566, %v565, 0
        %v568 = vshrl.u32 %v567, 5
        %v569 = vand.u32 %v567, 31
        %v570 = vsub.s32 32, %v569
        %v571 = vshrl.u32 683565275, %v570
        %v572 = vshll.u32 683565275, %v569
        %v573 = vshrl.u32 2475754826, %v570
        %v574 = vor.u32 %v572, %v573
        %v575 = vshll.u32 2475754826, %v569
        %v576 = vshrl.u32 2131351028, %v570
        %v577 = vor.u32 %v575, %v576
        %v578 = vshll.u32 2131351028, %v569
        %v579 = vshrl.u32 2102212464, %v570
        %v580 = vor.u32 %v578, %v579
        %v581 = vshll.u32 2102212464, %v569
        %v582 = vshrl.u32 920167782, %v570
        %v583 = vor.u32 %v581, %v582
        %v584 = vshll.u32 920167782, %v569
        %v585 = vshrl.u32 1326507024, %v570
        %v586 = vor.u32 %v584, %v585
        %vm587 = vcmp.lt.s32.totalorder %v568, 1
        %vm588 = vcmp.lt.s32.totalorder %v568, 2
        %vm589 = vcmp.lt.s32.totalorder %v568, 3
        %vm590 = vcmp.lt.s32.totalorder %v568, 4
        %v591 = vsel %vm587, %v571, %v574
        %v592 = vsel %vm590, %v580, 2102212464
        %v593 = vsel %vm589, %v577, %v592
        %v594 = vsel %vm588, %v591, %v593
        %v595 = vsel %vm587, %v574, %v577
        %v596 = vsel %vm590, %v583, 920167782
        %v597 = vsel %vm589, %v580, %v596
        %v598 = vsel %vm588, %v595, %v597
        %v599 = vsel %vm587, %v577, %v580
        %v600 = vsel %vm590, %v586, 1326507024
        %v601 = vsel %vm589, %v583, %v600
        %v602 = vsel %vm588, %v599, %v601
        %v603 = vshll.u32 %v563, 8
        %v604 = vand.u32 %v603, 65535
        %v605 = vshrl.u32 %v603, 16
        %v606 = vand.u32 %v602, 65535
        %v607 = vshrl.u32 %v602, 16
        %v608 = vmul.u32 %v604, %v606
        %v609 = vmul.u32 %v604, %v607
        %v610 = vmul.u32 %v605, %v606
        %v611 = vmul.u32 %v605, %v607
        %v612 = vshll.u32 %v609, 16
        %v613 = vshrl.u32 %v609, 16
        %v614 = vshll.u32 %v610, 16
        %v615 = vshrl.u32 %v610, 16
        %vm616 = vc.u32 %v608, %v612
        %v617 = vsel %vm616, 1, 0
        %v618 = vadd.s32 %v608, %v612
        %v619 = vadd.s32 %v611, %v617
        %vm620 = vc.u32 %v618, %v614
        %v621 = vsel %vm620, 1, 0
        %v622 = vadd.s32 %v618, %v614
        %v623 = vadd.s32 %v619, %v621
        %v624 = vadd.s32 %v623, %v613
        %v625 = vadd.s32 %v624, %v615
        %v626 = vand.u32 %v603, 65535
        %v627 = vshrl.u32 %v603, 16
        %v628 = vand.u32 %v598, 65535
        %v629 = vshrl.u32 %v598, 16
        %v630 = vmul.u32 %v626, %v628
        %v631 = vmul.u32 %v626, %v629
        %v632 = vmul.u32 %v627, %v628
        %v633 = vmul.u32 %v627, %v629
        %v634 = vshll.u32 %v631, 16
        %v635 = vshrl.u32 %v631, 16
        %v636 = vshll.u32 %v632, 16
        %v637 = vshrl.u32 %v632, 16
        %vm638 = vc.u32 %v630, %v634
        %v639 = vsel %vm638, 1, 0
        %v640 = vadd.s32 %v630, %v634
        %v641 = vadd.s32 %v633, %v639
        %vm642 = vc.u32 %v640, %v636
        %v643 = vsel %vm642, 1, 0
        %v644 = vadd.s32 %v640, %v636
        %v645 = vadd.s32 %v641, %v643
        %v646 = vadd.s32 %v645, %v635
        %v647 = vadd.s32 %v646, %v637
        %v648 = vmul.u32 %v603, %v594
        %v649 = vadd.s32 %v625, %v644
        %vm650 = vc.u32 %v625, %v644
        %v651 = vadd.s32 %v647, 1
        %v652 = vsel %vm650, %v651, %v647
        %v653 = vadd.s32 %v648, %v652
        %v654 = vadd.s32 %v653, 536870912
        %v655 = vshrl.u32 %v654, 30
        %v656 = vshll.u32 %v655, 30
        %v657 = vsub.s32 %v653, %v656
        %vm658 = vcmp.lt.s32.totalorder %v657, 0
        %v659 = vsub.s32 0, %v657
        %v660 = vsel %vm658, %v659, %v657
        %v661 = vclz %v660
        %v662 = vsub.s32 %v661, 2
        %vm663 = vcmp.gt.s32.totalorder 0, %v662
        %v664 = vsel %vm663, 0, %v662
        %v665 = vsub.s32 32, %v664
        %v666 = vshll.u32 %v657, %v664
        %v667 = vshrl.u32 %v649, %v665
        %v668 = vor.u32 %v666, %v667
        %v669 = vsub.s32 4294967266, %v664
        %v670 = vadd.s32 %v669, 127
        %v671 = vshll.u32 %v670, 23
        %v672 = vor.u32 4788187, %v671
        %v673 = vand.u32 2147483647, %v672
        %v675 = vcvt.s32.f32 %v668
        %v676 = vmul.f32 %v675, %v673
        %v677 = vxor.u32 %v676, 2147483648
        %v678 = vsel %vm557, %v677, %v676
        %v679 = vsub.s32 4, %v655
        %v680 = vsel %vm557, %v679, %v655
        %v681 = vsel %vm556, %v539, %v678
        %v682 = vsel %vm556, 0, %v680
        %v683 = vmul.f32 %v681, %v681
        %v684 = vmul.f32 %v683, -0.001358992
        %v685 = vadd.f32 %v684, 0.041655596
        %v686 = vmul.f32 %v683, %v685
        %v687 = vadd.f32 %v686, -0.4999988
        %v688 = vmul.f32 %v683, %v687
        %v689 = vadd.f32 1.0, %v688
        %v690 = vmul.f32 %v681, %v681
        %v691 = vmul.f32 %v690, -0.00019511016
        %v692 = vadd.f32 %v691, 0.008332121
        %v693 = vmul.f32 %v690, %v692
        %v694 = vadd.f32 %v693, -0.16666654
        %v695 = vmul.f32 %v690, %v694
        %v696 = vadd.f32 %v695, 1.0
        %v697 = vmul.f32 %v696, %v681
        %vm698 = vweird.f32 %v539
        %v699 = vadd.s32 %v682, 3
        %v700 = vand.u32 %v699, 3
        %vm701 = vcmp.lt.s32.totalorder %v700, 2
        %vm702 = vcmp.eq.s32.totalorder %v700, 0
        %v703 = vxor.u32 %v697, 2147483648
        %v704 = vsel %vm702, %v689, %v703
        %vm705 = vcmp.eq.s32.totalorder %v700, 2
        %v706 = vxor.u32 %v689, 2147483648
        %v707 = vsel %vm705, %v706, %v697
        %v708 = vsel %vm701, %v704, %v707
        %v709 = vsel %vm698, nan, %v708
        %v710 = vand.u32 2147483647, %v540
        %vm711 = vcmp.le.f32.partialorder %v710, 0.7853982
        %vm712 = vcmp.lt.s32.totalorder %v540, 0
        %v713 = vand.u32 %v540, 2139095040
        %v714 = vshrl.u32 %v713, 23
        %v715 = vsub.s32 %v714, 127
        %v716 = vand.u32 2147483647, %v540
        %v717 = vand.u32 %v716, 8388607
        %v718 = vor.u32 %v717, 8388608
        %v719 = vsub.s32 0, %v718
        %v720 = vadd.s32 %v715, 1
        %vm721 = vcmp.gt.s32.totalorder %v720, 0
        %v722 = vsel %vm721, %v720, 0
        %v723 = vshrl.u32 %v722, 5
        %v724 = vand.u32 %v722, 31
        %v725 = vsub.s32 32, %v724
        %v726 = vshrl.u32 683565275, %v725
        %v727 = vshll.u32 683565275, %v724
        %v728 = vshrl.u32 2475754826, %v725
        %v729 = vor.u32 %v727, %v728
        %v730 = vshll.u32 2475754826, %v724
        %v731 = vshrl.u32 2131351028, %v725
        %v732 = vor.u32 %v730, %v731
        %v733 = vshll.u32 2131351028, %v724
        %v734 = vshrl.u32 2102212464, %v725
        %v735 = vor.u32 %v733, %v734
        %v736 = vshll.u32 2102212464, %v724
        %v737 = vshrl.u32 920167782, %v725
        %v738 = vor.u32 %v736, %v737
        %v739 = vshll.u32 920167782, %v724
        %v740 = vshrl.u32 1326507024, %v725
        %v741 = vor.u32 %v739, %v740
        %vm742 = vcmp.lt.s32.totalorder %v723, 1
        %vm743 = vcmp.lt.s32.totalorder %v723, 2
        %vm744 = vcmp.lt.s32.totalorder %v723, 3
        %vm745 = vcmp.lt.s32.totalorder %v723, 4
        %v746 = vsel %vm742, %v726, %v729
        %v747 = vsel %vm745, %v735, 2102212464
        %v748 = vsel %vm744, %v732, %v747
        %v749 = vsel %vm743, %v746, %v748
        %v750 = vsel %vm742, %v729, %v732
        %v751 = vsel %vm745, %v738, 920167782
        %v752 = vsel %vm744, %v735, %v751
        %v753 = vsel %vm743, %v750, %v752
        %v754 = vsel %vm742, %v732, %v735
        %v755 = vsel %vm745, %v741, 1326507024
        %v756 = vsel %vm744, %v738, %v755
        %v757 = vsel %vm743, %v754, %v756
        %v758 = vshll.u32 %v718, 8
        %v759 = vand.u32 %v758, 65535
        %v760 = vshrl.u32 %v758, 16
        %v761 = vand.u32 %v757, 65535
        %v762 = vshrl.u32 %v757, 16
        %v763 = vmul.u32 %v759, %v761
        %v764 = vmul.u32 %v759, %v762
        %v765 = vmul.u32 %v760, %v761
        %v766 = vmul.u32 %v760, %v762
        %v767 = vshll.u32 %v764, 16
        %v768 = vshrl.u32 %v764, 16
        %v769 = vshll.u32 %v765, 16
        %v770 = vshrl.u32 %v765, 16
        %vm771 = vc.u32 %v763, %v767
        %v772 = vsel %vm771, 1, 0
        %v773 = vadd.s32 %v763, %v767
        %v774 = vadd.s32 %v766, %v772
        %vm775 = vc.u32 %v773, %v769
        %v776 = vsel %vm775, 1, 0
        %v777 = vadd.s32 %v773, %v769
        %v778 = vadd.s32 %v774, %v776
        %v779 = vadd.s32 %v778, %v768
        %v780 = vadd.s32 %v779, %v770
        %v781 = vand.u32 %v758, 65535
        %v782 = vshrl.u32 %v758, 16
        %v783 = vand.u32 %v753, 65535
        %v784 = vshrl.u32 %v753, 16
        %v785 = vmul.u32 %v781, %v783
        %v786 = vmul.u32 %v781, %v784
        %v787 = vmul.u32 %v782, %v783
        %v788 = vmul.u32 %v782, %v784
        %v789 = vshll.u32 %v786, 16
        %v790 = vshrl.u32 %v786, 16
        %v791 = vshll.u32 %v787, 16
        %v792 = vshrl.u32 %v787, 16
        %vm793 = vc.u32 %v785, %v789
        %v794 = vsel %vm793, 1, 0
        %v795 = vadd.s32 %v785, %v789
        %v796 = vadd.s32 %v788, %v794
        %vm797 = vc.u32 %v795, %v791
        %v798 = vsel %vm797, 1, 0
        %v799 = vadd.s32 %v795, %v791
        %v800 = vadd.s32 %v796, %v798
        %v801 = vadd.s32 %v800, %v790
        %v802 = vadd.s32 %v801, %v792
        %v803 = vmul.u32 %v758, %v749
        %v804 = vadd.s32 %v780, %v799
        %vm805 = vc.u32 %v780, %v799
        %v806 = vadd.s32 %v802, 1
        %v807 = vsel %vm805, %v806, %v802
        %v808 = vadd.s32 %v803, %v807
        %v809 = vadd.s32 %v808, 536870912
        %v810 = vshrl.u32 %v809, 30
        %v811 = vshll.u32 %v810, 30
        %v812 = vsub.s32 %v808, %v811
        %vm813 = vcmp.lt.s32.totalorder %v812, 0
        %v814 = vsub.s32 0, %v812
        %v815 = vsel %vm813, %v814, %v812
        %v816 = vclz %v815
        %v817 = vsub.s32 %v816, 2
        %vm818 = vcmp.gt.s32.totalorder 0, %v817
        %v819 = vsel %vm818, 0, %v817
        %v820 = vsub.s32 32, %v819
        %v821 = vshll.u32 %v812, %v819
        %v822 = vshrl.u32 %v804, %v820
        %v823 = vor.u32 %v821, %v822
        %v824 = vsub.s32 4294967266, %v819
        %v825 = vadd.s32 %v824, 127
        %v826 = vshll.u32 %v825, 23
        %v827 = vor.u32 4788187, %v826
        %v828 = vand.u32 2147483647, %v827
        %v830 = vcvt.s32.f32 %v823
        %v831 = vmul.f32 %v830, %v828
        %v832 = vxor.u32 %v831, 2147483648
        %v833 = vsel %vm712, %v832, %v831
        %v834 = vsub.s32 4, %v810
        %v835 = vsel %vm712, %v834, %v810
        %v836 = vsel %vm711, %v540, %v833
        %v837 = vsel %vm711, 0, %v835
        %v838 = vmul.f32 %v836, %v836
        %v839 = vmul.f32 %v838, -0.001358992
        %v840 = vadd.f32 %v839, 0.041655596
        %v841 = vmul.f32 %v838, %v840
        %v842 = vadd.f32 %v841, -0.4999988
        %v843 = vmul.f32 %v838, %v842
        %v844 = vadd.f32 1.0, %v843
        %v845 = vmul.f32 %v836, %v836
        %v846 = vmul.f32 %v845, -0.00019511016
        %v847 = vadd.f32 %v846, 0.008332121
        %v848 = vmul.f32 %v845, %v847
        %v849 = vadd.f32 %v848, -0.16666654
        %v850 = vmul.f32 %v845, %v849
        %v851 = vadd.f32 %v850, 1.0
        %v852 = vmul.f32 %v851, %v836
        %vm853 = vweird.f32 %v540
        %v854 = vadd.s32 %v837, 3
        %v855 = vand.u32 %v854, 3
        %vm856 = vcmp.lt.s32.totalorder %v855, 2
        %vm857 = vcmp.eq.s32.totalorder %v855, 0
        %v858 = vxor.u32 %v852, 2147483648
        %v859 = vsel %vm857, %v844, %v858
        %vm860 = vcmp.eq.s32.totalorder %v855, 2
        %v861 = vxor.u32 %v844, 2147483648
        %v862 = vsel %vm860, %v861, %v852
        %v863 = vsel %vm856, %v859, %v862
        %v864 = vsel %vm853, nan, %v863
        %v865 = vand.u32 2147483647, %v541
        %vm866 = vcmp.le.f32.partialorder %v865, 0.7853982
        %vm867 = vcmp.lt.s32.totalorder %v541, 0
        %v868 = vand.u32 %v541, 2139095040
        %v869 = vshrl.u32 %v868, 23
        %v870 = vsub.s32 %v869, 127
        %v871 = vand.u32 2147483647, %v541
        %v872 = vand.u32 %v871, 8388607
        %v873 = vor.u32 %v872, 8388608
        %v874 = vsub.s32 0, %v873
        %v875 = vadd.s32 %v870, 1
        %vm876 = vcmp.gt.s32.totalorder %v875, 0
        %v877 = vsel %vm876, %v875, 0
        %v878 = vshrl.u32 %v877, 5
        %v879 = vand.u32 %v877, 31
        %v880 = vsub.s32 32, %v879
        %v881 = vshrl.u32 683565275, %v880
        %v882 = vshll.u32 683565275, %v879
        %v883 = vshrl.u32 2475754826, %v880
        %v884 = vor.u32 %v882, %v883
        %v885 = vshll.u32 2475754826, %v879
        %v886 = vshrl.u32 2131351028, %v880
        %v887 = vor.u32 %v885, %v886
        %v888 = vshll.u32 2131351028, %v879
        %v889 = vshrl.u32 2102212464, %v880
        %v890 = vor.u32 %v888, %v889
        %v891 = vshll.u32 2102212464, %v879
        %v892 = vshrl.u32 920167782, %v880
        %v893 = vor.u32 %v891, %v892
        %v894 = vshll.u32 920167782, %v879
        %v895 = vshrl.u32 1326507024, %v880
        %v896 = vor.u32 %v894, %v895
        %vm897 = vcmp.lt.s32.totalorder %v878, 1
        %vm898 = vcmp.lt.s32.totalorder %v878, 2
        %vm899 = vcmp.lt.s32.totalorder %v878, 3
        %vm900 = vcmp.lt.s32.totalorder %v878, 4
        %v901 = vsel %vm897, %v881, %v884
        %v902 = vsel %vm900, %v890, 2102212464
        %v903 = vsel %vm899, %v887, %v902
        %v904 = vsel %vm898, %v901, %v903
        %v905 = vsel %vm897, %v884, %v887
        %v906 = vsel %vm900, %v893, 920167782
        %v907 = vsel %vm899, %v890, %v906
        %v908 = vsel %vm898, %v905, %v907
        %v909 = vsel %vm897, %v887, %v890
        %v910 = vsel %vm900, %v896, 1326507024
        %v911 = vsel %vm899, %v893, %v910
        %v912 = vsel %vm898, %v909, %v911
        %v913 = vshll.u32 %v873, 8
        %v914 = vand.u32 %v913, 65535
        %v915 = vshrl.u32 %v913, 16
        %v916 = vand.u32 %v912, 65535
        %v917 = vshrl.u32 %v912, 16
        %v918 = vmul.u32 %v914, %v916
        %v919 = vmul.u32 %v914, %v917
        %v920 = vmul.u32 %v915, %v916
        %v921 = vmul.u32 %v915, %v917
        %v922 = vshll.u32 %v919, 16
        %v923 = vshrl.u32 %v919, 16
        %v924 = vshll.u32 %v920, 16
        %v925 = vshrl.u32 %v920, 16
        %vm926 = vc.u32 %v918, %v922
        %v927 = vsel %vm926, 1, 0
        %v928 = vadd.s32 %v918, %v922
        %v929 = vadd.s32 %v921, %v927
        %vm930 = vc.u32 %v928, %v924
        %v931 = vsel %vm930, 1, 0
        %v932 = vadd.s32 %v928, %v924
        %v933 = vadd.s32 %v929, %v931
        %v934 = vadd.s32 %v933, %v923
        %v935 = vadd.s32 %v934, %v925
        %v936 = vand.u32 %v913, 65535
        %v937 = vshrl.u32 %v913, 16
        %v938 = vand.u32 %v908, 65535
        %v939 = vshrl.u32 %v908, 16
        %v940 = vmul.u32 %v936, %v938
        %v941 = vmul.u32 %v936, %v939
        %v942 = vmul.u32 %v937, %v938
        %v943 = vmul.u32 %v937, %v939
        %v944 = vshll.u32 %v941, 16
        %v945 = vshrl.u32 %v941, 16
        %v946 = vshll.u32 %v942, 16
        %v947 = vshrl.u32 %v942, 16
        %vm948 = vc.u32 %v940, %v944
        %v949 = vsel %vm948, 1, 0
        %v950 = vadd.s32 %v940, %v944
        %v951 = vadd.s32 %v943, %v949
        %vm952 = vc.u32 %v950, %v946
        %v953 = vsel %vm952, 1, 0
        %v954 = vadd.s32 %v950, %v946
        %v955 = vadd.s32 %v951, %v953
        %v956 = vadd.s32 %v955, %v945
        %v957 = vadd.s32 %v956, %v947
        %v958 = vmul.u32 %v913, %v904
        %v959 = vadd.s32 %v935, %v954
        %vm960 = vc.u32 %v935, %v954
        %v961 = vadd.s32 %v957, 1
        %v962 = vsel %vm960, %v961, %v957
        %v963 = vadd.s32 %v958, %v962
        %v964 = vadd.s32 %v963, 536870912
        %v965 = vshrl.u32 %v964, 30
        %v966 = vshll.u32 %v965, 30
        %v967 = vsub.s32 %v963, %v966
        %vm968 = vcmp.lt.s32.totalorder %v967, 0
        %v969 = vsub.s32 0, %v967
        %v970 = vsel %vm968, %v969, %v967
        %v971 = vclz %v970
        %v972 = vsub.s32 %v971, 2
        %vm973 = vcmp.gt.s32.totalorder 0, %v972
        %v974 = vsel %vm973, 0, %v972
        %v975 = vsub.s32 32, %v974
        %v976 = vshll.u32 %v967, %v974
        %v977 = vshrl.u32 %v959, %v975
        %v978 = vor.u32 %v976, %v977
        %v979 = vsub.s32 4294967266, %v974
        %v980 = vadd.s32 %v979, 127
        %v981 = vshll.u32 %v980, 23
        %v982 = vor.u32 4788187, %v981
        %v983 = vand.u32 2147483647, %v982
        %v985 = vcvt.s32.f32 %v978
        %v986 = vmul.f32 %v985, %v983
        %v987 = vxor.u32 %v986, 2147483648
        %v988 = vsel %vm867, %v987, %v986
        %v989 = vsub.s32 4, %v965
        %v990 = vsel %vm867, %v989, %v965
        %v991 = vsel %vm866, %v541, %v988
        %v992 = vsel %vm866, 0, %v990
        %v993 = vmul.f32 %v991, %v991
        %v994 = vmul.f32 %v993, -0.001358992
        %v995 = vadd.f32 %v994, 0.041655596
        %v996 = vmul.f32 %v993, %v995
        %v997 = vadd.f32 %v996, -0.4999988
        %v998 = vmul.f32 %v993, %v997
        %v999 = vadd.f32 1.0, %v998
        %v1000 = vmul.f32 %v991, %v991
        %v1001 = vmul.f32 %v1000, -0.00019511016
        %v1002 = vadd.f32 %v1001, 0.008332121
        %v1003 = vmul.f32 %v1000, %v1002
        %v1004 = vadd.f32 %v1003, -0.16666654
        %v1005 = vmul.f32 %v1000, %v1004
        %v1006 = vadd.f32 %v1005, 1.0
        %v1007 = vmul.f32 %v1006, %v991
        %vm1008 = vweird.f32 %v541
        %v1009 = vadd.s32 %v992, 3
        %v1010 = vand.u32 %v1009, 3
        %vm1011 = vcmp.lt.s32.totalorder %v1010, 2
        %vm1012 = vcmp.eq.s32.totalorder %v1010, 0
        %v1013 = vxor.u32 %v1007, 2147483648
        %v1014 = vsel %vm1012, %v999, %v1013
        %vm1015 = vcmp.eq.s32.totalorder %v1010, 2
        %v1016 = vxor.u32 %v999, 2147483648
        %v1017 = vsel %vm1015, %v1016, %v1007
        %v1018 = vsel %vm1011, %v1014, %v1017
        %v1019 = vsel %vm1008, nan, %v1018
        %v1020 = vand.u32 2147483647, %v542
        %vm1021 = vcmp.le.f32.partialorder %v1020, 0.7853982
        %vm1022 = vcmp.lt.s32.totalorder %v542, 0
        %v1023 = vand.u32 %v542, 2139095040
        %v1024 = vshrl.u32 %v1023, 23
        %v1025 = vsub.s32 %v1024, 127
        %v1026 = vand.u32 2147483647, %v542
        %v1027 = vand.u32 %v1026, 8388607
        %v1028 = vor.u32 %v1027, 8388608
        %v1029 = vsub.s32 0, %v1028
        %v1030 = vadd.s32 %v1025, 1
        %vm1031 = vcmp.gt.s32.totalorder %v1030, 0
        %v1032 = vsel %vm1031, %v1030, 0
        %v1033 = vshrl.u32 %v1032, 5
        %v1034 = vand.u32 %v1032, 31
        %v1035 = vsub.s32 32, %v1034
        %v1036 = vshrl.u32 683565275, %v1035
        %v1037 = vshll.u32 683565275, %v1034
        %v1038 = vshrl.u32 2475754826, %v1035
        %v1039 = vor.u32 %v1037, %v1038
        %v1040 = vshll.u32 2475754826, %v1034
        %v1041 = vshrl.u32 2131351028, %v1035
        %v1042 = vor.u32 %v1040, %v1041
        %v1043 = vshll.u32 2131351028, %v1034
        %v1044 = vshrl.u32 2102212464, %v1035
        %v1045 = vor.u32 %v1043, %v1044
        %v1046 = vshll.u32 2102212464, %v1034
        %v1047 = vshrl.u32 920167782, %v1035
        %v1048 = vor.u32 %v1046, %v1047
        %v1049 = vshll.u32 920167782, %v1034
        %v1050 = vshrl.u32 1326507024, %v1035
        %v1051 = vor.u32 %v1049, %v1050
        %vm1052 = vcmp.lt.s32.totalorder %v1033, 1
        %vm1053 = vcmp.lt.s32.totalorder %v1033, 2
        %vm1054 = vcmp.lt.s32.totalorder %v1033, 3
        %vm1055 = vcmp.lt.s32.totalorder %v1033, 4
        %v1056 = vsel %vm1052, %v1036, %v1039
        %v1057 = vsel %vm1055, %v1045, 2102212464
        %v1058 = vsel %vm1054, %v1042, %v1057
        %v1059 = vsel %vm1053, %v1056, %v1058
        %v1060 = vsel %vm1052, %v1039, %v1042
        %v1061 = vsel %vm1055, %v1048, 920167782
        %v1062 = vsel %vm1054, %v1045, %v1061
        %v1063 = vsel %vm1053, %v1060, %v1062
        %v1064 = vsel %vm1052, %v1042, %v1045
        %v1065 = vsel %vm1055, %v1051, 1326507024
        %v1066 = vsel %vm1054, %v1048, %v1065
        %v1067 = vsel %vm1053, %v1064, %v1066
        %v1068 = vshll.u32 %v1028, 8
        %v1069 = vand.u32 %v1068, 65535
        %v1070 = vshrl.u32 %v1068, 16
        %v1071 = vand.u32 %v1067, 65535
        %v1072 = vshrl.u32 %v1067, 16
        %v1073 = vmul.u32 %v1069, %v1071
        %v1074 = vmul.u32 %v1069, %v1072
        %v1075 = vmul.u32 %v1070, %v1071
        %v1076 = vmul.u32 %v1070, %v1072
        %v1077 = vshll.u32 %v1074, 16
        %v1078 = vshrl.u32 %v1074, 16
        %v1079 = vshll.u32 %v1075, 16
        %v1080 = vshrl.u32 %v1075, 16
        %vm1081 = vc.u32 %v1073, %v1077
        %v1082 = vsel %vm1081, 1, 0
        %v1083 = vadd.s32 %v1073, %v1077
        %v1084 = vadd.s32 %v1076, %v1082
        %vm1085 = vc.u32 %v1083, %v1079
        %v1086 = vsel %vm1085, 1, 0
        %v1087 = vadd.s32 %v1083, %v1079
        %v1088 = vadd.s32 %v1084, %v1086
        %v1089 = vadd.s32 %v1088, %v1078
        %v1090 = vadd.s32 %v1089, %v1080
        %v1091 = vand.u32 %v1068, 65535
        %v1092 = vshrl.u32 %v1068, 16
        %v1093 = vand.u32 %v1063, 65535
        %v1094 = vshrl.u32 %v1063, 16
        %v1095 = vmul.u32 %v1091, %v1093
        %v1096 = vmul.u32 %v1091, %v1094
        %v1097 = vmul.u32 %v1092, %v1093
        %v1098 = vmul.u32 %v1092, %v1094
        %v1099 = vshll.u32 %v1096, 16
        %v1100 = vshrl.u32 %v1096, 16
        %v1101 = vshll.u32 %v1097, 16
        %v1102 = vshrl.u32 %v1097, 16
        %vm1103 = vc.u32 %v1095, %v1099
        %v1104 = vsel %vm1103, 1, 0
        %v1105 = vadd.s32 %v1095, %v1099
        %v1106 = vadd.s32 %v1098, %v1104
        %vm1107 = vc.u32 %v1105, %v1101
        %v1108 = vsel %vm1107, 1, 0
        %v1109 = vadd.s32 %v1105, %v1101
        %v1110 = vadd.s32 %v1106, %v1108
        %v1111 = vadd.s32 %v1110, %v1100
        %v1112 = vadd.s32 %v1111, %v1102
        %v1113 = vmul.u32 %v1068, %v1059
        %v1114 = vadd.s32 %v1090, %v1109
        %vm1115 = vc.u32 %v1090, %v1109
        %v1116 = vadd.s32 %v1112, 1
        %v1117 = vsel %vm1115, %v1116, %v1112
        %v1118 = vadd.s32 %v1113, %v1117
        %v1119 = vadd.s32 %v1118, 536870912
        %v1120 = vshrl.u32 %v1119, 30
        %v1121 = vshll.u32 %v1120, 30
        %v1122 = vsub.s32 %v1118, %v1121
        %vm1123 = vcmp.lt.s32.totalorder %v1122, 0
        %v1124 = vsub.s32 0, %v1122
        %v1125 = vsel %vm1123, %v1124, %v1122
        %v1126 = vclz %v1125
        %v1127 = vsub.s32 %v1126, 2
        %vm1128 = vcmp.gt.s32.totalorder 0, %v1127
        %v1129 = vsel %vm1128, 0, %v1127
        %v1130 = vsub.s32 32, %v1129
        %v1131 = vshll.u32 %v1122, %v1129
        %v1132 = vshrl.u32 %v1114, %v1130
        %v1133 = vor.u32 %v1131, %v1132
        %v1134 = vsub.s32 4294967266, %v1129
        %v1135 = vadd.s32 %v1134, 127
        %v1136 = vshll.u32 %v1135, 23
        %v1137 = vor.u32 4788187, %v1136
        %v1138 = vand.u32 2147483647, %v1137
        %v1140 = vcvt.s32.f32 %v1133
        %v1141 = vmul.f32 %v1140, %v1138
        %v1142 = vxor.u32 %v1141, 2147483648
        %v1143 = vsel %vm1022, %v1142, %v1141
        %v1144 = vsub.s32 4, %v1120
        %v1145 = vsel %vm1022, %v1144, %v1120
        %v1146 = vsel %vm1021, %v542, %v1143
        %v1147 = vsel %vm1021, 0, %v1145
        %v1148 = vmul.f32 %v1146, %v1146
        %v1149 = vmul.f32 %v1148, -0.001358992
        %v1150 = vadd.f32 %v1149, 0.041655596
        %v1151 = vmul.f32 %v1148, %v1150
        %v1152 = vadd.f32 %v1151, -0.4999988
        %v1153 = vmul.f32 %v1148, %v1152
        %v1154 = vadd.f32 1.0, %v1153
        %v1155 = vmul.f32 %v1146, %v1146
        %v1156 = vmul.f32 %v1155, -0.00019511016
        %v1157 = vadd.f32 %v1156, 0.008332121
        %v1158 = vmul.f32 %v1155, %v1157
        %v1159 = vadd.f32 %v1158, -0.16666654
        %v1160 = vmul.f32 %v1155, %v1159
        %v1161 = vadd.f32 %v1160, 1.0
        %v1162 = vmul.f32 %v1161, %v1146
        %vm1163 = vweird.f32 %v542
        %v1164 = vadd.s32 %v1147, 3
        %v1165 = vand.u32 %v1164, 3
        %vm1166 = vcmp.lt.s32.totalorder %v1165, 2
        %vm1167 = vcmp.eq.s32.totalorder %v1165, 0
        %v1168 = vxor.u32 %v1162, 2147483648
        %v1169 = vsel %vm1167, %v1154, %v1168
        %vm1170 = vcmp.eq.s32.totalorder %v1165, 2
        %v1171 = vxor.u32 %v1154, 2147483648
        %v1172 = vsel %vm1170, %v1171, %v1162
        %v1173 = vsel %vm1166, %v1169, %v1172
        %v1174 = vsel %vm1163, nan, %v1173
        %v1175 = vand.u32 2147483647, %v543
        %vm1176 = vcmp.le.f32.partialorder %v1175, 0.7853982
        %vm1177 = vcmp.lt.s32.totalorder %v543, 0
        %v1178 = vand.u32 %v543, 2139095040
        %v1179 = vshrl.u32 %v1178, 23
        %v1180 = vsub.s32 %v1179, 127
        %v1181 = vand.u32 2147483647, %v543
        %v1182 = vand.u32 %v1181, 8388607
        %v1183 = vor.u32 %v1182, 8388608
        %v1184 = vsub.s32 0, %v1183
        %v1185 = vadd.s32 %v1180, 1
        %vm1186 = vcmp.gt.s32.totalorder %v1185, 0
        %v1187 = vsel %vm1186, %v1185, 0
        %v1188 = vshrl.u32 %v1187, 5
        %v1189 = vand.u32 %v1187, 31
        %v1190 = vsub.s32 32, %v1189
        %v1191 = vshrl.u32 683565275, %v1190
        %v1192 = vshll.u32 683565275, %v1189
        %v1193 = vshrl.u32 2475754826, %v1190
        %v1194 = vor.u32 %v1192, %v1193
        %v1195 = vshll.u32 2475754826, %v1189
        %v1196 = vshrl.u32 2131351028, %v1190
        %v1197 = vor.u32 %v1195, %v1196
        %v1198 = vshll.u32 2131351028, %v1189
        %v1199 = vshrl.u32 2102212464, %v1190
        %v1200 = vor.u32 %v1198, %v1199
        %v1201 = vshll.u32 2102212464, %v1189
        %v1202 = vshrl.u32 920167782, %v1190
        %v1203 = vor.u32 %v1201, %v1202
        %v1204 = vshll.u32 920167782, %v1189
        %v1205 = vshrl.u32 1326507024, %v1190
        %v1206 = vor.u32 %v1204, %v1205
        %vm1207 = vcmp.lt.s32.totalorder %v1188, 1
        %vm1208 = vcmp.lt.s32.totalorder %v1188, 2
        %vm1209 = vcmp.lt.s32.totalorder %v1188, 3
        %vm1210 = vcmp.lt.s32.totalorder %v1188, 4
        %v1211 = vsel %vm1207, %v1191, %v1194
        %v1212 = vsel %vm1210, %v1200, 2102212464
        %v1213 = vsel %vm1209, %v1197, %v1212
        %v1214 = vsel %vm1208, %v1211, %v1213
        %v1215 = vsel %vm1207, %v1194, %v1197
        %v1216 = vsel %vm1210, %v1203, 920167782
        %v1217 = vsel %vm1209, %v1200, %v1216
        %v1218 = vsel %vm1208, %v1215, %v1217
        %v1219 = vsel %vm1207, %v1197, %v1200
        %v1220 = vsel %vm1210, %v1206, 1326507024
        %v1221 = vsel %vm1209, %v1203, %v1220
        %v1222 = vsel %vm1208, %v1219, %v1221
        %v1223 = vshll.u32 %v1183, 8
        %v1224 = vand.u32 %v1223, 65535
        %v1225 = vshrl.u32 %v1223, 16
        %v1226 = vand.u32 %v1222, 65535
        %v1227 = vshrl.u32 %v1222, 16
        %v1228 = vmul.u32 %v1224, %v1226
        %v1229 = vmul.u32 %v1224, %v1227
        %v1230 = vmul.u32 %v1225, %v1226
        %v1231 = vmul.u32 %v1225, %v1227
        %v1232 = vshll.u32 %v1229, 16
        %v1233 = vshrl.u32 %v1229, 16
        %v1234 = vshll.u32 %v1230, 16
        %v1235 = vshrl.u32 %v1230, 16
        %vm1236 = vc.u32 %v1228, %v1232
        %v1237 = vsel %vm1236, 1, 0
        %v1238 = vadd.s32 %v1228, %v1232
        %v1239 = vadd.s32 %v1231, %v1237
        %vm1240 = vc.u32 %v1238, %v1234
        %v1241 = vsel %vm1240, 1, 0
        %v1242 = vadd.s32 %v1238, %v1234
        %v1243 = vadd.s32 %v1239, %v1241
        %v1244 = vadd.s32 %v1243, %v1233
        %v1245 = vadd.s32 %v1244, %v1235
        %v1246 = vand.u32 %v1223, 65535
        %v1247 = vshrl.u32 %v1223, 16
        %v1248 = vand.u32 %v1218, 65535
        %v1249 = vshrl.u32 %v1218, 16
        %v1250 = vmul.u32 %v1246, %v1248
        %v1251 = vmul.u32 %v1246, %v1249
        %v1252 = vmul.u32 %v1247, %v1248
        %v1253 = vmul.u32 %v1247, %v1249
        %v1254 = vshll.u32 %v1251, 16
        %v1255 = vshrl.u32 %v1251, 16
        %v1256 = vshll.u32 %v1252, 16
        %v1257 = vshrl.u32 %v1252, 16
        %vm1258 = vc.u32 %v1250, %v1254
        %v1259 = vsel %vm1258, 1, 0
        %v1260 = vadd.s32 %v1250, %v1254
        %v1261 = vadd.s32 %v1253, %v1259
        %vm1262 = vc.u32 %v1260, %v1256
        %v1263 = vsel %vm1262, 1, 0
        %v1264 = vadd.s32 %v1260, %v1256
        %v1265 = vadd.s32 %v1261, %v1263
        %v1266 = vadd.s32 %v1265, %v1255
        %v1267 = vadd.s32 %v1266, %v1257
        %v1268 = vmul.u32 %v1223, %v1214
        %v1269 = vadd.s32 %v1245, %v1264
        %vm1270 = vc.u32 %v1245, %v1264
        %v1271 = vadd.s32 %v1267, 1
        %v1272 = vsel %vm1270, %v1271, %v1267
        %v1273 = vadd.s32 %v1268, %v1272
        %v1274 = vadd.s32 %v1273, 536870912
        %v1275 = vshrl.u32 %v1274, 30
        %v1276 = vshll.u32 %v1275, 30
        %v1277 = vsub.s32 %v1273, %v1276
        %vm1278 = vcmp.lt.s32.totalorder %v1277, 0
        %v1279 = vsub.s32 0, %v1277
        %v1280 = vsel %vm1278, %v1279, %v1277
        %v1281 = vclz %v1280
        %v1282 = vsub.s32 %v1281, 2
        %vm1283 = vcmp.gt.s32.totalorder 0, %v1282
        %v1284 = vsel %vm1283, 0, %v1282
        %v1285 = vsub.s32 32, %v1284
        %v1286 = vshll.u32 %v1277, %v1284
        %v1287 = vshrl.u32 %v1269, %v1285
        %v1288 = vor.u32 %v1286, %v1287
        %v1289 = vsub.s32 4294967266, %v1284
        %v1290 = vadd.s32 %v1289, 127
        %v1291 = vshll.u32 %v1290, 23
        %v1292 = vor.u32 4788187, %v1291
        %v1293 = vand.u32 2147483647, %v1292
        %v1295 = vcvt.s32.f32 %v1288
        %v1296 = vmul.f32 %v1295, %v1293
        %v1297 = vxor.u32 %v1296, 2147483648
        %v1298 = vsel %vm1177, %v1297, %v1296
        %v1299 = vsub.s32 4, %v1275
        %v1300 = vsel %vm1177, %v1299, %v1275
        %v1301 = vsel %vm1176, %v543, %v1298
        %v1302 = vsel %vm1176, 0, %v1300
        %v1303 = vmul.f32 %v1301, %v1301
        %v1304 = vmul.f32 %v1303, -0.001358992
        %v1305 = vadd.f32 %v1304, 0.041655596
        %v1306 = vmul.f32 %v1303, %v1305
        %v1307 = vadd.f32 %v1306, -0.4999988
        %v1308 = vmul.f32 %v1303, %v1307
        %v1309 = vadd.f32 1.0, %v1308
        %v1310 = vmul.f32 %v1301, %v1301
        %v1311 = vmul.f32 %v1310, -0.00019511016
        %v1312 = vadd.f32 %v1311, 0.008332121
        %v1313 = vmul.f32 %v1310, %v1312
        %v1314 = vadd.f32 %v1313, -0.16666654
        %v1315 = vmul.f32 %v1310, %v1314
        %v1316 = vadd.f32 %v1315, 1.0
        %v1317 = vmul.f32 %v1316, %v1301
        %vm1318 = vweird.f32 %v543
        %v1319 = vadd.s32 %v1302, 3
        %v1320 = vand.u32 %v1319, 3
        %vm1321 = vcmp.lt.s32.totalorder %v1320, 2
        %vm1322 = vcmp.eq.s32.totalorder %v1320, 0
        %v1323 = vxor.u32 %v1317, 2147483648
        %v1324 = vsel %vm1322, %v1309, %v1323
        %vm1325 = vcmp.eq.s32.totalorder %v1320, 2
        %v1326 = vxor.u32 %v1309, 2147483648
        %v1327 = vsel %vm1325, %v1326, %v1317
        %v1328 = vsel %vm1321, %v1324, %v1327
        %v1329 = vsel %vm1318, nan, %v1328
        %v1330 = vand.u32 2147483647, %v544
        %vm1331 = vcmp.le.f32.partialorder %v1330, 0.7853982
        %vm1332 = vcmp.lt.s32.totalorder %v544, 0
        %v1333 = vand.u32 %v544, 2139095040
        %v1334 = vshrl.u32 %v1333, 23
        %v1335 = vsub.s32 %v1334, 127
        %v1336 = vand.u32 2147483647, %v544
        %v1337 = vand.u32 %v1336, 8388607
        %v1338 = vor.u32 %v1337, 8388608
        %v1339 = vsub.s32 0, %v1338
        %v1340 = vadd.s32 %v1335, 1
        %vm1341 = vcmp.gt.s32.totalorder %v1340, 0
        %v1342 = vsel %vm1341, %v1340, 0
        %v1343 = vshrl.u32 %v1342, 5
        %v1344 = vand.u32 %v1342, 31
        %v1345 = vsub.s32 32, %v1344
        %v1346 = vshrl.u32 683565275, %v1345
        %v1347 = vshll.u32 683565275, %v1344
        %v1348 = vshrl.u32 2475754826, %v1345
        %v1349 = vor.u32 %v1347, %v1348
        %v1350 = vshll.u32 2475754826, %v1344
        %v1351 = vshrl.u32 2131351028, %v1345
        %v1352 = vor.u32 %v1350, %v1351
        %v1353 = vshll.u32 2131351028, %v1344
        %v1354 = vshrl.u32 2102212464, %v1345
        %v1355 = vor.u32 %v1353, %v1354
        %v1356 = vshll.u32 2102212464, %v1344
        %v1357 = vshrl.u32 920167782, %v1345
        %v1358 = vor.u32 %v1356, %v1357
        %v1359 = vshll.u32 920167782, %v1344
        %v1360 = vshrl.u32 1326507024, %v1345
        %v1361 = vor.u32 %v1359, %v1360
        %vm1362 = vcmp.lt.s32.totalorder %v1343, 1
        %vm1363 = vcmp.lt.s32.totalorder %v1343, 2
        %vm1364 = vcmp.lt.s32.totalorder %v1343, 3
        %vm1365 = vcmp.lt.s32.totalorder %v1343, 4
        %v1366 = vsel %vm1362, %v1346, %v1349
        %v1367 = vsel %vm1365, %v1355, 2102212464
        %v1368 = vsel %vm1364, %v1352, %v1367
        %v1369 = vsel %vm1363, %v1366, %v1368
        %v1370 = vsel %vm1362, %v1349, %v1352
        %v1371 = vsel %vm1365, %v1358, 920167782
        %v1372 = vsel %vm1364, %v1355, %v1371
        %v1373 = vsel %vm1363, %v1370, %v1372
        %v1374 = vsel %vm1362, %v1352, %v1355
        %v1375 = vsel %vm1365, %v1361, 1326507024
        %v1376 = vsel %vm1364, %v1358, %v1375
        %v1377 = vsel %vm1363, %v1374, %v1376
        %v1378 = vshll.u32 %v1338, 8
        %v1379 = vand.u32 %v1378, 65535
        %v1380 = vshrl.u32 %v1378, 16
        %v1381 = vand.u32 %v1377, 65535
        %v1382 = vshrl.u32 %v1377, 16
        %v1383 = vmul.u32 %v1379, %v1381
        %v1384 = vmul.u32 %v1379, %v1382
        %v1385 = vmul.u32 %v1380, %v1381
        %v1386 = vmul.u32 %v1380, %v1382
        %v1387 = vshll.u32 %v1384, 16
        %v1388 = vshrl.u32 %v1384, 16
        %v1389 = vshll.u32 %v1385, 16
        %v1390 = vshrl.u32 %v1385, 16
        %vm1391 = vc.u32 %v1383, %v1387
        %v1392 = vsel %vm1391, 1, 0
        %v1393 = vadd.s32 %v1383, %v1387
        %v1394 = vadd.s32 %v1386, %v1392
        %vm1395 = vc.u32 %v1393, %v1389
        %v1396 = vsel %vm1395, 1, 0
        %v1397 = vadd.s32 %v1393, %v1389
        %v1398 = vadd.s32 %v1394, %v1396
        %v1399 = vadd.s32 %v1398, %v1388
        %v1400 = vadd.s32 %v1399, %v1390
        %v1401 = vand.u32 %v1378, 65535
        %v1402 = vshrl.u32 %v1378, 16
        %v1403 = vand.u32 %v1373, 65535
        %v1404 = vshrl.u32 %v1373, 16
        %v1405 = vmul.u32 %v1401, %v1403
        %v1406 = vmul.u32 %v1401, %v1404
        %v1407 = vmul.u32 %v1402, %v1403
        %v1408 = vmul.u32 %v1402, %v1404
        %v1409 = vshll.u32 %v1406, 16
        %v1410 = vshrl.u32 %v1406, 16
        %v1411 = vshll.u32 %v1407, 16
        %v1412 = vshrl.u32 %v1407, 16
        %vm1413 = vc.u32 %v1405, %v1409
        %v1414 = vsel %vm1413, 1, 0
        %v1415 = vadd.s32 %v1405, %v1409
        %v1416 = vadd.s32 %v1408, %v1414
        %vm1417 = vc.u32 %v1415, %v1411
        %v1418 = vsel %vm1417, 1, 0
        %v1419 = vadd.s32 %v1415, %v1411
        %v1420 = vadd.s32 %v1416, %v1418
        %v1421 = vadd.s32 %v1420, %v1410
        %v1422 = vadd.s32 %v1421, %v1412
        %v1423 = vmul.u32 %v1378, %v1369
        %v1424 = vadd.s32 %v1400, %v1419
        %vm1425 = vc.u32 %v1400, %v1419
        %v1426 = vadd.s32 %v1422, 1
        %v1427 = vsel %vm1425, %v1426, %v1422
        %v1428 = vadd.s32 %v1423, %v1427
        %v1429 = vadd.s32 %v1428, 536870912
        %v1430 = vshrl.u32 %v1429, 30
        %v1431 = vshll.u32 %v1430, 30
        %v1432 = vsub.s32 %v1428, %v1431
        %vm1433 = vcmp.lt.s32.totalorder %v1432, 0
        %v1434 = vsub.s32 0, %v1432
        %v1435 = vsel %vm1433, %v1434, %v1432
        %v1436 = vclz %v1435
        %v1437 = vsub.s32 %v1436, 2
        %vm1438 = vcmp.gt.s32.totalorder 0, %v1437
        %v1439 = vsel %vm1438, 0, %v1437
        %v1440 = vsub.s32 32, %v1439
        %v1441 = vshll.u32 %v1432, %v1439
        %v1442 = vshrl.u32 %v1424, %v1440
        %v1443 = vor.u32 %v1441, %v1442
        %v1444 = vsub.s32 4294967266, %v1439
        %v1445 = vadd.s32 %v1444, 127
        %v1446 = vshll.u32 %v1445, 23
        %v1447 = vor.u32 4788187, %v1446
        %v1448 = vand.u32 2147483647, %v1447
        %v1450 = vcvt.s32.f32 %v1443
        %v1451 = vmul.f32 %v1450, %v1448
        %v1452 = vxor.u32 %v1451, 2147483648
        %v1453 = vsel %vm1332, %v1452, %v1451
        %v1454 = vsub.s32 4, %v1430
        %v1455 = vsel %vm1332, %v1454, %v1430
        %v1456 = vsel %vm1331, %v544, %v1453
        %v1457 = vsel %vm1331, 0, %v1455
        %v1458 = vmul.f32 %v1456, %v1456
        %v1459 = vmul.f32 %v1458, -0.001358992
        %v1460 = vadd.f32 %v1459, 0.041655596
        %v1461 = vmul.f32 %v1458, %v1460
        %v1462 = vadd.f32 %v1461, -0.4999988
        %v1463 = vmul.f32 %v1458, %v1462
        %v1464 = vadd.f32 1.0, %v1463
        %v1465 = vmul.f32 %v1456, %v1456
        %v1466 = vmul.f32 %v1465, -0.00019511016
        %v1467 = vadd.f32 %v1466, 0.008332121
        %v1468 = vmul.f32 %v1465, %v1467
        %v1469 = vadd.f32 %v1468, -0.16666654
        %v1470 = vmul.f32 %v1465, %v1469
        %v1471 = vadd.f32 %v1470, 1.0
        %v1472 = vmul.f32 %v1471, %v1456
        %vm1473 = vweird.f32 %v544
        %v1474 = vadd.s32 %v1457, 3
        %v1475 = vand.u32 %v1474, 3
        %vm1476 = vcmp.lt.s32.totalorder %v1475, 2
        %vm1477 = vcmp.eq.s32.totalorder %v1475, 0
        %v1478 = vxor.u32 %v1472, 2147483648
        %v1479 = vsel %vm1477, %v1464, %v1478
        %vm1480 = vcmp.eq.s32.totalorder %v1475, 2
        %v1481 = vxor.u32 %v1464, 2147483648
        %v1482 = vsel %vm1480, %v1481, %v1472
        %v1483 = vsel %vm1476, %v1479, %v1482
        %v1484 = vsel %vm1473, nan, %v1483
        %v1485 = vand.u32 2147483647, %v545
        %vm1486 = vcmp.le.f32.partialorder %v1485, 0.7853982
        %vm1487 = vcmp.lt.s32.totalorder %v545, 0
        %v1488 = vand.u32 %v545, 2139095040
        %v1489 = vshrl.u32 %v1488, 23
        %v1490 = vsub.s32 %v1489, 127
        %v1491 = vand.u32 2147483647, %v545
        %v1492 = vand.u32 %v1491, 8388607
        %v1493 = vor.u32 %v1492, 8388608
        %v1494 = vsub.s32 0, %v1493
        %v1495 = vadd.s32 %v1490, 1
        %vm1496 = vcmp.gt.s32.totalorder %v1495, 0
        %v1497 = vsel %vm1496, %v1495, 0
        %v1498 = vshrl.u32 %v1497, 5
        %v1499 = vand.u32 %v1497, 31
        %v1500 = vsub.s32 32, %v1499
        %v1501 = vshrl.u32 683565275, %v1500
        %v1502 = vshll.u32 683565275, %v1499
        %v1503 = vshrl.u32 2475754826, %v1500
        %v1504 = vor.u32 %v1502, %v1503
        %v1505 = vshll.u32 2475754826, %v1499
        %v1506 = vshrl.u32 2131351028, %v1500
        %v1507 = vor.u32 %v1505, %v1506
        %v1508 = vshll.u32 2131351028, %v1499
        %v1509 = vshrl.u32 2102212464, %v1500
        %v1510 = vor.u32 %v1508, %v1509
        %v1511 = vshll.u32 2102212464, %v1499
        %v1512 = vshrl.u32 920167782, %v1500
        %v1513 = vor.u32 %v1511, %v1512
        %v1514 = vshll.u32 920167782, %v1499
        %v1515 = vshrl.u32 1326507024, %v1500
        %v1516 = vor.u32 %v1514, %v1515
        %vm1517 = vcmp.lt.s32.totalorder %v1498, 1
        %vm1518 = vcmp.lt.s32.totalorder %v1498, 2
        %vm1519 = vcmp.lt.s32.totalorder %v1498, 3
        %vm1520 = vcmp.lt.s32.totalorder %v1498, 4
        %v1521 = vsel %vm1517, %v1501, %v1504
        %v1522 = vsel %vm1520, %v1510, 2102212464
        %v1523 = vsel %vm1519, %v1507, %v1522
        %v1524 = vsel %vm1518, %v1521, %v1523
        %v1525 = vsel %vm1517, %v1504, %v1507
        %v1526 = vsel %vm1520, %v1513, 920167782
        %v1527 = vsel %vm1519, %v1510, %v1526
        %v1528 = vsel %vm1518, %v1525, %v1527
        %v1529 = vsel %vm1517, %v1507, %v1510
        %v1530 = vsel %vm1520, %v1516, 1326507024
        %v1531 = vsel %vm1519, %v1513, %v1530
        %v1532 = vsel %vm1518, %v1529, %v1531
        %v1533 = vshll.u32 %v1493, 8
        %v1534 = vand.u32 %v1533, 65535
        %v1535 = vshrl.u32 %v1533, 16
        %v1536 = vand.u32 %v1532, 65535
        %v1537 = vshrl.u32 %v1532, 16
        %v1538 = vmul.u32 %v1534, %v1536
        %v1539 = vmul.u32 %v1534, %v1537
        %v1540 = vmul.u32 %v1535, %v1536
        %v1541 = vmul.u32 %v1535, %v1537
        %v1542 = vshll.u32 %v1539, 16
        %v1543 = vshrl.u32 %v1539, 16
        %v1544 = vshll.u32 %v1540, 16
        %v1545 = vshrl.u32 %v1540, 16
        %vm1546 = vc.u32 %v1538, %v1542
        %v1547 = vsel %vm1546, 1, 0
        %v1548 = vadd.s32 %v1538, %v1542
        %v1549 = vadd.s32 %v1541, %v1547
        %vm1550 = vc.u32 %v1548, %v1544
        %v1551 = vsel %vm1550, 1, 0
        %v1552 = vadd.s32 %v1548, %v1544
        %v1553 = vadd.s32 %v1549, %v1551
        %v1554 = vadd.s32 %v1553, %v1543
        %v1555 = vadd.s32 %v1554, %v1545
        %v1556 = vand.u32 %v1533, 65535
        %v1557 = vshrl.u32 %v1533, 16
        %v1558 = vand.u32 %v1528, 65535
        %v1559 = vshrl.u32 %v1528, 16
        %v1560 = vmul.u32 %v1556, %v1558
        %v1561 = vmul.u32 %v1556, %v1559
        %v1562 = vmul.u32 %v1557, %v1558
        %v1563 = vmul.u32 %v1557, %v1559
        %v1564 = vshll.u32 %v1561, 16
        %v1565 = vshrl.u32 %v1561, 16
        %v1566 = vshll.u32 %v1562, 16
        %v1567 = vshrl.u32 %v1562, 16
        %vm1568 = vc.u32 %v1560, %v1564
        %v1569 = vsel %vm1568, 1, 0
        %v1570 = vadd.s32 %v1560, %v1564
        %v1571 = vadd.s32 %v1563, %v1569
        %vm1572 = vc.u32 %v1570, %v1566
        %v1573 = vsel %vm1572, 1, 0
        %v1574 = vadd.s32 %v1570, %v1566
        %v1575 = vadd.s32 %v1571, %v1573
        %v1576 = vadd.s32 %v1575, %v1565
        %v1577 = vadd.s32 %v1576, %v1567
        %v1578 = vmul.u32 %v1533, %v1524
        %v1579 = vadd.s32 %v1555, %v1574
        %vm1580 = vc.u32 %v1555, %v1574
        %v1581 = vadd.s32 %v1577, 1
        %v1582 = vsel %vm1580, %v1581, %v1577
        %v1583 = vadd.s32 %v1578, %v1582
        %v1584 = vadd.s32 %v1583, 536870912
        %v1585 = vshrl.u32 %v1584, 30
        %v1586 = vshll.u32 %v1585, 30
        %v1587 = vsub.s32 %v1583, %v1586
        %vm1588 = vcmp.lt.s32.totalorder %v1587, 0
        %v1589 = vsub.s32 0, %v1587
        %v1590 = vsel %vm1588, %v1589, %v1587
        %v1591 = vclz %v1590
        %v1592 = vsub.s32 %v1591, 2
        %vm1593 = vcmp.gt.s32.totalorder 0, %v1592
        %v1594 = vsel %vm1593, 0, %v1592
        %v1595 = vsub.s32 32, %v1594
        %v1596 = vshll.u32 %v1587, %v1594
        %v1597 = vshrl.u32 %v1579, %v1595
        %v1598 = vor.u32 %v1596, %v1597
        %v1599 = vsub.s32 4294967266, %v1594
        %v1600 = vadd.s32 %v1599, 127
        %v1601 = vshll.u32 %v1600, 23
        %v1602 = vor.u32 4788187, %v1601
        %v1603 = vand.u32 2147483647, %v1602
        %v1605 = vcvt.s32.f32 %v1598
        %v1606 = vmul.f32 %v1605, %v1603
        %v1607 = vxor.u32 %v1606, 2147483648
        %v1608 = vsel %vm1487, %v1607, %v1606
        %v1609 = vsub.s32 4, %v1585
        %v1610 = vsel %vm1487, %v1609, %v1585
        %v1611 = vsel %vm1486, %v545, %v1608
        %v1612 = vsel %vm1486, 0, %v1610
        %v1613 = vmul.f32 %v1611, %v1611
        %v1614 = vmul.f32 %v1613, -0.001358992
        %v1615 = vadd.f32 %v1614, 0.041655596
        %v1616 = vmul.f32 %v1613, %v1615
        %v1617 = vadd.f32 %v1616, -0.4999988
        %v1618 = vmul.f32 %v1613, %v1617
        %v1619 = vadd.f32 1.0, %v1618
        %v1620 = vmul.f32 %v1611, %v1611
        %v1621 = vmul.f32 %v1620, -0.00019511016
        %v1622 = vadd.f32 %v1621, 0.008332121
        %v1623 = vmul.f32 %v1620, %v1622
        %v1624 = vadd.f32 %v1623, -0.16666654
        %v1625 = vmul.f32 %v1620, %v1624
        %v1626 = vadd.f32 %v1625, 1.0
        %v1627 = vmul.f32 %v1626, %v1611
        %vm1628 = vweird.f32 %v545
        %v1629 = vadd.s32 %v1612, 3
        %v1630 = vand.u32 %v1629, 3
        %vm1631 = vcmp.lt.s32.totalorder %v1630, 2
        %vm1632 = vcmp.eq.s32.totalorder %v1630, 0
        %v1633 = vxor.u32 %v1627, 2147483648
        %v1634 = vsel %vm1632, %v1619, %v1633
        %vm1635 = vcmp.eq.s32.totalorder %v1630, 2
        %v1636 = vxor.u32 %v1619, 2147483648
        %v1637 = vsel %vm1635, %v1636, %v1627
        %v1638 = vsel %vm1631, %v1634, %v1637
        %v1639 = vsel %vm1628, nan, %v1638
        %v1640 = vand.u32 2147483647, %v546
        %vm1641 = vcmp.le.f32.partialorder %v1640, 0.7853982
        %vm1642 = vcmp.lt.s32.totalorder %v546, 0
        %v1643 = vand.u32 %v546, 2139095040
        %v1644 = vshrl.u32 %v1643, 23
        %v1645 = vsub.s32 %v1644, 127
        %v1646 = vand.u32 2147483647, %v546
        %v1647 = vand.u32 %v1646, 8388607
        %v1648 = vor.u32 %v1647, 8388608
        %v1649 = vsub.s32 0, %v1648
        %v1650 = vadd.s32 %v1645, 1
        %vm1651 = vcmp.gt.s32.totalorder %v1650, 0
        %v1652 = vsel %vm1651, %v1650, 0
        %v1653 = vshrl.u32 %v1652, 5
        %v1654 = vand.u32 %v1652, 31
        %v1655 = vsub.s32 32, %v1654
        %v1656 = vshrl.u32 683565275, %v1655
        %v1657 = vshll.u32 683565275, %v1654
        %v1658 = vshrl.u32 2475754826, %v1655
        %v1659 = vor.u32 %v1657, %v1658
        %v1660 = vshll.u32 2475754826, %v1654
        %v1661 = vshrl.u32 2131351028, %v1655
        %v1662 = vor.u32 %v1660, %v1661
        %v1663 = vshll.u32 2131351028, %v1654
        %v1664 = vshrl.u32 2102212464, %v1655
        %v1665 = vor.u32 %v1663, %v1664
        %v1666 = vshll.u32 2102212464, %v1654
        %v1667 = vshrl.u32 920167782, %v1655
        %v1668 = vor.u32 %v1666, %v1667
        %v1669 = vshll.u32 920167782, %v1654
        %v1670 = vshrl.u32 1326507024, %v1655
        %v1671 = vor.u32 %v1669, %v1670
        %vm1672 = vcmp.lt.s32.totalorder %v1653, 1
        %vm1673 = vcmp.lt.s32.totalorder %v1653, 2
        %vm1674 = vcmp.lt.s32.totalorder %v1653, 3
        %vm1675 = vcmp.lt.s32.totalorder %v1653, 4
        %v1676 = vsel %vm1672, %v1656, %v1659
        %v1677 = vsel %vm1675, %v1665, 2102212464
        %v1678 = vsel %vm1674, %v1662, %v1677
        %v1679 = vsel %vm1673, %v1676, %v1678
        %v1680 = vsel %vm1672, %v1659, %v1662
        %v1681 = vsel %vm1675, %v1668, 920167782
        %v1682 = vsel %vm1674, %v1665, %v1681
        %v1683 = vsel %vm1673, %v1680, %v1682
        %v1684 = vsel %vm1672, %v1662, %v1665
        %v1685 = vsel %vm1675, %v1671, 1326507024
        %v1686 = vsel %vm1674, %v1668, %v1685
        %v1687 = vsel %vm1673, %v1684, %v1686
        %v1688 = vshll.u32 %v1648, 8
        %v1689 = vand.u32 %v1688, 65535
        %v1690 = vshrl.u32 %v1688, 16
        %v1691 = vand.u32 %v1687, 65535
        %v1692 = vshrl.u32 %v1687, 16
        %v1693 = vmul.u32 %v1689, %v1691
        %v1694 = vmul.u32 %v1689, %v1692
        %v1695 = vmul.u32 %v1690, %v1691
        %v1696 = vmul.u32 %v1690, %v1692
        %v1697 = vshll.u32 %v1694, 16
        %v1698 = vshrl.u32 %v1694, 16
        %v1699 = vshll.u32 %v1695, 16
        %v1700 = vshrl.u32 %v1695, 16
        %vm1701 = vc.u32 %v1693, %v1697
        %v1702 = vsel %vm1701, 1, 0
        %v1703 = vadd.s32 %v1693, %v1697
        %v1704 = vadd.s32 %v1696, %v1702
        %vm1705 = vc.u32 %v1703, %v1699
        %v1706 = vsel %vm1705, 1, 0
        %v1707 = vadd.s32 %v1703, %v1699
        %v1708 = vadd.s32 %v1704, %v1706
        %v1709 = vadd.s32 %v1708, %v1698
        %v1710 = vadd.s32 %v1709, %v1700
        %v1711 = vand.u32 %v1688, 65535
        %v1712 = vshrl.u32 %v1688, 16
        %v1713 = vand.u32 %v1683, 65535
        %v1714 = vshrl.u32 %v1683, 16
        %v1715 = vmul.u32 %v1711, %v1713
        %v1716 = vmul.u32 %v1711, %v1714
        %v1717 = vmul.u32 %v1712, %v1713
        %v1718 = vmul.u32 %v1712, %v1714
        %v1719 = vshll.u32 %v1716, 16
        %v1720 = vshrl.u32 %v1716, 16
        %v1721 = vshll.u32 %v1717, 16
        %v1722 = vshrl.u32 %v1717, 16
        %vm1723 = vc.u32 %v1715, %v1719
        %v1724 = vsel %vm1723, 1, 0
        %v1725 = vadd.s32 %v1715, %v1719
        %v1726 = vadd.s32 %v1718, %v1724
        %vm1727 = vc.u32 %v1725, %v1721
        %v1728 = vsel %vm1727, 1, 0
        %v1729 = vadd.s32 %v1725, %v1721
        %v1730 = vadd.s32 %v1726, %v1728
        %v1731 = vadd.s32 %v1730, %v1720
        %v1732 = vadd.s32 %v1731, %v1722
        %v1733 = vmul.u32 %v1688, %v1679
        %v1734 = vadd.s32 %v1710, %v1729
        %vm1735 = vc.u32 %v1710, %v1729
        %v1736 = vadd.s32 %v1732, 1
        %v1737 = vsel %vm1735, %v1736, %v1732
        %v1738 = vadd.s32 %v1733, %v1737
        %v1739 = vadd.s32 %v1738, 536870912
        %v1740 = vshrl.u32 %v1739, 30
        %v1741 = vshll.u32 %v1740, 30
        %v1742 = vsub.s32 %v1738, %v1741
        %vm1743 = vcmp.lt.s32.totalorder %v1742, 0
        %v1744 = vsub.s32 0, %v1742
        %v1745 = vsel %vm1743, %v1744, %v1742
        %v1746 = vclz %v1745
        %v1747 = vsub.s32 %v1746, 2
        %vm1748 = vcmp.gt.s32.totalorder 0, %v1747
        %v1749 = vsel %vm1748, 0, %v1747
        %v1750 = vsub.s32 32, %v1749
        %v1751 = vshll.u32 %v1742, %v1749
        %v1752 = vshrl.u32 %v1734, %v1750
        %v1753 = vor.u32 %v1751, %v1752
        %v1754 = vsub.s32 4294967266, %v1749
        %v1755 = vadd.s32 %v1754, 127
        %v1756 = vshll.u32 %v1755, 23
        %v1757 = vor.u32 4788187, %v1756
        %v1758 = vand.u32 2147483647, %v1757
        %v1760 = vcvt.s32.f32 %v1753
        %v1761 = vmul.f32 %v1760, %v1758
        %v1762 = vxor.u32 %v1761, 2147483648
        %v1763 = vsel %vm1642, %v1762, %v1761
        %v1764 = vsub.s32 4, %v1740
        %v1765 = vsel %vm1642, %v1764, %v1740
        %v1766 = vsel %vm1641, %v546, %v1763
        %v1767 = vsel %vm1641, 0, %v1765
        %v1768 = vmul.f32 %v1766, %v1766
        %v1769 = vmul.f32 %v1768, -0.001358992
        %v1770 = vadd.f32 %v1769, 0.041655596
        %v1771 = vmul.f32 %v1768, %v1770
        %v1772 = vadd.f32 %v1771, -0.4999988
        %v1773 = vmul.f32 %v1768, %v1772
        %v1774 = vadd.f32 1.0, %v1773
        %v1775 = vmul.f32 %v1766, %v1766
        %v1776 = vmul.f32 %v1775, -0.00019511016
        %v1777 = vadd.f32 %v1776, 0.008332121
        %v1778 = vmul.f32 %v1775, %v1777
        %v1779 = vadd.f32 %v1778, -0.16666654
        %v1780 = vmul.f32 %v1775, %v1779
        %v1781 = vadd.f32 %v1780, 1.0
        %v1782 = vmul.f32 %v1781, %v1766
        %vm1783 = vweird.f32 %v546
        %v1784 = vadd.s32 %v1767, 3
        %v1785 = vand.u32 %v1784, 3
        %vm1786 = vcmp.lt.s32.totalorder %v1785, 2
        %vm1787 = vcmp.eq.s32.totalorder %v1785, 0
        %v1788 = vxor.u32 %v1782, 2147483648
        %v1789 = vsel %vm1787, %v1774, %v1788
        %vm1790 = vcmp.eq.s32.totalorder %v1785, 2
        %v1791 = vxor.u32 %v1774, 2147483648
        %v1792 = vsel %vm1790, %v1791, %v1782
        %v1793 = vsel %vm1786, %v1789, %v1792
        %v1794 = vsel %vm1783, nan, %v1793
        %v1795 = vand.u32 2147483647, %v547
        %vm1796 = vcmp.le.f32.partialorder %v1795, 0.7853982
        %vm1797 = vcmp.lt.s32.totalorder %v547, 0
        %v1798 = vand.u32 %v547, 2139095040
        %v1799 = vshrl.u32 %v1798, 23
        %v1800 = vsub.s32 %v1799, 127
        %v1801 = vand.u32 2147483647, %v547
        %v1802 = vand.u32 %v1801, 8388607
        %v1803 = vor.u32 %v1802, 8388608
        %v1804 = vsub.s32 0, %v1803
        %v1805 = vadd.s32 %v1800, 1
        %vm1806 = vcmp.gt.s32.totalorder %v1805, 0
        %v1807 = vsel %vm1806, %v1805, 0
        %v1808 = vshrl.u32 %v1807, 5
        %v1809 = vand.u32 %v1807, 31
        %v1810 = vsub.s32 32, %v1809
        %v1811 = vshrl.u32 683565275, %v1810
        %v1812 = vshll.u32 683565275, %v1809
        %v1813 = vshrl.u32 2475754826, %v1810
        %v1814 = vor.u32 %v1812, %v1813
        %v1815 = vshll.u32 2475754826, %v1809
        %v1816 = vshrl.u32 2131351028, %v1810
        %v1817 = vor.u32 %v1815, %v1816
        %v1818 = vshll.u32 2131351028, %v1809
        %v1819 = vshrl.u32 2102212464, %v1810
        %v1820 = vor.u32 %v1818, %v1819
        %v1821 = vshll.u32 2102212464, %v1809
        %v1822 = vshrl.u32 920167782, %v1810
        %v1823 = vor.u32 %v1821, %v1822
        %v1824 = vshll.u32 920167782, %v1809
        %v1825 = vshrl.u32 1326507024, %v1810
        %v1826 = vor.u32 %v1824, %v1825
        %vm1827 = vcmp.lt.s32.totalorder %v1808, 1
        %vm1828 = vcmp.lt.s32.totalorder %v1808, 2
        %vm1829 = vcmp.lt.s32.totalorder %v1808, 3
        %vm1830 = vcmp.lt.s32.totalorder %v1808, 4
        %v1831 = vsel %vm1827, %v1811, %v1814
        %v1832 = vsel %vm1830, %v1820, 2102212464
        %v1833 = vsel %vm1829, %v1817, %v1832
        %v1834 = vsel %vm1828, %v1831, %v1833
        %v1835 = vsel %vm1827, %v1814, %v1817
        %v1836 = vsel %vm1830, %v1823, 920167782
        %v1837 = vsel %vm1829, %v1820, %v1836
        %v1838 = vsel %vm1828, %v1835, %v1837
        %v1839 = vsel %vm1827, %v1817, %v1820
        %v1840 = vsel %vm1830, %v1826, 1326507024
        %v1841 = vsel %vm1829, %v1823, %v1840
        %v1842 = vsel %vm1828, %v1839, %v1841
        %v1843 = vshll.u32 %v1803, 8
        %v1844 = vand.u32 %v1843, 65535
        %v1845 = vshrl.u32 %v1843, 16
        %v1846 = vand.u32 %v1842, 65535
        %v1847 = vshrl.u32 %v1842, 16
        %v1848 = vmul.u32 %v1844, %v1846
        %v1849 = vmul.u32 %v1844, %v1847
        %v1850 = vmul.u32 %v1845, %v1846
        %v1851 = vmul.u32 %v1845, %v1847
        %v1852 = vshll.u32 %v1849, 16
        %v1853 = vshrl.u32 %v1849, 16
        %v1854 = vshll.u32 %v1850, 16
        %v1855 = vshrl.u32 %v1850, 16
        %vm1856 = vc.u32 %v1848, %v1852
        %v1857 = vsel %vm1856, 1, 0
        %v1858 = vadd.s32 %v1848, %v1852
        %v1859 = vadd.s32 %v1851, %v1857
        %vm1860 = vc.u32 %v1858, %v1854
        %v1861 = vsel %vm1860, 1, 0
        %v1862 = vadd.s32 %v1858, %v1854
        %v1863 = vadd.s32 %v1859, %v1861
        %v1864 = vadd.s32 %v1863, %v1853
        %v1865 = vadd.s32 %v1864, %v1855
        %v1866 = vand.u32 %v1843, 65535
        %v1867 = vshrl.u32 %v1843, 16
        %v1868 = vand.u32 %v1838, 65535
        %v1869 = vshrl.u32 %v1838, 16
        %v1870 = vmul.u32 %v1866, %v1868
        %v1871 = vmul.u32 %v1866, %v1869
        %v1872 = vmul.u32 %v1867, %v1868
        %v1873 = vmul.u32 %v1867, %v1869
        %v1874 = vshll.u32 %v1871, 16
        %v1875 = vshrl.u32 %v1871, 16
        %v1876 = vshll.u32 %v1872, 16
        %v1877 = vshrl.u32 %v1872, 16
        %vm1878 = vc.u32 %v1870, %v1874
        %v1879 = vsel %vm1878, 1, 0
        %v1880 = vadd.s32 %v1870, %v1874
        %v1881 = vadd.s32 %v1873, %v1879
        %vm1882 = vc.u32 %v1880, %v1876
        %v1883 = vsel %vm1882, 1, 0
        %v1884 = vadd.s32 %v1880, %v1876
        %v1885 = vadd.s32 %v1881, %v1883
        %v1886 = vadd.s32 %v1885, %v1875
        %v1887 = vadd.s32 %v1886, %v1877
        %v1888 = vmul.u32 %v1843, %v1834
        %v1889 = vadd.s32 %v1865, %v1884
        %vm1890 = vc.u32 %v1865, %v1884
        %v1891 = vadd.s32 %v1887, 1
        %v1892 = vsel %vm1890, %v1891, %v1887
        %v1893 = vadd.s32 %v1888, %v1892
        %v1894 = vadd.s32 %v1893, 536870912
        %v1895 = vshrl.u32 %v1894, 30
        %v1896 = vshll.u32 %v1895, 30
        %v1897 = vsub.s32 %v1893, %v1896
        %vm1898 = vcmp.lt.s32.totalorder %v1897, 0
        %v1899 = vsub.s32 0, %v1897
        %v1900 = vsel %vm1898, %v1899, %v1897
        %v1901 = vclz %v1900
        %v1902 = vsub.s32 %v1901, 2
        %vm1903 = vcmp.gt.s32.totalorder 0, %v1902
        %v1904 = vsel %vm1903, 0, %v1902
        %v1905 = vsub.s32 32, %v1904
        %v1906 = vshll.u32 %v1897, %v1904
        %v1907 = vshrl.u32 %v1889, %v1905
        %v1908 = vor.u32 %v1906, %v1907
        %v1909 = vsub.s32 4294967266, %v1904
        %v1910 = vadd.s32 %v1909, 127
        %v1911 = vshll.u32 %v1910, 23
        %v1912 = vor.u32 4788187, %v1911
        %v1913 = vand.u32 2147483647, %v1912
        %v1915 = vcvt.s32.f32 %v1908
        %v1916 = vmul.f32 %v1915, %v1913
        %v1917 = vxor.u32 %v1916, 2147483648
        %v1918 = vsel %vm1797, %v1917, %v1916
        %v1919 = vsub.s32 4, %v1895
        %v1920 = vsel %vm1797, %v1919, %v1895
        %v1921 = vsel %vm1796, %v547, %v1918
        %v1922 = vsel %vm1796, 0, %v1920
        %v1923 = vmul.f32 %v1921, %v1921
        %v1924 = vmul.f32 %v1923, -0.001358992
        %v1925 = vadd.f32 %v1924, 0.041655596
        %v1926 = vmul.f32 %v1923, %v1925
        %v1927 = vadd.f32 %v1926, -0.4999988
        %v1928 = vmul.f32 %v1923, %v1927
        %v1929 = vadd.f32 1.0, %v1928
        %v1930 = vmul.f32 %v1921, %v1921
        %v1931 = vmul.f32 %v1930, -0.00019511016
        %v1932 = vadd.f32 %v1931, 0.008332121
        %v1933 = vmul.f32 %v1930, %v1932
        %v1934 = vadd.f32 %v1933, -0.16666654
        %v1935 = vmul.f32 %v1930, %v1934
        %v1936 = vadd.f32 %v1935, 1.0
        %v1937 = vmul.f32 %v1936, %v1921
        %vm1938 = vweird.f32 %v547
        %v1939 = vadd.s32 %v1922, 3
        %v1940 = vand.u32 %v1939, 3
        %vm1941 = vcmp.lt.s32.totalorder %v1940, 2
        %vm1942 = vcmp.eq.s32.totalorder %v1940, 0
        %v1943 = vxor.u32 %v1937, 2147483648
        %v1944 = vsel %vm1942, %v1929, %v1943
        %vm1945 = vcmp.eq.s32.totalorder %v1940, 2
        %v1946 = vxor.u32 %v1929, 2147483648
        %v1947 = vsel %vm1945, %v1946, %v1937
        %v1948 = vsel %vm1941, %v1944, %v1947
        %v1949 = vsel %vm1938, nan, %v1948
        %v1950 = vand.u32 2147483647, %v548
        %vm1951 = vcmp.le.f32.partialorder %v1950, 0.7853982
        %vm1952 = vcmp.lt.s32.totalorder %v548, 0
        %v1953 = vand.u32 %v548, 2139095040
        %v1954 = vshrl.u32 %v1953, 23
        %v1955 = vsub.s32 %v1954, 127
        %v1956 = vand.u32 2147483647, %v548
        %v1957 = vand.u32 %v1956, 8388607
        %v1958 = vor.u32 %v1957, 8388608
        %v1959 = vsub.s32 0, %v1958
        %v1960 = vadd.s32 %v1955, 1
        %vm1961 = vcmp.gt.s32.totalorder %v1960, 0
        %v1962 = vsel %vm1961, %v1960, 0
        %v1963 = vshrl.u32 %v1962, 5
        %v1964 = vand.u32 %v1962, 31
        %v1965 = vsub.s32 32, %v1964
        %v1966 = vshrl.u32 683565275, %v1965
        %v1967 = vshll.u32 683565275, %v1964
        %v1968 = vshrl.u32 2475754826, %v1965
        %v1969 = vor.u32 %v1967, %v1968
        %v1970 = vshll.u32 2475754826, %v1964
        %v1971 = vshrl.u32 2131351028, %v1965
        %v1972 = vor.u32 %v1970, %v1971
        %v1973 = vshll.u32 2131351028, %v1964
        %v1974 = vshrl.u32 2102212464, %v1965
        %v1975 = vor.u32 %v1973, %v1974
        %v1976 = vshll.u32 2102212464, %v1964
        %v1977 = vshrl.u32 920167782, %v1965
        %v1978 = vor.u32 %v1976, %v1977
        %v1979 = vshll.u32 920167782, %v1964
        %v1980 = vshrl.u32 1326507024, %v1965
        %v1981 = vor.u32 %v1979, %v1980
        %vm1982 = vcmp.lt.s32.totalorder %v1963, 1
        %vm1983 = vcmp.lt.s32.totalorder %v1963, 2
        %vm1984 = vcmp.lt.s32.totalorder %v1963, 3
        %vm1985 = vcmp.lt.s32.totalorder %v1963, 4
        %v1986 = vsel %vm1982, %v1966, %v1969
        %v1987 = vsel %vm1985, %v1975, 2102212464
        %v1988 = vsel %vm1984, %v1972, %v1987
        %v1989 = vsel %vm1983, %v1986, %v1988
        %v1990 = vsel %vm1982, %v1969, %v1972
        %v1991 = vsel %vm1985, %v1978, 920167782
        %v1992 = vsel %vm1984, %v1975, %v1991
        %v1993 = vsel %vm1983, %v1990, %v1992
        %v1994 = vsel %vm1982, %v1972, %v1975
        %v1995 = vsel %vm1985, %v1981, 1326507024
        %v1996 = vsel %vm1984, %v1978, %v1995
        %v1997 = vsel %vm1983, %v1994, %v1996
        %v1998 = vshll.u32 %v1958, 8
        %v1999 = vand.u32 %v1998, 65535
        %v2000 = vshrl.u32 %v1998, 16
        %v2001 = vand.u32 %v1997, 65535
        %v2002 = vshrl.u32 %v1997, 16
        %v2003 = vmul.u32 %v1999, %v2001
        %v2004 = vmul.u32 %v1999, %v2002
        %v2005 = vmul.u32 %v2000, %v2001
        %v2006 = vmul.u32 %v2000, %v2002
        %v2007 = vshll.u32 %v2004, 16
        %v2008 = vshrl.u32 %v2004, 16
        %v2009 = vshll.u32 %v2005, 16
        %v2010 = vshrl.u32 %v2005, 16
        %vm2011 = vc.u32 %v2003, %v2007
        %v2012 = vsel %vm2011, 1, 0
        %v2013 = vadd.s32 %v2003, %v2007
        %v2014 = vadd.s32 %v2006, %v2012
        %vm2015 = vc.u32 %v2013, %v2009
        %v2016 = vsel %vm2015, 1, 0
        %v2017 = vadd.s32 %v2013, %v2009
        %v2018 = vadd.s32 %v2014, %v2016
        %v2019 = vadd.s32 %v2018, %v2008
        %v2020 = vadd.s32 %v2019, %v2010
        %v2021 = vand.u32 %v1998, 65535
        %v2022 = vshrl.u32 %v1998, 16
        %v2023 = vand.u32 %v1993, 65535
        %v2024 = vshrl.u32 %v1993, 16
        %v2025 = vmul.u32 %v2021, %v2023
        %v2026 = vmul.u32 %v2021, %v2024
        %v2027 = vmul.u32 %v2022, %v2023
        %v2028 = vmul.u32 %v2022, %v2024
        %v2029 = vshll.u32 %v2026, 16
        %v2030 = vshrl.u32 %v2026, 16
        %v2031 = vshll.u32 %v2027, 16
        %v2032 = vshrl.u32 %v2027, 16
        %vm2033 = vc.u32 %v2025, %v2029
        %v2034 = vsel %vm2033, 1, 0
        %v2035 = vadd.s32 %v2025, %v2029
        %v2036 = vadd.s32 %v2028, %v2034
        %vm2037 = vc.u32 %v2035, %v2031
        %v2038 = vsel %vm2037, 1, 0
        %v2039 = vadd.s32 %v2035, %v2031
        %v2040 = vadd.s32 %v2036, %v2038
        %v2041 = vadd.s32 %v2040, %v2030
        %v2042 = vadd.s32 %v2041, %v2032
        %v2043 = vmul.u32 %v1998, %v1989
        %v2044 = vadd.s32 %v2020, %v2039
        %vm2045 = vc.u32 %v2020, %v2039
        %v2046 = vadd.s32 %v2042, 1
        %v2047 = vsel %vm2045, %v2046, %v2042
        %v2048 = vadd.s32 %v2043, %v2047
        %v2049 = vadd.s32 %v2048, 536870912
        %v2050 = vshrl.u32 %v2049, 30
        %v2051 = vshll.u32 %v2050, 30
        %v2052 = vsub.s32 %v2048, %v2051
        %vm2053 = vcmp.lt.s32.totalorder %v2052, 0
        %v2054 = vsub.s32 0, %v2052
        %v2055 = vsel %vm2053, %v2054, %v2052
        %v2056 = vclz %v2055
        %v2057 = vsub.s32 %v2056, 2
        %vm2058 = vcmp.gt.s32.totalorder 0, %v2057
        %v2059 = vsel %vm2058, 0, %v2057
        %v2060 = vsub.s32 32, %v2059
        %v2061 = vshll.u32 %v2052, %v2059
        %v2062 = vshrl.u32 %v2044, %v2060
        %v2063 = vor.u32 %v2061, %v2062
        %v2064 = vsub.s32 4294967266, %v2059
        %v2065 = vadd.s32 %v2064, 127
        %v2066 = vshll.u32 %v2065, 23
        %v2067 = vor.u32 4788187, %v2066
        %v2068 = vand.u32 2147483647, %v2067
        %v2070 = vcvt.s32.f32 %v2063
        %v2071 = vmul.f32 %v2070, %v2068
        %v2072 = vxor.u32 %v2071, 2147483648
        %v2073 = vsel %vm1952, %v2072, %v2071
        %v2074 = vsub.s32 4, %v2050
        %v2075 = vsel %vm1952, %v2074, %v2050
        %v2076 = vsel %vm1951, %v548, %v2073
        %v2077 = vsel %vm1951, 0, %v2075
        %v2078 = vmul.f32 %v2076, %v2076
        %v2079 = vmul.f32 %v2078, -0.001358992
        %v2080 = vadd.f32 %v2079, 0.041655596
        %v2081 = vmul.f32 %v2078, %v2080
        %v2082 = vadd.f32 %v2081, -0.4999988
        %v2083 = vmul.f32 %v2078, %v2082
        %v2084 = vadd.f32 1.0, %v2083
        %v2085 = vmul.f32 %v2076, %v2076
        %v2086 = vmul.f32 %v2085, -0.00019511016
        %v2087 = vadd.f32 %v2086, 0.008332121
        %v2088 = vmul.f32 %v2085, %v2087
        %v2089 = vadd.f32 %v2088, -0.16666654
        %v2090 = vmul.f32 %v2085, %v2089
        %v2091 = vadd.f32 %v2090, 1.0
        %v2092 = vmul.f32 %v2091, %v2076
        %vm2093 = vweird.f32 %v548
        %v2094 = vadd.s32 %v2077, 3
        %v2095 = vand.u32 %v2094, 3
        %vm2096 = vcmp.lt.s32.totalorder %v2095, 2
        %vm2097 = vcmp.eq.s32.totalorder %v2095, 0
        %v2098 = vxor.u32 %v2092, 2147483648
        %v2099 = vsel %vm2097, %v2084, %v2098
        %vm2100 = vcmp.eq.s32.totalorder %v2095, 2
        %v2101 = vxor.u32 %v2084, 2147483648
        %v2102 = vsel %vm2100, %v2101, %v2092
        %v2103 = vsel %vm2096, %v2099, %v2102
        %v2104 = vsel %vm2093, nan, %v2103
        %v2105 = vand.u32 2147483647, %v549
        %vm2106 = vcmp.le.f32.partialorder %v2105, 0.7853982
        %vm2107 = vcmp.lt.s32.totalorder %v549, 0
        %v2108 = vand.u32 %v549, 2139095040
        %v2109 = vshrl.u32 %v2108, 23
        %v2110 = vsub.s32 %v2109, 127
        %v2111 = vand.u32 2147483647, %v549
        %v2112 = vand.u32 %v2111, 8388607
        %v2113 = vor.u32 %v2112, 8388608
        %v2114 = vsub.s32 0, %v2113
        %v2115 = vadd.s32 %v2110, 1
        %vm2116 = vcmp.gt.s32.totalorder %v2115, 0
        %v2117 = vsel %vm2116, %v2115, 0
        %v2118 = vshrl.u32 %v2117, 5
        %v2119 = vand.u32 %v2117, 31
        %v2120 = vsub.s32 32, %v2119
        %v2121 = vshrl.u32 683565275, %v2120
        %v2122 = vshll.u32 683565275, %v2119
        %v2123 = vshrl.u32 2475754826, %v2120
        %v2124 = vor.u32 %v2122, %v2123
        %v2125 = vshll.u32 2475754826, %v2119
        %v2126 = vshrl.u32 2131351028, %v2120
        %v2127 = vor.u32 %v2125, %v2126
        %v2128 = vshll.u32 2131351028, %v2119
        %v2129 = vshrl.u32 2102212464, %v2120
        %v2130 = vor.u32 %v2128, %v2129
        %v2131 = vshll.u32 2102212464, %v2119
        %v2132 = vshrl.u32 920167782, %v2120
        %v2133 = vor.u32 %v2131, %v2132
        %v2134 = vshll.u32 920167782, %v2119
        %v2135 = vshrl.u32 1326507024, %v2120
        %v2136 = vor.u32 %v2134, %v2135
        %vm2137 = vcmp.lt.s32.totalorder %v2118, 1
        %vm2138 = vcmp.lt.s32.totalorder %v2118, 2
        %vm2139 = vcmp.lt.s32.totalorder %v2118, 3
        %vm2140 = vcmp.lt.s32.totalorder %v2118, 4
        %v2141 = vsel %vm2137, %v2121, %v2124
        %v2142 = vsel %vm2140, %v2130, 2102212464
        %v2143 = vsel %vm2139, %v2127, %v2142
        %v2144 = vsel %vm2138, %v2141, %v2143
        %v2145 = vsel %vm2137, %v2124, %v2127
        %v2146 = vsel %vm2140, %v2133, 920167782
        %v2147 = vsel %vm2139, %v2130, %v2146
        %v2148 = vsel %vm2138, %v2145, %v2147
        %v2149 = vsel %vm2137, %v2127, %v2130
        %v2150 = vsel %vm2140, %v2136, 1326507024
        %v2151 = vsel %vm2139, %v2133, %v2150
        %v2152 = vsel %vm2138, %v2149, %v2151
        %v2153 = vshll.u32 %v2113, 8
        %v2154 = vand.u32 %v2153, 65535
        %v2155 = vshrl.u32 %v2153, 16
        %v2156 = vand.u32 %v2152, 65535
        %v2157 = vshrl.u32 %v2152, 16
        %v2158 = vmul.u32 %v2154, %v2156
        %v2159 = vmul.u32 %v2154, %v2157
        %v2160 = vmul.u32 %v2155, %v2156
        %v2161 = vmul.u32 %v2155, %v2157
        %v2162 = vshll.u32 %v2159, 16
        %v2163 = vshrl.u32 %v2159, 16
        %v2164 = vshll.u32 %v2160, 16
        %v2165 = vshrl.u32 %v2160, 16
        %vm2166 = vc.u32 %v2158, %v2162
        %v2167 = vsel %vm2166, 1, 0
        %v2168 = vadd.s32 %v2158, %v2162
        %v2169 = vadd.s32 %v2161, %v2167
        %vm2170 = vc.u32 %v2168, %v2164
        %v2171 = vsel %vm2170, 1, 0
        %v2172 = vadd.s32 %v2168, %v2164
        %v2173 = vadd.s32 %v2169, %v2171
        %v2174 = vadd.s32 %v2173, %v2163
        %v2175 = vadd.s32 %v2174, %v2165
        %v2176 = vand.u32 %v2153, 65535
        %v2177 = vshrl.u32 %v2153, 16
        %v2178 = vand.u32 %v2148, 65535
        %v2179 = vshrl.u32 %v2148, 16
        %v2180 = vmul.u32 %v2176, %v2178
        %v2181 = vmul.u32 %v2176, %v2179
        %v2182 = vmul.u32 %v2177, %v2178
        %v2183 = vmul.u32 %v2177, %v2179
        %v2184 = vshll.u32 %v2181, 16
        %v2185 = vshrl.u32 %v2181, 16
        %v2186 = vshll.u32 %v2182, 16
        %v2187 = vshrl.u32 %v2182, 16
        %vm2188 = vc.u32 %v2180, %v2184
        %v2189 = vsel %vm2188, 1, 0
        %v2190 = vadd.s32 %v2180, %v2184
        %v2191 = vadd.s32 %v2183, %v2189
        %vm2192 = vc.u32 %v2190, %v2186
        %v2193 = vsel %vm2192, 1, 0
        %v2194 = vadd.s32 %v2190, %v2186
        %v2195 = vadd.s32 %v2191, %v2193
        %v2196 = vadd.s32 %v2195, %v2185
        %v2197 = vadd.s32 %v2196, %v2187
        %v2198 = vmul.u32 %v2153, %v2144
        %v2199 = vadd.s32 %v2175, %v2194
        %vm2200 = vc.u32 %v2175, %v2194
        %v2201 = vadd.s32 %v2197, 1
        %v2202 = vsel %vm2200, %v2201, %v2197
        %v2203 = vadd.s32 %v2198, %v2202
        %v2204 = vadd.s32 %v2203, 536870912
        %v2205 = vshrl.u32 %v2204, 30
        %v2206 = vshll.u32 %v2205, 30
        %v2207 = vsub.s32 %v2203, %v2206
        %vm2208 = vcmp.lt.s32.totalorder %v2207, 0
        %v2209 = vsub.s32 0, %v2207
        %v2210 = vsel %vm2208, %v2209, %v2207
        %v2211 = vclz %v2210
        %v2212 = vsub.s32 %v2211, 2
        %vm2213 = vcmp.gt.s32.totalorder 0, %v2212
        %v2214 = vsel %vm2213, 0, %v2212
        %v2215 = vsub.s32 32, %v2214
        %v2216 = vshll.u32 %v2207, %v2214
        %v2217 = vshrl.u32 %v2199, %v2215
        %v2218 = vor.u32 %v2216, %v2217
        %v2219 = vsub.s32 4294967266, %v2214
        %v2220 = vadd.s32 %v2219, 127
        %v2221 = vshll.u32 %v2220, 23
        %v2222 = vor.u32 4788187, %v2221
        %v2223 = vand.u32 2147483647, %v2222
        %v2225 = vcvt.s32.f32 %v2218
        %v2226 = vmul.f32 %v2225, %v2223
        %v2227 = vxor.u32 %v2226, 2147483648
        %v2228 = vsel %vm2107, %v2227, %v2226
        %v2229 = vsub.s32 4, %v2205
        %v2230 = vsel %vm2107, %v2229, %v2205
        %v2231 = vsel %vm2106, %v549, %v2228
        %v2232 = vsel %vm2106, 0, %v2230
        %v2233 = vmul.f32 %v2231, %v2231
        %v2234 = vmul.f32 %v2233, -0.001358992
        %v2235 = vadd.f32 %v2234, 0.041655596
        %v2236 = vmul.f32 %v2233, %v2235
        %v2237 = vadd.f32 %v2236, -0.4999988
        %v2238 = vmul.f32 %v2233, %v2237
        %v2239 = vadd.f32 1.0, %v2238
        %v2240 = vmul.f32 %v2231, %v2231
        %v2241 = vmul.f32 %v2240, -0.00019511016
        %v2242 = vadd.f32 %v2241, 0.008332121
        %v2243 = vmul.f32 %v2240, %v2242
        %v2244 = vadd.f32 %v2243, -0.16666654
        %v2245 = vmul.f32 %v2240, %v2244
        %v2246 = vadd.f32 %v2245, 1.0
        %v2247 = vmul.f32 %v2246, %v2231
        %vm2248 = vweird.f32 %v549
        %v2249 = vadd.s32 %v2232, 3
        %v2250 = vand.u32 %v2249, 3
        %vm2251 = vcmp.lt.s32.totalorder %v2250, 2
        %vm2252 = vcmp.eq.s32.totalorder %v2250, 0
        %v2253 = vxor.u32 %v2247, 2147483648
        %v2254 = vsel %vm2252, %v2239, %v2253
        %vm2255 = vcmp.eq.s32.totalorder %v2250, 2
        %v2256 = vxor.u32 %v2239, 2147483648
        %v2257 = vsel %vm2255, %v2256, %v2247
        %v2258 = vsel %vm2251, %v2254, %v2257
        %v2259 = vsel %vm2248, nan, %v2258
        %v2260 = vand.u32 2147483647, %v550
        %vm2261 = vcmp.le.f32.partialorder %v2260, 0.7853982
        %vm2262 = vcmp.lt.s32.totalorder %v550, 0
        %v2263 = vand.u32 %v550, 2139095040
        %v2264 = vshrl.u32 %v2263, 23
        %v2265 = vsub.s32 %v2264, 127
        %v2266 = vand.u32 2147483647, %v550
        %v2267 = vand.u32 %v2266, 8388607
        %v2268 = vor.u32 %v2267, 8388608
        %v2269 = vsub.s32 0, %v2268
        %v2270 = vadd.s32 %v2265, 1
        %vm2271 = vcmp.gt.s32.totalorder %v2270, 0
        %v2272 = vsel %vm2271, %v2270, 0
        %v2273 = vshrl.u32 %v2272, 5
        %v2274 = vand.u32 %v2272, 31
        %v2275 = vsub.s32 32, %v2274
        %v2276 = vshrl.u32 683565275, %v2275
        %v2277 = vshll.u32 683565275, %v2274
        %v2278 = vshrl.u32 2475754826, %v2275
        %v2279 = vor.u32 %v2277, %v2278
        %v2280 = vshll.u32 2475754826, %v2274
        %v2281 = vshrl.u32 2131351028, %v2275
        %v2282 = vor.u32 %v2280, %v2281
        %v2283 = vshll.u32 2131351028, %v2274
        %v2284 = vshrl.u32 2102212464, %v2275
        %v2285 = vor.u32 %v2283, %v2284
        %v2286 = vshll.u32 2102212464, %v2274
        %v2287 = vshrl.u32 920167782, %v2275
        %v2288 = vor.u32 %v2286, %v2287
        %v2289 = vshll.u32 920167782, %v2274
        %v2290 = vshrl.u32 1326507024, %v2275
        %v2291 = vor.u32 %v2289, %v2290
        %vm2292 = vcmp.lt.s32.totalorder %v2273, 1
        %vm2293 = vcmp.lt.s32.totalorder %v2273, 2
        %vm2294 = vcmp.lt.s32.totalorder %v2273, 3
        %vm2295 = vcmp.lt.s32.totalorder %v2273, 4
        %v2296 = vsel %vm2292, %v2276, %v2279
        %v2297 = vsel %vm2295, %v2285, 2102212464
        %v2298 = vsel %vm2294, %v2282, %v2297
        %v2299 = vsel %vm2293, %v2296, %v2298
        %v2300 = vsel %vm2292, %v2279, %v2282
        %v2301 = vsel %vm2295, %v2288, 920167782
        %v2302 = vsel %vm2294, %v2285, %v2301
        %v2303 = vsel %vm2293, %v2300, %v2302
        %v2304 = vsel %vm2292, %v2282, %v2285
        %v2305 = vsel %vm2295, %v2291, 1326507024
        %v2306 = vsel %vm2294, %v2288, %v2305
        %v2307 = vsel %vm2293, %v2304, %v2306
        %v2308 = vshll.u32 %v2268, 8
        %v2309 = vand.u32 %v2308, 65535
        %v2310 = vshrl.u32 %v2308, 16
        %v2311 = vand.u32 %v2307, 65535
        %v2312 = vshrl.u32 %v2307, 16
        %v2313 = vmul.u32 %v2309, %v2311
        %v2314 = vmul.u32 %v2309, %v2312
        %v2315 = vmul.u32 %v2310, %v2311
        %v2316 = vmul.u32 %v2310, %v2312
        %v2317 = vshll.u32 %v2314, 16
        %v2318 = vshrl.u32 %v2314, 16
        %v2319 = vshll.u32 %v2315, 16
        %v2320 = vshrl.u32 %v2315, 16
        %vm2321 = vc.u32 %v2313, %v2317
        %v2322 = vsel %vm2321, 1, 0
        %v2323 = vadd.s32 %v2313, %v2317
        %v2324 = vadd.s32 %v2316, %v2322
        %vm2325 = vc.u32 %v2323, %v2319
        %v2326 = vsel %vm2325, 1, 0
        %v2327 = vadd.s32 %v2323, %v2319
        %v2328 = vadd.s32 %v2324, %v2326
        %v2329 = vadd.s32 %v2328, %v2318
        %v2330 = vadd.s32 %v2329, %v2320
        %v2331 = vand.u32 %v2308, 65535
        %v2332 = vshrl.u32 %v2308, 16
        %v2333 = vand.u32 %v2303, 65535
        %v2334 = vshrl.u32 %v2303, 16
        %v2335 = vmul.u32 %v2331, %v2333
        %v2336 = vmul.u32 %v2331, %v2334
        %v2337 = vmul.u32 %v2332, %v2333
        %v2338 = vmul.u32 %v2332, %v2334
        %v2339 = vshll.u32 %v2336, 16
        %v2340 = vshrl.u32 %v2336, 16
        %v2341 = vshll.u32 %v2337, 16
        %v2342 = vshrl.u32 %v2337, 16
        %vm2343 = vc.u32 %v2335, %v2339
        %v2344 = vsel %vm2343, 1, 0
        %v2345 = vadd.s32 %v2335, %v2339
        %v2346 = vadd.s32 %v2338, %v2344
        %vm2347 = vc.u32 %v2345, %v2341
        %v2348 = vsel %vm2347, 1, 0
        %v2349 = vadd.s32 %v2345, %v2341
        %v2350 = vadd.s32 %v2346, %v2348
        %v2351 = vadd.s32 %v2350, %v2340
        %v2352 = vadd.s32 %v2351, %v2342
        %v2353 = vmul.u32 %v2308, %v2299
        %v2354 = vadd.s32 %v2330, %v2349
        %vm2355 = vc.u32 %v2330, %v2349
        %v2356 = vadd.s32 %v2352, 1
        %v2357 = vsel %vm2355, %v2356, %v2352
        %v2358 = vadd.s32 %v2353, %v2357
        %v2359 = vadd.s32 %v2358, 536870912
        %v2360 = vshrl.u32 %v2359, 30
        %v2361 = vshll.u32 %v2360, 30
        %v2362 = vsub.s32 %v2358, %v2361
        %vm2363 = vcmp.lt.s32.totalorder %v2362, 0
        %v2364 = vsub.s32 0, %v2362
        %v2365 = vsel %vm2363, %v2364, %v2362
        %v2366 = vclz %v2365
        %v2367 = vsub.s32 %v2366, 2
        %vm2368 = vcmp.gt.s32.totalorder 0, %v2367
        %v2369 = vsel %vm2368, 0, %v2367
        %v2370 = vsub.s32 32, %v2369
        %v2371 = vshll.u32 %v2362, %v2369
        %v2372 = vshrl.u32 %v2354, %v2370
        %v2373 = vor.u32 %v2371, %v2372
        %v2374 = vsub.s32 4294967266, %v2369
        %v2375 = vadd.s32 %v2374, 127
        %v2376 = vshll.u32 %v2375, 23
        %v2377 = vor.u32 4788187, %v2376
        %v2378 = vand.u32 2147483647, %v2377
        %v2380 = vcvt.s32.f32 %v2373
        %v2381 = vmul.f32 %v2380, %v2378
        %v2382 = vxor.u32 %v2381, 2147483648
        %v2383 = vsel %vm2262, %v2382, %v2381
        %v2384 = vsub.s32 4, %v2360
        %v2385 = vsel %vm2262, %v2384, %v2360
        %v2386 = vsel %vm2261, %v550, %v2383
        %v2387 = vsel %vm2261, 0, %v2385
        %v2388 = vmul.f32 %v2386, %v2386
        %v2389 = vmul.f32 %v2388, -0.001358992
        %v2390 = vadd.f32 %v2389, 0.041655596
        %v2391 = vmul.f32 %v2388, %v2390
        %v2392 = vadd.f32 %v2391, -0.4999988
        %v2393 = vmul.f32 %v2388, %v2392
        %v2394 = vadd.f32 1.0, %v2393
        %v2395 = vmul.f32 %v2386, %v2386
        %v2396 = vmul.f32 %v2395, -0.00019511016
        %v2397 = vadd.f32 %v2396, 0.008332121
        %v2398 = vmul.f32 %v2395, %v2397
        %v2399 = vadd.f32 %v2398, -0.16666654
        %v2400 = vmul.f32 %v2395, %v2399
        %v2401 = vadd.f32 %v2400, 1.0
        %v2402 = vmul.f32 %v2401, %v2386
        %vm2403 = vweird.f32 %v550
        %v2404 = vadd.s32 %v2387, 3
        %v2405 = vand.u32 %v2404, 3
        %vm2406 = vcmp.lt.s32.totalorder %v2405, 2
        %vm2407 = vcmp.eq.s32.totalorder %v2405, 0
        %v2408 = vxor.u32 %v2402, 2147483648
        %v2409 = vsel %vm2407, %v2394, %v2408
        %vm2410 = vcmp.eq.s32.totalorder %v2405, 2
        %v2411 = vxor.u32 %v2394, 2147483648
        %v2412 = vsel %vm2410, %v2411, %v2402
        %v2413 = vsel %vm2406, %v2409, %v2412
        %v2414 = vsel %vm2403, nan, %v2413
        %v2415 = vand.u32 2147483647, %v551
        %vm2416 = vcmp.le.f32.partialorder %v2415, 0.7853982
        %vm2417 = vcmp.lt.s32.totalorder %v551, 0
        %v2418 = vand.u32 %v551, 2139095040
        %v2419 = vshrl.u32 %v2418, 23
        %v2420 = vsub.s32 %v2419, 127
        %v2421 = vand.u32 2147483647, %v551
        %v2422 = vand.u32 %v2421, 8388607
        %v2423 = vor.u32 %v2422, 8388608
        %v2424 = vsub.s32 0, %v2423
        %v2425 = vadd.s32 %v2420, 1
        %vm2426 = vcmp.gt.s32.totalorder %v2425, 0
        %v2427 = vsel %vm2426, %v2425, 0
        %v2428 = vshrl.u32 %v2427, 5
        %v2429 = vand.u32 %v2427, 31
        %v2430 = vsub.s32 32, %v2429
        %v2431 = vshrl.u32 683565275, %v2430
        %v2432 = vshll.u32 683565275, %v2429
        %v2433 = vshrl.u32 2475754826, %v2430
        %v2434 = vor.u32 %v2432, %v2433
        %v2435 = vshll.u32 2475754826, %v2429
        %v2436 = vshrl.u32 2131351028, %v2430
        %v2437 = vor.u32 %v2435, %v2436
        %v2438 = vshll.u32 2131351028, %v2429
        %v2439 = vshrl.u32 2102212464, %v2430
        %v2440 = vor.u32 %v2438, %v2439
        %v2441 = vshll.u32 2102212464, %v2429
        %v2442 = vshrl.u32 920167782, %v2430
        %v2443 = vor.u32 %v2441, %v2442
        %v2444 = vshll.u32 920167782, %v2429
        %v2445 = vshrl.u32 1326507024, %v2430
        %v2446 = vor.u32 %v2444, %v2445
        %vm2447 = vcmp.lt.s32.totalorder %v2428, 1
        %vm2448 = vcmp.lt.s32.totalorder %v2428, 2
        %vm2449 = vcmp.lt.s32.totalorder %v2428, 3
        %vm2450 = vcmp.lt.s32.totalorder %v2428, 4
        %v2451 = vsel %vm2447, %v2431, %v2434
        %v2452 = vsel %vm2450, %v2440, 2102212464
        %v2453 = vsel %vm2449, %v2437, %v2452
        %v2454 = vsel %vm2448, %v2451, %v2453
        %v2455 = vsel %vm2447, %v2434, %v2437
        %v2456 = vsel %vm2450, %v2443, 920167782
        %v2457 = vsel %vm2449, %v2440, %v2456
        %v2458 = vsel %vm2448, %v2455, %v2457
        %v2459 = vsel %vm2447, %v2437, %v2440
        %v2460 = vsel %vm2450, %v2446, 1326507024
        %v2461 = vsel %vm2449, %v2443, %v2460
        %v2462 = vsel %vm2448, %v2459, %v2461
        %v2463 = vshll.u32 %v2423, 8
        %v2464 = vand.u32 %v2463, 65535
        %v2465 = vshrl.u32 %v2463, 16
        %v2466 = vand.u32 %v2462, 65535
        %v2467 = vshrl.u32 %v2462, 16
        %v2468 = vmul.u32 %v2464, %v2466
        %v2469 = vmul.u32 %v2464, %v2467
        %v2470 = vmul.u32 %v2465, %v2466
        %v2471 = vmul.u32 %v2465, %v2467
        %v2472 = vshll.u32 %v2469, 16
        %v2473 = vshrl.u32 %v2469, 16
        %v2474 = vshll.u32 %v2470, 16
        %v2475 = vshrl.u32 %v2470, 16
        %vm2476 = vc.u32 %v2468, %v2472
        %v2477 = vsel %vm2476, 1, 0
        %v2478 = vadd.s32 %v2468, %v2472
        %v2479 = vadd.s32 %v2471, %v2477
        %vm2480 = vc.u32 %v2478, %v2474
        %v2481 = vsel %vm2480, 1, 0
        %v2482 = vadd.s32 %v2478, %v2474
        %v2483 = vadd.s32 %v2479, %v2481
        %v2484 = vadd.s32 %v2483, %v2473
        %v2485 = vadd.s32 %v2484, %v2475
        %v2486 = vand.u32 %v2463, 65535
        %v2487 = vshrl.u32 %v2463, 16
        %v2488 = vand.u32 %v2458, 65535
        %v2489 = vshrl.u32 %v2458, 16
        %v2490 = vmul.u32 %v2486, %v2488
        %v2491 = vmul.u32 %v2486, %v2489
        %v2492 = vmul.u32 %v2487, %v2488
        %v2493 = vmul.u32 %v2487, %v2489
        %v2494 = vshll.u32 %v2491, 16
        %v2495 = vshrl.u32 %v2491, 16
        %v2496 = vshll.u32 %v2492, 16
        %v2497 = vshrl.u32 %v2492, 16
        %vm2498 = vc.u32 %v2490, %v2494
        %v2499 = vsel %vm2498, 1, 0
        %v2500 = vadd.s32 %v2490, %v2494
        %v2501 = vadd.s32 %v2493, %v2499
        %vm2502 = vc.u32 %v2500, %v2496
        %v2503 = vsel %vm2502, 1, 0
        %v2504 = vadd.s32 %v2500, %v2496
        %v2505 = vadd.s32 %v2501, %v2503
        %v2506 = vadd.s32 %v2505, %v2495
        %v2507 = vadd.s32 %v2506, %v2497
        %v2508 = vmul.u32 %v2463, %v2454
        %v2509 = vadd.s32 %v2485, %v2504
        %vm2510 = vc.u32 %v2485, %v2504
        %v2511 = vadd.s32 %v2507, 1
        %v2512 = vsel %vm2510, %v2511, %v2507
        %v2513 = vadd.s32 %v2508, %v2512
        %v2514 = vadd.s32 %v2513, 536870912
        %v2515 = vshrl.u32 %v2514, 30
        %v2516 = vshll.u32 %v2515, 30
        %v2517 = vsub.s32 %v2513, %v2516
        %vm2518 = vcmp.lt.s32.totalorder %v2517, 0
        %v2519 = vsub.s32 0, %v2517
        %v2520 = vsel %vm2518, %v2519, %v2517
        %v2521 = vclz %v2520
        %v2522 = vsub.s32 %v2521, 2
        %vm2523 = vcmp.gt.s32.totalorder 0, %v2522
        %v2524 = vsel %vm2523, 0, %v2522
        %v2525 = vsub.s32 32, %v2524
        %v2526 = vshll.u32 %v2517, %v2524
        %v2527 = vshrl.u32 %v2509, %v2525
        %v2528 = vor.u32 %v2526, %v2527
        %v2529 = vsub.s32 4294967266, %v2524
        %v2530 = vadd.s32 %v2529, 127
        %v2531 = vshll.u32 %v2530, 23
        %v2532 = vor.u32 4788187, %v2531
        %v2533 = vand.u32 2147483647, %v2532
        %v2535 = vcvt.s32.f32 %v2528
        %v2536 = vmul.f32 %v2535, %v2533
        %v2537 = vxor.u32 %v2536, 2147483648
        %v2538 = vsel %vm2417, %v2537, %v2536
        %v2539 = vsub.s32 4, %v2515
        %v2540 = vsel %vm2417, %v2539, %v2515
        %v2541 = vsel %vm2416, %v551, %v2538
        %v2542 = vsel %vm2416, 0, %v2540
        %v2543 = vmul.f32 %v2541, %v2541
        %v2544 = vmul.f32 %v2543, -0.001358992
        %v2545 = vadd.f32 %v2544, 0.041655596
        %v2546 = vmul.f32 %v2543, %v2545
        %v2547 = vadd.f32 %v2546, -0.4999988
        %v2548 = vmul.f32 %v2543, %v2547
        %v2549 = vadd.f32 1.0, %v2548
        %v2550 = vmul.f32 %v2541, %v2541
        %v2551 = vmul.f32 %v2550, -0.00019511016
        %v2552 = vadd.f32 %v2551, 0.008332121
        %v2553 = vmul.f32 %v2550, %v2552
        %v2554 = vadd.f32 %v2553, -0.16666654
        %v2555 = vmul.f32 %v2550, %v2554
        %v2556 = vadd.f32 %v2555, 1.0
        %v2557 = vmul.f32 %v2556, %v2541
        %vm2558 = vweird.f32 %v551
        %v2559 = vadd.s32 %v2542, 3
        %v2560 = vand.u32 %v2559, 3
        %vm2561 = vcmp.lt.s32.totalorder %v2560, 2
        %vm2562 = vcmp.eq.s32.totalorder %v2560, 0
        %v2563 = vxor.u32 %v2557, 2147483648
        %v2564 = vsel %vm2562, %v2549, %v2563
        %vm2565 = vcmp.eq.s32.totalorder %v2560, 2
        %v2566 = vxor.u32 %v2549, 2147483648
        %v2567 = vsel %vm2565, %v2566, %v2557
        %v2568 = vsel %vm2561, %v2564, %v2567
        %v2569 = vsel %vm2558, nan, %v2568
        %v2570 = vand.u32 2147483647, %v552
        %vm2571 = vcmp.le.f32.partialorder %v2570, 0.7853982
        %vm2572 = vcmp.lt.s32.totalorder %v552, 0
        %v2573 = vand.u32 %v552, 2139095040
        %v2574 = vshrl.u32 %v2573, 23
        %v2575 = vsub.s32 %v2574, 127
        %v2576 = vand.u32 2147483647, %v552
        %v2577 = vand.u32 %v2576, 8388607
        %v2578 = vor.u32 %v2577, 8388608
        %v2579 = vsub.s32 0, %v2578
        %v2580 = vadd.s32 %v2575, 1
        %vm2581 = vcmp.gt.s32.totalorder %v2580, 0
        %v2582 = vsel %vm2581, %v2580, 0
        %v2583 = vshrl.u32 %v2582, 5
        %v2584 = vand.u32 %v2582, 31
        %v2585 = vsub.s32 32, %v2584
        %v2586 = vshrl.u32 683565275, %v2585
        %v2587 = vshll.u32 683565275, %v2584
        %v2588 = vshrl.u32 2475754826, %v2585
        %v2589 = vor.u32 %v2587, %v2588
        %v2590 = vshll.u32 2475754826, %v2584
        %v2591 = vshrl.u32 2131351028, %v2585
        %v2592 = vor.u32 %v2590, %v2591
        %v2593 = vshll.u32 2131351028, %v2584
        %v2594 = vshrl.u32 2102212464, %v2585
        %v2595 = vor.u32 %v2593, %v2594
        %v2596 = vshll.u32 2102212464, %v2584
        %v2597 = vshrl.u32 920167782, %v2585
        %v2598 = vor.u32 %v2596, %v2597
        %v2599 = vshll.u32 920167782, %v2584
        %v2600 = vshrl.u32 1326507024, %v2585
        %v2601 = vor.u32 %v2599, %v2600
        %vm2602 = vcmp.lt.s32.totalorder %v2583, 1
        %vm2603 = vcmp.lt.s32.totalorder %v2583, 2
        %vm2604 = vcmp.lt.s32.totalorder %v2583, 3
        %vm2605 = vcmp.lt.s32.totalorder %v2583, 4
        %v2606 = vsel %vm2602, %v2586, %v2589
        %v2607 = vsel %vm2605, %v2595, 2102212464
        %v2608 = vsel %vm2604, %v2592, %v2607
        %v2609 = vsel %vm2603, %v2606, %v2608
        %v2610 = vsel %vm2602, %v2589, %v2592
        %v2611 = vsel %vm2605, %v2598, 920167782
        %v2612 = vsel %vm2604, %v2595, %v2611
        %v2613 = vsel %vm2603, %v2610, %v2612
        %v2614 = vsel %vm2602, %v2592, %v2595
        %v2615 = vsel %vm2605, %v2601, 1326507024
        %v2616 = vsel %vm2604, %v2598, %v2615
        %v2617 = vsel %vm2603, %v2614, %v2616
        %v2618 = vshll.u32 %v2578, 8
        %v2619 = vand.u32 %v2618, 65535
        %v2620 = vshrl.u32 %v2618, 16
        %v2621 = vand.u32 %v2617, 65535
        %v2622 = vshrl.u32 %v2617, 16
        %v2623 = vmul.u32 %v2619, %v2621
        %v2624 = vmul.u32 %v2619, %v2622
        %v2625 = vmul.u32 %v2620, %v2621
        %v2626 = vmul.u32 %v2620, %v2622
        %v2627 = vshll.u32 %v2624, 16
        %v2628 = vshrl.u32 %v2624, 16
        %v2629 = vshll.u32 %v2625, 16
        %v2630 = vshrl.u32 %v2625, 16
        %vm2631 = vc.u32 %v2623, %v2627
        %v2632 = vsel %vm2631, 1, 0
        %v2633 = vadd.s32 %v2623, %v2627
        %v2634 = vadd.s32 %v2626, %v2632
        %vm2635 = vc.u32 %v2633, %v2629
        %v2636 = vsel %vm2635, 1, 0
        %v2637 = vadd.s32 %v2633, %v2629
        %v2638 = vadd.s32 %v2634, %v2636
        %v2639 = vadd.s32 %v2638, %v2628
        %v2640 = vadd.s32 %v2639, %v2630
        %v2641 = vand.u32 %v2618, 65535
        %v2642 = vshrl.u32 %v2618, 16
        %v2643 = vand.u32 %v2613, 65535
        %v2644 = vshrl.u32 %v2613, 16
        %v2645 = vmul.u32 %v2641, %v2643
        %v2646 = vmul.u32 %v2641, %v2644
        %v2647 = vmul.u32 %v2642, %v2643
        %v2648 = vmul.u32 %v2642, %v2644
        %v2649 = vshll.u32 %v2646, 16
        %v2650 = vshrl.u32 %v2646, 16
        %v2651 = vshll.u32 %v2647, 16
        %v2652 = vshrl.u32 %v2647, 16
        %vm2653 = vc.u32 %v2645, %v2649
        %v2654 = vsel %vm2653, 1, 0
        %v2655 = vadd.s32 %v2645, %v2649
        %v2656 = vadd.s32 %v2648, %v2654
        %vm2657 = vc.u32 %v2655, %v2651
        %v2658 = vsel %vm2657, 1, 0
        %v2659 = vadd.s32 %v2655, %v2651
        %v2660 = vadd.s32 %v2656, %v2658
        %v2661 = vadd.s32 %v2660, %v2650
        %v2662 = vadd.s32 %v2661, %v2652
        %v2663 = vmul.u32 %v2618, %v2609
        %v2664 = vadd.s32 %v2640, %v2659
        %vm2665 = vc.u32 %v2640, %v2659
        %v2666 = vadd.s32 %v2662, 1
        %v2667 = vsel %vm2665, %v2666, %v2662
        %v2668 = vadd.s32 %v2663, %v2667
        %v2669 = vadd.s32 %v2668, 536870912
        %v2670 = vshrl.u32 %v2669, 30
        %v2671 = vshll.u32 %v2670, 30
        %v2672 = vsub.s32 %v2668, %v2671
        %vm2673 = vcmp.lt.s32.totalorder %v2672, 0
        %v2674 = vsub.s32 0, %v2672
        %v2675 = vsel %vm2673, %v2674, %v2672
        %v2676 = vclz %v2675
        %v2677 = vsub.s32 %v2676, 2
        %vm2678 = vcmp.gt.s32.totalorder 0, %v2677
        %v2679 = vsel %vm2678, 0, %v2677
        %v2680 = vsub.s32 32, %v2679
        %v2681 = vshll.u32 %v2672, %v2679
        %v2682 = vshrl.u32 %v2664, %v2680
        %v2683 = vor.u32 %v2681, %v2682
        %v2684 = vsub.s32 4294967266, %v2679
        %v2685 = vadd.s32 %v2684, 127
        %v2686 = vshll.u32 %v2685, 23
        %v2687 = vor.u32 4788187, %v2686
        %v2688 = vand.u32 2147483647, %v2687
        %v2690 = vcvt.s32.f32 %v2683
        %v2691 = vmul.f32 %v2690, %v2688
        %v2692 = vxor.u32 %v2691, 2147483648
        %v2693 = vsel %vm2572, %v2692, %v2691
        %v2694 = vsub.s32 4, %v2670
        %v2695 = vsel %vm2572, %v2694, %v2670
        %v2696 = vsel %vm2571, %v552, %v2693
        %v2697 = vsel %vm2571, 0, %v2695
        %v2698 = vmul.f32 %v2696, %v2696
        %v2699 = vmul.f32 %v2698, -0.001358992
        %v2700 = vadd.f32 %v2699, 0.041655596
        %v2701 = vmul.f32 %v2698, %v2700
        %v2702 = vadd.f32 %v2701, -0.4999988
        %v2703 = vmul.f32 %v2698, %v2702
        %v2704 = vadd.f32 1.0, %v2703
        %v2705 = vmul.f32 %v2696, %v2696
        %v2706 = vmul.f32 %v2705, -0.00019511016
        %v2707 = vadd.f32 %v2706, 0.008332121
        %v2708 = vmul.f32 %v2705, %v2707
        %v2709 = vadd.f32 %v2708, -0.16666654
        %v2710 = vmul.f32 %v2705, %v2709
        %v2711 = vadd.f32 %v2710, 1.0
        %v2712 = vmul.f32 %v2711, %v2696
        %vm2713 = vweird.f32 %v552
        %v2714 = vadd.s32 %v2697, 3
        %v2715 = vand.u32 %v2714, 3
        %vm2716 = vcmp.lt.s32.totalorder %v2715, 2
        %vm2717 = vcmp.eq.s32.totalorder %v2715, 0
        %v2718 = vxor.u32 %v2712, 2147483648
        %v2719 = vsel %vm2717, %v2704, %v2718
        %vm2720 = vcmp.eq.s32.totalorder %v2715, 2
        %v2721 = vxor.u32 %v2704, 2147483648
        %v2722 = vsel %vm2720, %v2721, %v2712
        %v2723 = vsel %vm2716, %v2719, %v2722
        %v2724 = vsel %vm2713, nan, %v2723
        %v2725 = vand.u32 2147483647, %v553
        %vm2726 = vcmp.le.f32.partialorder %v2725, 0.7853982
        %vm2727 = vcmp.lt.s32.totalorder %v553, 0
        %v2728 = vand.u32 %v553, 2139095040
        %v2729 = vshrl.u32 %v2728, 23
        %v2730 = vsub.s32 %v2729, 127
        %v2731 = vand.u32 2147483647, %v553
        %v2732 = vand.u32 %v2731, 8388607
        %v2733 = vor.u32 %v2732, 8388608
        %v2734 = vsub.s32 0, %v2733
        %v2735 = vadd.s32 %v2730, 1
        %vm2736 = vcmp.gt.s32.totalorder %v2735, 0
        %v2737 = vsel %vm2736, %v2735, 0
        %v2738 = vshrl.u32 %v2737, 5
        %v2739 = vand.u32 %v2737, 31
        %v2740 = vsub.s32 32, %v2739
        %v2741 = vshrl.u32 683565275, %v2740
        %v2742 = vshll.u32 683565275, %v2739
        %v2743 = vshrl.u32 2475754826, %v2740
        %v2744 = vor.u32 %v2742, %v2743
        %v2745 = vshll.u32 2475754826, %v2739
        %v2746 = vshrl.u32 2131351028, %v2740
        %v2747 = vor.u32 %v2745, %v2746
        %v2748 = vshll.u32 2131351028, %v2739
        %v2749 = vshrl.u32 2102212464, %v2740
        %v2750 = vor.u32 %v2748, %v2749
        %v2751 = vshll.u32 2102212464, %v2739
        %v2752 = vshrl.u32 920167782, %v2740
        %v2753 = vor.u32 %v2751, %v2752
        %v2754 = vshll.u32 920167782, %v2739
        %v2755 = vshrl.u32 1326507024, %v2740
        %v2756 = vor.u32 %v2754, %v2755
        %vm2757 = vcmp.lt.s32.totalorder %v2738, 1
        %vm2758 = vcmp.lt.s32.totalorder %v2738, 2
        %vm2759 = vcmp.lt.s32.totalorder %v2738, 3
        %vm2760 = vcmp.lt.s32.totalorder %v2738, 4
        %v2761 = vsel %vm2757, %v2741, %v2744
        %v2762 = vsel %vm2760, %v2750, 2102212464
        %v2763 = vsel %vm2759, %v2747, %v2762
        %v2764 = vsel %vm2758, %v2761, %v2763
        %v2765 = vsel %vm2757, %v2744, %v2747
        %v2766 = vsel %vm2760, %v2753, 920167782
        %v2767 = vsel %vm2759, %v2750, %v2766
        %v2768 = vsel %vm2758, %v2765, %v2767
        %v2769 = vsel %vm2757, %v2747, %v2750
        %v2770 = vsel %vm2760, %v2756, 1326507024
        %v2771 = vsel %vm2759, %v2753, %v2770
        %v2772 = vsel %vm2758, %v2769, %v2771
        %v2773 = vshll.u32 %v2733, 8
        %v2774 = vand.u32 %v2773, 65535
        %v2775 = vshrl.u32 %v2773, 16
        %v2776 = vand.u32 %v2772, 65535
        %v2777 = vshrl.u32 %v2772, 16
        %v2778 = vmul.u32 %v2774, %v2776
        %v2779 = vmul.u32 %v2774, %v2777
        %v2780 = vmul.u32 %v2775, %v2776
        %v2781 = vmul.u32 %v2775, %v2777
        %v2782 = vshll.u32 %v2779, 16
        %v2783 = vshrl.u32 %v2779, 16
        %v2784 = vshll.u32 %v2780, 16
        %v2785 = vshrl.u32 %v2780, 16
        %vm2786 = vc.u32 %v2778, %v2782
        %v2787 = vsel %vm2786, 1, 0
        %v2788 = vadd.s32 %v2778, %v2782
        %v2789 = vadd.s32 %v2781, %v2787
        %vm2790 = vc.u32 %v2788, %v2784
        %v2791 = vsel %vm2790, 1, 0
        %v2792 = vadd.s32 %v2788, %v2784
        %v2793 = vadd.s32 %v2789, %v2791
        %v2794 = vadd.s32 %v2793, %v2783
        %v2795 = vadd.s32 %v2794, %v2785
        %v2796 = vand.u32 %v2773, 65535
        %v2797 = vshrl.u32 %v2773, 16
        %v2798 = vand.u32 %v2768, 65535
        %v2799 = vshrl.u32 %v2768, 16
        %v2800 = vmul.u32 %v2796, %v2798
        %v2801 = vmul.u32 %v2796, %v2799
        %v2802 = vmul.u32 %v2797, %v2798
        %v2803 = vmul.u32 %v2797, %v2799
        %v2804 = vshll.u32 %v2801, 16
        %v2805 = vshrl.u32 %v2801, 16
        %v2806 = vshll.u32 %v2802, 16
        %v2807 = vshrl.u32 %v2802, 16
        %vm2808 = vc.u32 %v2800, %v2804
        %v2809 = vsel %vm2808, 1, 0
        %v2810 = vadd.s32 %v2800, %v2804
        %v2811 = vadd.s32 %v2803, %v2809
        %vm2812 = vc.u32 %v2810, %v2806
        %v2813 = vsel %vm2812, 1, 0
        %v2814 = vadd.s32 %v2810, %v2806
        %v2815 = vadd.s32 %v2811, %v2813
        %v2816 = vadd.s32 %v2815, %v2805
        %v2817 = vadd.s32 %v2816, %v2807
        %v2818 = vmul.u32 %v2773, %v2764
        %v2819 = vadd.s32 %v2795, %v2814
        %vm2820 = vc.u32 %v2795, %v2814
        %v2821 = vadd.s32 %v2817, 1
        %v2822 = vsel %vm2820, %v2821, %v2817
        %v2823 = vadd.s32 %v2818, %v2822
        %v2824 = vadd.s32 %v2823, 536870912
        %v2825 = vshrl.u32 %v2824, 30
        %v2826 = vshll.u32 %v2825, 30
        %v2827 = vsub.s32 %v2823, %v2826
        %vm2828 = vcmp.lt.s32.totalorder %v2827, 0
        %v2829 = vsub.s32 0, %v2827
        %v2830 = vsel %vm2828, %v2829, %v2827
        %v2831 = vclz %v2830
        %v2832 = vsub.s32 %v2831, 2
        %vm2833 = vcmp.gt.s32.totalorder 0, %v2832
        %v2834 = vsel %vm2833, 0, %v2832
        %v2835 = vsub.s32 32, %v2834
        %v2836 = vshll.u32 %v2827, %v2834
        %v2837 = vshrl.u32 %v2819, %v2835
        %v2838 = vor.u32 %v2836, %v2837
        %v2839 = vsub.s32 4294967266, %v2834
        %v2840 = vadd.s32 %v2839, 127
        %v2841 = vshll.u32 %v2840, 23
        %v2842 = vor.u32 4788187, %v2841
        %v2843 = vand.u32 2147483647, %v2842
        %v2845 = vcvt.s32.f32 %v2838
        %v2846 = vmul.f32 %v2845, %v2843
        %v2847 = vxor.u32 %v2846, 2147483648
        %v2848 = vsel %vm2727, %v2847, %v2846
        %v2849 = vsub.s32 4, %v2825
        %v2850 = vsel %vm2727, %v2849, %v2825
        %v2851 = vsel %vm2726, %v553, %v2848
        %v2852 = vsel %vm2726, 0, %v2850
        %v2853 = vmul.f32 %v2851, %v2851
        %v2854 = vmul.f32 %v2853, -0.001358992
        %v2855 = vadd.f32 %v2854, 0.041655596
        %v2856 = vmul.f32 %v2853, %v2855
        %v2857 = vadd.f32 %v2856, -0.4999988
        %v2858 = vmul.f32 %v2853, %v2857
        %v2859 = vadd.f32 1.0, %v2858
        %v2860 = vmul.f32 %v2851, %v2851
        %v2861 = vmul.f32 %v2860, -0.00019511016
        %v2862 = vadd.f32 %v2861, 0.008332121
        %v2863 = vmul.f32 %v2860, %v2862
        %v2864 = vadd.f32 %v2863, -0.16666654
        %v2865 = vmul.f32 %v2860, %v2864
        %v2866 = vadd.f32 %v2865, 1.0
        %v2867 = vmul.f32 %v2866, %v2851
        %vm2868 = vweird.f32 %v553
        %v2869 = vadd.s32 %v2852, 3
        %v2870 = vand.u32 %v2869, 3
        %vm2871 = vcmp.lt.s32.totalorder %v2870, 2
        %vm2872 = vcmp.eq.s32.totalorder %v2870, 0
        %v2873 = vxor.u32 %v2867, 2147483648
        %v2874 = vsel %vm2872, %v2859, %v2873
        %vm2875 = vcmp.eq.s32.totalorder %v2870, 2
        %v2876 = vxor.u32 %v2859, 2147483648
        %v2877 = vsel %vm2875, %v2876, %v2867
        %v2878 = vsel %vm2871, %v2874, %v2877
        %v2879 = vsel %vm2868, nan, %v2878
        %v2880 = vand.u32 2147483647, %v554
        %vm2881 = vcmp.le.f32.partialorder %v2880, 0.7853982
        %vm2882 = vcmp.lt.s32.totalorder %v554, 0
        %v2883 = vand.u32 %v554, 2139095040
        %v2884 = vshrl.u32 %v2883, 23
        %v2885 = vsub.s32 %v2884, 127
        %v2886 = vand.u32 2147483647, %v554
        %v2887 = vand.u32 %v2886, 8388607
        %v2888 = vor.u32 %v2887, 8388608
        %v2889 = vsub.s32 0, %v2888
        %v2890 = vadd.s32 %v2885, 1
        %vm2891 = vcmp.gt.s32.totalorder %v2890, 0
        %v2892 = vsel %vm2891, %v2890, 0
        %v2893 = vshrl.u32 %v2892, 5
        %v2894 = vand.u32 %v2892, 31
        %v2895 = vsub.s32 32, %v2894
        %v2896 = vshrl.u32 683565275, %v2895
        %v2897 = vshll.u32 683565275, %v2894
        %v2898 = vshrl.u32 2475754826, %v2895
        %v2899 = vor.u32 %v2897, %v2898
        %v2900 = vshll.u32 2475754826, %v2894
        %v2901 = vshrl.u32 2131351028, %v2895
        %v2902 = vor.u32 %v2900, %v2901
        %v2903 = vshll.u32 2131351028, %v2894
        %v2904 = vshrl.u32 2102212464, %v2895
        %v2905 = vor.u32 %v2903, %v2904
        %v2906 = vshll.u32 2102212464, %v2894
        %v2907 = vshrl.u32 920167782, %v2895
        %v2908 = vor.u32 %v2906, %v2907
        %v2909 = vshll.u32 920167782, %v2894
        %v2910 = vshrl.u32 1326507024, %v2895
        %v2911 = vor.u32 %v2909, %v2910
        %vm2912 = vcmp.lt.s32.totalorder %v2893, 1
        %vm2913 = vcmp.lt.s32.totalorder %v2893, 2
        %vm2914 = vcmp.lt.s32.totalorder %v2893, 3
        %vm2915 = vcmp.lt.s32.totalorder %v2893, 4
        %v2916 = vsel %vm2912, %v2896, %v2899
        %v2917 = vsel %vm2915, %v2905, 2102212464
        %v2918 = vsel %vm2914, %v2902, %v2917
        %v2919 = vsel %vm2913, %v2916, %v2918
        %v2920 = vsel %vm2912, %v2899, %v2902
        %v2921 = vsel %vm2915, %v2908, 920167782
        %v2922 = vsel %vm2914, %v2905, %v2921
        %v2923 = vsel %vm2913, %v2920, %v2922
        %v2924 = vsel %vm2912, %v2902, %v2905
        %v2925 = vsel %vm2915, %v2911, 1326507024
        %v2926 = vsel %vm2914, %v2908, %v2925
        %v2927 = vsel %vm2913, %v2924, %v2926
        %v2928 = vshll.u32 %v2888, 8
        %v2929 = vand.u32 %v2928, 65535
        %v2930 = vshrl.u32 %v2928, 16
        %v2931 = vand.u32 %v2927, 65535
        %v2932 = vshrl.u32 %v2927, 16
        %v2933 = vmul.u32 %v2929, %v2931
        %v2934 = vmul.u32 %v2929, %v2932
        %v2935 = vmul.u32 %v2930, %v2931
        %v2936 = vmul.u32 %v2930, %v2932
        %v2937 = vshll.u32 %v2934, 16
        %v2938 = vshrl.u32 %v2934, 16
        %v2939 = vshll.u32 %v2935, 16
        %v2940 = vshrl.u32 %v2935, 16
        %vm2941 = vc.u32 %v2933, %v2937
        %v2942 = vsel %vm2941, 1, 0
        %v2943 = vadd.s32 %v2933, %v2937
        %v2944 = vadd.s32 %v2936, %v2942
        %vm2945 = vc.u32 %v2943, %v2939
        %v2946 = vsel %vm2945, 1, 0
        %v2947 = vadd.s32 %v2943, %v2939
        %v2948 = vadd.s32 %v2944, %v2946
        %v2949 = vadd.s32 %v2948, %v2938
        %v2950 = vadd.s32 %v2949, %v2940
        %v2951 = vand.u32 %v2928, 65535
        %v2952 = vshrl.u32 %v2928, 16
        %v2953 = vand.u32 %v2923, 65535
        %v2954 = vshrl.u32 %v2923, 16
        %v2955 = vmul.u32 %v2951, %v2953
        %v2956 = vmul.u32 %v2951, %v2954
        %v2957 = vmul.u32 %v2952, %v2953
        %v2958 = vmul.u32 %v2952, %v2954
        %v2959 = vshll.u32 %v2956, 16
        %v2960 = vshrl.u32 %v2956, 16
        %v2961 = vshll.u32 %v2957, 16
        %v2962 = vshrl.u32 %v2957, 16
        %vm2963 = vc.u32 %v2955, %v2959
        %v2964 = vsel %vm2963, 1, 0
        %v2965 = vadd.s32 %v2955, %v2959
        %v2966 = vadd.s32 %v2958, %v2964
        %vm2967 = vc.u32 %v2965, %v2961
        %v2968 = vsel %vm2967, 1, 0
        %v2969 = vadd.s32 %v2965, %v2961
        %v2970 = vadd.s32 %v2966, %v2968
        %v2971 = vadd.s32 %v2970, %v2960
        %v2972 = vadd.s32 %v2971, %v2962
        %v2973 = vmul.u32 %v2928, %v2919
        %v2974 = vadd.s32 %v2950, %v2969
        %vm2975 = vc.u32 %v2950, %v2969
        %v2976 = vadd.s32 %v2972, 1
        %v2977 = vsel %vm2975, %v2976, %v2972
        %v2978 = vadd.s32 %v2973, %v2977
        %v2979 = vadd.s32 %v2978, 536870912
        %v2980 = vshrl.u32 %v2979, 30
        %v2981 = vshll.u32 %v2980, 30
        %v2982 = vsub.s32 %v2978, %v2981
        %vm2983 = vcmp.lt.s32.totalorder %v2982, 0
        %v2984 = vsub.s32 0, %v2982
        %v2985 = vsel %vm2983, %v2984, %v2982
        %v2986 = vclz %v2985
        %v2987 = vsub.s32 %v2986, 2
        %vm2988 = vcmp.gt.s32.totalorder 0, %v2987
        %v2989 = vsel %vm2988, 0, %v2987
        %v2990 = vsub.s32 32, %v2989
        %v2991 = vshll.u32 %v2982, %v2989
        %v2992 = vshrl.u32 %v2974, %v2990
        %v2993 = vor.u32 %v2991, %v2992
        %v2994 = vsub.s32 4294967266, %v2989
        %v2995 = vadd.s32 %v2994, 127
        %v2996 = vshll.u32 %v2995, 23
        %v2997 = vor.u32 4788187, %v2996
        %v2998 = vand.u32 2147483647, %v2997
        %v3000 = vcvt.s32.f32 %v2993
        %v3001 = vmul.f32 %v3000, %v2998
        %v3002 = vxor.u32 %v3001, 2147483648
        %v3003 = vsel %vm2882, %v3002, %v3001
        %v3004 = vsub.s32 4, %v2980
        %v3005 = vsel %vm2882, %v3004, %v2980
        %v3006 = vsel %vm2881, %v554, %v3003
        %v3007 = vsel %vm2881, 0, %v3005
        %v3008 = vmul.f32 %v3006, %v3006
        %v3009 = vmul.f32 %v3008, -0.001358992
        %v3010 = vadd.f32 %v3009, 0.041655596
        %v3011 = vmul.f32 %v3008, %v3010
        %v3012 = vadd.f32 %v3011, -0.4999988
        %v3013 = vmul.f32 %v3008, %v3012
        %v3014 = vadd.f32 1.0, %v3013
        %v3015 = vmul.f32 %v3006, %v3006
        %v3016 = vmul.f32 %v3015, -0.00019511016
        %v3017 = vadd.f32 %v3016, 0.008332121
        %v3018 = vmul.f32 %v3015, %v3017
        %v3019 = vadd.f32 %v3018, -0.16666654
        %v3020 = vmul.f32 %v3015, %v3019
        %v3021 = vadd.f32 %v3020, 1.0
        %v3022 = vmul.f32 %v3021, %v3006
        %vm3023 = vweird.f32 %v554
        %v3024 = vadd.s32 %v3007, 3
        %v3025 = vand.u32 %v3024, 3
        %vm3026 = vcmp.lt.s32.totalorder %v3025, 2
        %vm3027 = vcmp.eq.s32.totalorder %v3025, 0
        %v3028 = vxor.u32 %v3022, 2147483648
        %v3029 = vsel %vm3027, %v3014, %v3028
        %vm3030 = vcmp.eq.s32.totalorder %v3025, 2
        %v3031 = vxor.u32 %v3014, 2147483648
        %v3032 = vsel %vm3030, %v3031, %v3022
        %v3033 = vsel %vm3026, %v3029, %v3032
        %v3034 = vsel %vm3023, nan, %v3033
        %v3035 = vld [vmem:[%s3] sm:$0x3]
        %v3036 = vld [vmem:[%s4] sm:$0x1]
        %v3037 = vperm.slane %v3035, 0
        %v3038 = vmul.f32 %v343, %v3037
        %v3039 = vmul.f32 %v348, %v3037
        %v3040 = vmul.f32 %v353, %v3037
        %v3041 = vmul.f32 %v358, %v3037
        %v3042 = vmul.f32 %v363, %v3037
        %v3043 = vmul.f32 %v368, %v3037
        %v3044 = vmul.f32 %v373, %v3037
        %v3045 = vmul.f32 %v378, %v3037
        %v3046 = vmul.f32 %v383, %v3037
        %v3047 = vmul.f32 %v388, %v3037
        %v3048 = vmul.f32 %v393, %v3037
        %v3049 = vmul.f32 %v398, %v3037
        %v3050 = vmul.f32 %v403, %v3037
        %v3051 = vmul.f32 %v408, %v3037
        %v3052 = vmul.f32 %v413, %v3037
        %v3053 = vmul.f32 %v418, %v3037
        %v3055 = vperm.slane %v3036, 0
        %v3057 = vadd.f32 %v3038, %v3055
        %v3058 = vadd.f32 %v3039, %v3055
        %v3059 = vadd.f32 %v3040, %v3055
        %v3060 = vadd.f32 %v3041, %v3055
        %v3061 = vadd.f32 %v3042, %v3055
        %v3062 = vadd.f32 %v3043, %v3055
        %v3063 = vadd.f32 %v3044, %v3055
        %v3064 = vadd.f32 %v3045, %v3055
        %v3065 = vadd.f32 %v3046, %v3055
        %v3066 = vadd.f32 %v3047, %v3055
        %v3067 = vadd.f32 %v3048, %v3055
        %v3068 = vadd.f32 %v3049, %v3055
        %v3069 = vadd.f32 %v3050, %v3055
        %v3070 = vadd.f32 %v3051, %v3055
        %v3071 = vadd.f32 %v3052, %v3055
        %v3072 = vadd.f32 %v3053, %v3055
        %v3073 = vperm.slane %v3035, 1
        %v3074 = vmul.f32 %v422, %v3073
        %v3075 = vmul.f32 %v426, %v3073
        %v3076 = vmul.f32 %v430, %v3073
        %v3077 = vmul.f32 %v434, %v3073
        %v3078 = vmul.f32 %v438, %v3073
        %v3079 = vmul.f32 %v442, %v3073
        %v3080 = vmul.f32 %v446, %v3073
        %v3081 = vmul.f32 %v450, %v3073
        %v3082 = vmul.f32 %v454, %v3073
        %v3083 = vmul.f32 %v458, %v3073
        %v3084 = vmul.f32 %v462, %v3073
        %v3085 = vmul.f32 %v466, %v3073
        %v3086 = vmul.f32 %v470, %v3073
        %v3087 = vmul.f32 %v474, %v3073
        %v3088 = vmul.f32 %v478, %v3073
        %v3089 = vmul.f32 %v482, %v3073
        %v3090 = vadd.f32 %v3057, %v3074
        %v3091 = vadd.f32 %v3058, %v3075
        %v3092 = vadd.f32 %v3059, %v3076
        %v3093 = vadd.f32 %v3060, %v3077
        %v3094 = vadd.f32 %v3061, %v3078
        %v3095 = vadd.f32 %v3062, %v3079
        %v3096 = vadd.f32 %v3063, %v3080
        %v3097 = vadd.f32 %v3064, %v3081
        %v3098 = vadd.f32 %v3065, %v3082
        %v3099 = vadd.f32 %v3066, %v3083
        %v3100 = vadd.f32 %v3067, %v3084
        %v3101 = vadd.f32 %v3068, %v3085
        %v3102 = vadd.f32 %v3069, %v3086
        %v3103 = vadd.f32 %v3070, %v3087
        %v3104 = vadd.f32 %v3071, %v3088
        %v3105 = vadd.f32 %v3072, %v3089
        %v3106 = vand.u32 2147483647, %v3090
        %vm3107 = vcmp.le.f32.partialorder %v3106, 0.7853982
        %vm3108 = vcmp.lt.s32.totalorder %v3090, 0
        %v3109 = vand.u32 %v3090, 2139095040
        %v3110 = vshrl.u32 %v3109, 23
        %v3111 = vsub.s32 %v3110, 127
        %v3112 = vand.u32 2147483647, %v3090
        %v3113 = vand.u32 %v3112, 8388607
        %v3114 = vor.u32 %v3113, 8388608
        %v3115 = vsub.s32 0, %v3114
        %v3116 = vadd.s32 %v3111, 1
        %vm3117 = vcmp.gt.s32.totalorder %v3116, 0
        %v3118 = vsel %vm3117, %v3116, 0
        %v3119 = vshrl.u32 %v3118, 5
        %v3120 = vand.u32 %v3118, 31
        %v3121 = vsub.s32 32, %v3120
        %v3122 = vshrl.u32 683565275, %v3121
        %v3123 = vshll.u32 683565275, %v3120
        %v3124 = vshrl.u32 2475754826, %v3121
        %v3125 = vor.u32 %v3123, %v3124
        %v3126 = vshll.u32 2475754826, %v3120
        %v3127 = vshrl.u32 2131351028, %v3121
        %v3128 = vor.u32 %v3126, %v3127
        %v3129 = vshll.u32 2131351028, %v3120
        %v3130 = vshrl.u32 2102212464, %v3121
        %v3131 = vor.u32 %v3129, %v3130
        %v3132 = vshll.u32 2102212464, %v3120
        %v3133 = vshrl.u32 920167782, %v3121
        %v3134 = vor.u32 %v3132, %v3133
        %v3135 = vshll.u32 920167782, %v3120
        %v3136 = vshrl.u32 1326507024, %v3121
        %v3137 = vor.u32 %v3135, %v3136
        %vm3138 = vcmp.lt.s32.totalorder %v3119, 1
        %vm3139 = vcmp.lt.s32.totalorder %v3119, 2
        %vm3140 = vcmp.lt.s32.totalorder %v3119, 3
        %vm3141 = vcmp.lt.s32.totalorder %v3119, 4
        %v3142 = vsel %vm3138, %v3122, %v3125
        %v3143 = vsel %vm3141, %v3131, 2102212464
        %v3144 = vsel %vm3140, %v3128, %v3143
        %v3145 = vsel %vm3139, %v3142, %v3144
        %v3146 = vsel %vm3138, %v3125, %v3128
        %v3147 = vsel %vm3141, %v3134, 920167782
        %v3148 = vsel %vm3140, %v3131, %v3147
        %v3149 = vsel %vm3139, %v3146, %v3148
        %v3150 = vsel %vm3138, %v3128, %v3131
        %v3151 = vsel %vm3141, %v3137, 1326507024
        %v3152 = vsel %vm3140, %v3134, %v3151
        %v3153 = vsel %vm3139, %v3150, %v3152
        %v3154 = vshll.u32 %v3114, 8
        %v3155 = vand.u32 %v3154, 65535
        %v3156 = vshrl.u32 %v3154, 16
        %v3157 = vand.u32 %v3153, 65535
        %v3158 = vshrl.u32 %v3153, 16
        %v3159 = vmul.u32 %v3155, %v3157
        %v3160 = vmul.u32 %v3155, %v3158
        %v3161 = vmul.u32 %v3156, %v3157
        %v3162 = vmul.u32 %v3156, %v3158
        %v3163 = vshll.u32 %v3160, 16
        %v3164 = vshrl.u32 %v3160, 16
        %v3165 = vshll.u32 %v3161, 16
        %v3166 = vshrl.u32 %v3161, 16
        %vm3167 = vc.u32 %v3159, %v3163
        %v3168 = vsel %vm3167, 1, 0
        %v3169 = vadd.s32 %v3159, %v3163
        %v3170 = vadd.s32 %v3162, %v3168
        %vm3171 = vc.u32 %v3169, %v3165
        %v3172 = vsel %vm3171, 1, 0
        %v3173 = vadd.s32 %v3169, %v3165
        %v3174 = vadd.s32 %v3170, %v3172
        %v3175 = vadd.s32 %v3174, %v3164
        %v3176 = vadd.s32 %v3175, %v3166
        %v3177 = vand.u32 %v3154, 65535
        %v3178 = vshrl.u32 %v3154, 16
        %v3179 = vand.u32 %v3149, 65535
        %v3180 = vshrl.u32 %v3149, 16
        %v3181 = vmul.u32 %v3177, %v3179
        %v3182 = vmul.u32 %v3177, %v3180
        %v3183 = vmul.u32 %v3178, %v3179
        %v3184 = vmul.u32 %v3178, %v3180
        %v3185 = vshll.u32 %v3182, 16
        %v3186 = vshrl.u32 %v3182, 16
        %v3187 = vshll.u32 %v3183, 16
        %v3188 = vshrl.u32 %v3183, 16
        %vm3189 = vc.u32 %v3181, %v3185
        %v3190 = vsel %vm3189, 1, 0
        %v3191 = vadd.s32 %v3181, %v3185
        %v3192 = vadd.s32 %v3184, %v3190
        %vm3193 = vc.u32 %v3191, %v3187
        %v3194 = vsel %vm3193, 1, 0
        %v3195 = vadd.s32 %v3191, %v3187
        %v3196 = vadd.s32 %v3192, %v3194
        %v3197 = vadd.s32 %v3196, %v3186
        %v3198 = vadd.s32 %v3197, %v3188
        %v3199 = vmul.u32 %v3154, %v3145
        %v3200 = vadd.s32 %v3176, %v3195
        %vm3201 = vc.u32 %v3176, %v3195
        %v3202 = vadd.s32 %v3198, 1
        %v3203 = vsel %vm3201, %v3202, %v3198
        %v3204 = vadd.s32 %v3199, %v3203
        %v3205 = vadd.s32 %v3204, 536870912
        %v3206 = vshrl.u32 %v3205, 30
        %v3207 = vshll.u32 %v3206, 30
        %v3208 = vsub.s32 %v3204, %v3207
        %vm3209 = vcmp.lt.s32.totalorder %v3208, 0
        %v3210 = vsub.s32 0, %v3208
        %v3211 = vsel %vm3209, %v3210, %v3208
        %v3212 = vclz %v3211
        %v3213 = vsub.s32 %v3212, 2
        %vm3214 = vcmp.gt.s32.totalorder 0, %v3213
        %v3215 = vsel %vm3214, 0, %v3213
        %v3216 = vsub.s32 32, %v3215
        %v3217 = vshll.u32 %v3208, %v3215
        %v3218 = vshrl.u32 %v3200, %v3216
        %v3219 = vor.u32 %v3217, %v3218
        %v3220 = vsub.s32 4294967266, %v3215
        %v3221 = vadd.s32 %v3220, 127
        %v3222 = vshll.u32 %v3221, 23
        %v3223 = vor.u32 4788187, %v3222
        %v3224 = vand.u32 2147483647, %v3223
        %v3226 = vcvt.s32.f32 %v3219
        %v3227 = vmul.f32 %v3226, %v3224
        %v3228 = vxor.u32 %v3227, 2147483648
        %v3229 = vsel %vm3108, %v3228, %v3227
        %v3230 = vsub.s32 4, %v3206
        %v3231 = vsel %vm3108, %v3230, %v3206
        %v3232 = vsel %vm3107, %v3090, %v3229
        %v3233 = vsel %vm3107, 0, %v3231
        %v3234 = vmul.f32 %v3232, %v3232
        %v3235 = vmul.f32 %v3234, -0.001358992
        %v3236 = vadd.f32 %v3235, 0.041655596
        %v3237 = vmul.f32 %v3234, %v3236
        %v3238 = vadd.f32 %v3237, -0.4999988
        %v3239 = vmul.f32 %v3234, %v3238
        %v3240 = vadd.f32 1.0, %v3239
        %v3241 = vmul.f32 %v3232, %v3232
        %v3242 = vmul.f32 %v3241, -0.00019511016
        %v3243 = vadd.f32 %v3242, 0.008332121
        %v3244 = vmul.f32 %v3241, %v3243
        %v3245 = vadd.f32 %v3244, -0.16666654
        %v3246 = vmul.f32 %v3241, %v3245
        %v3247 = vadd.f32 %v3246, 1.0
        %v3248 = vmul.f32 %v3247, %v3232
        %vm3249 = vweird.f32 %v3090
        %v3250 = vadd.s32 %v3233, 3
        %v3251 = vand.u32 %v3250, 3
        %vm3252 = vcmp.lt.s32.totalorder %v3251, 2
        %vm3253 = vcmp.eq.s32.totalorder %v3251, 0
        %v3254 = vxor.u32 %v3248, 2147483648
        %v3255 = vsel %vm3253, %v3240, %v3254
        %vm3256 = vcmp.eq.s32.totalorder %v3251, 2
        %v3257 = vxor.u32 %v3240, 2147483648
        %v3258 = vsel %vm3256, %v3257, %v3248
        %v3259 = vsel %vm3252, %v3255, %v3258
        %v3260 = vsel %vm3249, nan, %v3259
        %v3261 = vand.u32 2147483647, %v3091
        %vm3262 = vcmp.le.f32.partialorder %v3261, 0.7853982
        %vm3263 = vcmp.lt.s32.totalorder %v3091, 0
        %v3264 = vand.u32 %v3091, 2139095040
        %v3265 = vshrl.u32 %v3264, 23
        %v3266 = vsub.s32 %v3265, 127
        %v3267 = vand.u32 2147483647, %v3091
        %v3268 = vand.u32 %v3267, 8388607
        %v3269 = vor.u32 %v3268, 8388608
        %v3270 = vsub.s32 0, %v3269
        %v3271 = vadd.s32 %v3266, 1
        %vm3272 = vcmp.gt.s32.totalorder %v3271, 0
        %v3273 = vsel %vm3272, %v3271, 0
        %v3274 = vshrl.u32 %v3273, 5
        %v3275 = vand.u32 %v3273, 31
        %v3276 = vsub.s32 32, %v3275
        %v3277 = vshrl.u32 683565275, %v3276
        %v3278 = vshll.u32 683565275, %v3275
        %v3279 = vshrl.u32 2475754826, %v3276
        %v3280 = vor.u32 %v3278, %v3279
        %v3281 = vshll.u32 2475754826, %v3275
        %v3282 = vshrl.u32 2131351028, %v3276
        %v3283 = vor.u32 %v3281, %v3282
        %v3284 = vshll.u32 2131351028, %v3275
        %v3285 = vshrl.u32 2102212464, %v3276
        %v3286 = vor.u32 %v3284, %v3285
        %v3287 = vshll.u32 2102212464, %v3275
        %v3288 = vshrl.u32 920167782, %v3276
        %v3289 = vor.u32 %v3287, %v3288
        %v3290 = vshll.u32 920167782, %v3275
        %v3291 = vshrl.u32 1326507024, %v3276
        %v3292 = vor.u32 %v3290, %v3291
        %vm3293 = vcmp.lt.s32.totalorder %v3274, 1
        %vm3294 = vcmp.lt.s32.totalorder %v3274, 2
        %vm3295 = vcmp.lt.s32.totalorder %v3274, 3
        %vm3296 = vcmp.lt.s32.totalorder %v3274, 4
        %v3297 = vsel %vm3293, %v3277, %v3280
        %v3298 = vsel %vm3296, %v3286, 2102212464
        %v3299 = vsel %vm3295, %v3283, %v3298
        %v3300 = vsel %vm3294, %v3297, %v3299
        %v3301 = vsel %vm3293, %v3280, %v3283
        %v3302 = vsel %vm3296, %v3289, 920167782
        %v3303 = vsel %vm3295, %v3286, %v3302
        %v3304 = vsel %vm3294, %v3301, %v3303
        %v3305 = vsel %vm3293, %v3283, %v3286
        %v3306 = vsel %vm3296, %v3292, 1326507024
        %v3307 = vsel %vm3295, %v3289, %v3306
        %v3308 = vsel %vm3294, %v3305, %v3307
        %v3309 = vshll.u32 %v3269, 8
        %v3310 = vand.u32 %v3309, 65535
        %v3311 = vshrl.u32 %v3309, 16
        %v3312 = vand.u32 %v3308, 65535
        %v3313 = vshrl.u32 %v3308, 16
        %v3314 = vmul.u32 %v3310, %v3312
        %v3315 = vmul.u32 %v3310, %v3313
        %v3316 = vmul.u32 %v3311, %v3312
        %v3317 = vmul.u32 %v3311, %v3313
        %v3318 = vshll.u32 %v3315, 16
        %v3319 = vshrl.u32 %v3315, 16
        %v3320 = vshll.u32 %v3316, 16
        %v3321 = vshrl.u32 %v3316, 16
        %vm3322 = vc.u32 %v3314, %v3318
        %v3323 = vsel %vm3322, 1, 0
        %v3324 = vadd.s32 %v3314, %v3318
        %v3325 = vadd.s32 %v3317, %v3323
        %vm3326 = vc.u32 %v3324, %v3320
        %v3327 = vsel %vm3326, 1, 0
        %v3328 = vadd.s32 %v3324, %v3320
        %v3329 = vadd.s32 %v3325, %v3327
        %v3330 = vadd.s32 %v3329, %v3319
        %v3331 = vadd.s32 %v3330, %v3321
        %v3332 = vand.u32 %v3309, 65535
        %v3333 = vshrl.u32 %v3309, 16
        %v3334 = vand.u32 %v3304, 65535
        %v3335 = vshrl.u32 %v3304, 16
        %v3336 = vmul.u32 %v3332, %v3334
        %v3337 = vmul.u32 %v3332, %v3335
        %v3338 = vmul.u32 %v3333, %v3334
        %v3339 = vmul.u32 %v3333, %v3335
        %v3340 = vshll.u32 %v3337, 16
        %v3341 = vshrl.u32 %v3337, 16
        %v3342 = vshll.u32 %v3338, 16
        %v3343 = vshrl.u32 %v3338, 16
        %vm3344 = vc.u32 %v3336, %v3340
        %v3345 = vsel %vm3344, 1, 0
        %v3346 = vadd.s32 %v3336, %v3340
        %v3347 = vadd.s32 %v3339, %v3345
        %vm3348 = vc.u32 %v3346, %v3342
        %v3349 = vsel %vm3348, 1, 0
        %v3350 = vadd.s32 %v3346, %v3342
        %v3351 = vadd.s32 %v3347, %v3349
        %v3352 = vadd.s32 %v3351, %v3341
        %v3353 = vadd.s32 %v3352, %v3343
        %v3354 = vmul.u32 %v3309, %v3300
        %v3355 = vadd.s32 %v3331, %v3350
        %vm3356 = vc.u32 %v3331, %v3350
        %v3357 = vadd.s32 %v3353, 1
        %v3358 = vsel %vm3356, %v3357, %v3353
        %v3359 = vadd.s32 %v3354, %v3358
        %v3360 = vadd.s32 %v3359, 536870912
        %v3361 = vshrl.u32 %v3360, 30
        %v3362 = vshll.u32 %v3361, 30
        %v3363 = vsub.s32 %v3359, %v3362
        %vm3364 = vcmp.lt.s32.totalorder %v3363, 0
        %v3365 = vsub.s32 0, %v3363
        %v3366 = vsel %vm3364, %v3365, %v3363
        %v3367 = vclz %v3366
        %v3368 = vsub.s32 %v3367, 2
        %vm3369 = vcmp.gt.s32.totalorder 0, %v3368
        %v3370 = vsel %vm3369, 0, %v3368
        %v3371 = vsub.s32 32, %v3370
        %v3372 = vshll.u32 %v3363, %v3370
        %v3373 = vshrl.u32 %v3355, %v3371
        %v3374 = vor.u32 %v3372, %v3373
        %v3375 = vsub.s32 4294967266, %v3370
        %v3376 = vadd.s32 %v3375, 127
        %v3377 = vshll.u32 %v3376, 23
        %v3378 = vor.u32 4788187, %v3377
        %v3379 = vand.u32 2147483647, %v3378
        %v3381 = vcvt.s32.f32 %v3374
        %v3382 = vmul.f32 %v3381, %v3379
        %v3383 = vxor.u32 %v3382, 2147483648
        %v3384 = vsel %vm3263, %v3383, %v3382
        %v3385 = vsub.s32 4, %v3361
        %v3386 = vsel %vm3263, %v3385, %v3361
        %v3387 = vsel %vm3262, %v3091, %v3384
        %v3388 = vsel %vm3262, 0, %v3386
        %v3389 = vmul.f32 %v3387, %v3387
        %v3390 = vmul.f32 %v3389, -0.001358992
        %v3391 = vadd.f32 %v3390, 0.041655596
        %v3392 = vmul.f32 %v3389, %v3391
        %v3393 = vadd.f32 %v3392, -0.4999988
        %v3394 = vmul.f32 %v3389, %v3393
        %v3395 = vadd.f32 1.0, %v3394
        %v3396 = vmul.f32 %v3387, %v3387
        %v3397 = vmul.f32 %v3396, -0.00019511016
        %v3398 = vadd.f32 %v3397, 0.008332121
        %v3399 = vmul.f32 %v3396, %v3398
        %v3400 = vadd.f32 %v3399, -0.16666654
        %v3401 = vmul.f32 %v3396, %v3400
        %v3402 = vadd.f32 %v3401, 1.0
        %v3403 = vmul.f32 %v3402, %v3387
        %vm3404 = vweird.f32 %v3091
        %v3405 = vadd.s32 %v3388, 3
        %v3406 = vand.u32 %v3405, 3
        %vm3407 = vcmp.lt.s32.totalorder %v3406, 2
        %vm3408 = vcmp.eq.s32.totalorder %v3406, 0
        %v3409 = vxor.u32 %v3403, 2147483648
        %v3410 = vsel %vm3408, %v3395, %v3409
        %vm3411 = vcmp.eq.s32.totalorder %v3406, 2
        %v3412 = vxor.u32 %v3395, 2147483648
        %v3413 = vsel %vm3411, %v3412, %v3403
        %v3414 = vsel %vm3407, %v3410, %v3413
        %v3415 = vsel %vm3404, nan, %v3414
        %v3416 = vand.u32 2147483647, %v3092
        %vm3417 = vcmp.le.f32.partialorder %v3416, 0.7853982
        %vm3418 = vcmp.lt.s32.totalorder %v3092, 0
        %v3419 = vand.u32 %v3092, 2139095040
        %v3420 = vshrl.u32 %v3419, 23
        %v3421 = vsub.s32 %v3420, 127
        %v3422 = vand.u32 2147483647, %v3092
        %v3423 = vand.u32 %v3422, 8388607
        %v3424 = vor.u32 %v3423, 8388608
        %v3425 = vsub.s32 0, %v3424
        %v3426 = vadd.s32 %v3421, 1
        %vm3427 = vcmp.gt.s32.totalorder %v3426, 0
        %v3428 = vsel %vm3427, %v3426, 0
        %v3429 = vshrl.u32 %v3428, 5
        %v3430 = vand.u32 %v3428, 31
        %v3431 = vsub.s32 32, %v3430
        %v3432 = vshrl.u32 683565275, %v3431
        %v3433 = vshll.u32 683565275, %v3430
        %v3434 = vshrl.u32 2475754826, %v3431
        %v3435 = vor.u32 %v3433, %v3434
        %v3436 = vshll.u32 2475754826, %v3430
        %v3437 = vshrl.u32 2131351028, %v3431
        %v3438 = vor.u32 %v3436, %v3437
        %v3439 = vshll.u32 2131351028, %v3430
        %v3440 = vshrl.u32 2102212464, %v3431
        %v3441 = vor.u32 %v3439, %v3440
        %v3442 = vshll.u32 2102212464, %v3430
        %v3443 = vshrl.u32 920167782, %v3431
        %v3444 = vor.u32 %v3442, %v3443
        %v3445 = vshll.u32 920167782, %v3430
        %v3446 = vshrl.u32 1326507024, %v3431
        %v3447 = vor.u32 %v3445, %v3446
        %vm3448 = vcmp.lt.s32.totalorder %v3429, 1
        %vm3449 = vcmp.lt.s32.totalorder %v3429, 2
        %vm3450 = vcmp.lt.s32.totalorder %v3429, 3
        %vm3451 = vcmp.lt.s32.totalorder %v3429, 4
        %v3452 = vsel %vm3448, %v3432, %v3435
        %v3453 = vsel %vm3451, %v3441, 2102212464
        %v3454 = vsel %vm3450, %v3438, %v3453
        %v3455 = vsel %vm3449, %v3452, %v3454
        %v3456 = vsel %vm3448, %v3435, %v3438
        %v3457 = vsel %vm3451, %v3444, 920167782
        %v3458 = vsel %vm3450, %v3441, %v3457
        %v3459 = vsel %vm3449, %v3456, %v3458
        %v3460 = vsel %vm3448, %v3438, %v3441
        %v3461 = vsel %vm3451, %v3447, 1326507024
        %v3462 = vsel %vm3450, %v3444, %v3461
        %v3463 = vsel %vm3449, %v3460, %v3462
        %v3464 = vshll.u32 %v3424, 8
        %v3465 = vand.u32 %v3464, 65535
        %v3466 = vshrl.u32 %v3464, 16
        %v3467 = vand.u32 %v3463, 65535
        %v3468 = vshrl.u32 %v3463, 16
        %v3469 = vmul.u32 %v3465, %v3467
        %v3470 = vmul.u32 %v3465, %v3468
        %v3471 = vmul.u32 %v3466, %v3467
        %v3472 = vmul.u32 %v3466, %v3468
        %v3473 = vshll.u32 %v3470, 16
        %v3474 = vshrl.u32 %v3470, 16
        %v3475 = vshll.u32 %v3471, 16
        %v3476 = vshrl.u32 %v3471, 16
        %vm3477 = vc.u32 %v3469, %v3473
        %v3478 = vsel %vm3477, 1, 0
        %v3479 = vadd.s32 %v3469, %v3473
        %v3480 = vadd.s32 %v3472, %v3478
        %vm3481 = vc.u32 %v3479, %v3475
        %v3482 = vsel %vm3481, 1, 0
        %v3483 = vadd.s32 %v3479, %v3475
        %v3484 = vadd.s32 %v3480, %v3482
        %v3485 = vadd.s32 %v3484, %v3474
        %v3486 = vadd.s32 %v3485, %v3476
        %v3487 = vand.u32 %v3464, 65535
        %v3488 = vshrl.u32 %v3464, 16
        %v3489 = vand.u32 %v3459, 65535
        %v3490 = vshrl.u32 %v3459, 16
        %v3491 = vmul.u32 %v3487, %v3489
        %v3492 = vmul.u32 %v3487, %v3490
        %v3493 = vmul.u32 %v3488, %v3489
        %v3494 = vmul.u32 %v3488, %v3490
        %v3495 = vshll.u32 %v3492, 16
        %v3496 = vshrl.u32 %v3492, 16
        %v3497 = vshll.u32 %v3493, 16
        %v3498 = vshrl.u32 %v3493, 16
        %vm3499 = vc.u32 %v3491, %v3495
        %v3500 = vsel %vm3499, 1, 0
        %v3501 = vadd.s32 %v3491, %v3495
        %v3502 = vadd.s32 %v3494, %v3500
        %vm3503 = vc.u32 %v3501, %v3497
        %v3504 = vsel %vm3503, 1, 0
        %v3505 = vadd.s32 %v3501, %v3497
        %v3506 = vadd.s32 %v3502, %v3504
        %v3507 = vadd.s32 %v3506, %v3496
        %v3508 = vadd.s32 %v3507, %v3498
        %v3509 = vmul.u32 %v3464, %v3455
        %v3510 = vadd.s32 %v3486, %v3505
        %vm3511 = vc.u32 %v3486, %v3505
        %v3512 = vadd.s32 %v3508, 1
        %v3513 = vsel %vm3511, %v3512, %v3508
        %v3514 = vadd.s32 %v3509, %v3513
        %v3515 = vadd.s32 %v3514, 536870912
        %v3516 = vshrl.u32 %v3515, 30
        %v3517 = vshll.u32 %v3516, 30
        %v3518 = vsub.s32 %v3514, %v3517
        %vm3519 = vcmp.lt.s32.totalorder %v3518, 0
        %v3520 = vsub.s32 0, %v3518
        %v3521 = vsel %vm3519, %v3520, %v3518
        %v3522 = vclz %v3521
        %v3523 = vsub.s32 %v3522, 2
        %vm3524 = vcmp.gt.s32.totalorder 0, %v3523
        %v3525 = vsel %vm3524, 0, %v3523
        %v3526 = vsub.s32 32, %v3525
        %v3527 = vshll.u32 %v3518, %v3525
        %v3528 = vshrl.u32 %v3510, %v3526
        %v3529 = vor.u32 %v3527, %v3528
        %v3530 = vsub.s32 4294967266, %v3525
        %v3531 = vadd.s32 %v3530, 127
        %v3532 = vshll.u32 %v3531, 23
        %v3533 = vor.u32 4788187, %v3532
        %v3534 = vand.u32 2147483647, %v3533
        %v3536 = vcvt.s32.f32 %v3529
        %v3537 = vmul.f32 %v3536, %v3534
        %v3538 = vxor.u32 %v3537, 2147483648
        %v3539 = vsel %vm3418, %v3538, %v3537
        %v3540 = vsub.s32 4, %v3516
        %v3541 = vsel %vm3418, %v3540, %v3516
        %v3542 = vsel %vm3417, %v3092, %v3539
        %v3543 = vsel %vm3417, 0, %v3541
        %v3544 = vmul.f32 %v3542, %v3542
        %v3545 = vmul.f32 %v3544, -0.001358992
        %v3546 = vadd.f32 %v3545, 0.041655596
        %v3547 = vmul.f32 %v3544, %v3546
        %v3548 = vadd.f32 %v3547, -0.4999988
        %v3549 = vmul.f32 %v3544, %v3548
        %v3550 = vadd.f32 1.0, %v3549
        %v3551 = vmul.f32 %v3542, %v3542
        %v3552 = vmul.f32 %v3551, -0.00019511016
        %v3553 = vadd.f32 %v3552, 0.008332121
        %v3554 = vmul.f32 %v3551, %v3553
        %v3555 = vadd.f32 %v3554, -0.16666654
        %v3556 = vmul.f32 %v3551, %v3555
        %v3557 = vadd.f32 %v3556, 1.0
        %v3558 = vmul.f32 %v3557, %v3542
        %vm3559 = vweird.f32 %v3092
        %v3560 = vadd.s32 %v3543, 3
        %v3561 = vand.u32 %v3560, 3
        %vm3562 = vcmp.lt.s32.totalorder %v3561, 2
        %vm3563 = vcmp.eq.s32.totalorder %v3561, 0
        %v3564 = vxor.u32 %v3558, 2147483648
        %v3565 = vsel %vm3563, %v3550, %v3564
        %vm3566 = vcmp.eq.s32.totalorder %v3561, 2
        %v3567 = vxor.u32 %v3550, 2147483648
        %v3568 = vsel %vm3566, %v3567, %v3558
        %v3569 = vsel %vm3562, %v3565, %v3568
        %v3570 = vsel %vm3559, nan, %v3569
        %v3571 = vand.u32 2147483647, %v3093
        %vm3572 = vcmp.le.f32.partialorder %v3571, 0.7853982
        %vm3573 = vcmp.lt.s32.totalorder %v3093, 0
        %v3574 = vand.u32 %v3093, 2139095040
        %v3575 = vshrl.u32 %v3574, 23
        %v3576 = vsub.s32 %v3575, 127
        %v3577 = vand.u32 2147483647, %v3093
        %v3578 = vand.u32 %v3577, 8388607
        %v3579 = vor.u32 %v3578, 8388608
        %v3580 = vsub.s32 0, %v3579
        %v3581 = vadd.s32 %v3576, 1
        %vm3582 = vcmp.gt.s32.totalorder %v3581, 0
        %v3583 = vsel %vm3582, %v3581, 0
        %v3584 = vshrl.u32 %v3583, 5
        %v3585 = vand.u32 %v3583, 31
        %v3586 = vsub.s32 32, %v3585
        %v3587 = vshrl.u32 683565275, %v3586
        %v3588 = vshll.u32 683565275, %v3585
        %v3589 = vshrl.u32 2475754826, %v3586
        %v3590 = vor.u32 %v3588, %v3589
        %v3591 = vshll.u32 2475754826, %v3585
        %v3592 = vshrl.u32 2131351028, %v3586
        %v3593 = vor.u32 %v3591, %v3592
        %v3594 = vshll.u32 2131351028, %v3585
        %v3595 = vshrl.u32 2102212464, %v3586
        %v3596 = vor.u32 %v3594, %v3595
        %v3597 = vshll.u32 2102212464, %v3585
        %v3598 = vshrl.u32 920167782, %v3586
        %v3599 = vor.u32 %v3597, %v3598
        %v3600 = vshll.u32 920167782, %v3585
        %v3601 = vshrl.u32 1326507024, %v3586
        %v3602 = vor.u32 %v3600, %v3601
        %vm3603 = vcmp.lt.s32.totalorder %v3584, 1
        %vm3604 = vcmp.lt.s32.totalorder %v3584, 2
        %vm3605 = vcmp.lt.s32.totalorder %v3584, 3
        %vm3606 = vcmp.lt.s32.totalorder %v3584, 4
        %v3607 = vsel %vm3603, %v3587, %v3590
        %v3608 = vsel %vm3606, %v3596, 2102212464
        %v3609 = vsel %vm3605, %v3593, %v3608
        %v3610 = vsel %vm3604, %v3607, %v3609
        %v3611 = vsel %vm3603, %v3590, %v3593
        %v3612 = vsel %vm3606, %v3599, 920167782
        %v3613 = vsel %vm3605, %v3596, %v3612
        %v3614 = vsel %vm3604, %v3611, %v3613
        %v3615 = vsel %vm3603, %v3593, %v3596
        %v3616 = vsel %vm3606, %v3602, 1326507024
        %v3617 = vsel %vm3605, %v3599, %v3616
        %v3618 = vsel %vm3604, %v3615, %v3617
        %v3619 = vshll.u32 %v3579, 8
        %v3620 = vand.u32 %v3619, 65535
        %v3621 = vshrl.u32 %v3619, 16
        %v3622 = vand.u32 %v3618, 65535
        %v3623 = vshrl.u32 %v3618, 16
        %v3624 = vmul.u32 %v3620, %v3622
        %v3625 = vmul.u32 %v3620, %v3623
        %v3626 = vmul.u32 %v3621, %v3622
        %v3627 = vmul.u32 %v3621, %v3623
        %v3628 = vshll.u32 %v3625, 16
        %v3629 = vshrl.u32 %v3625, 16
        %v3630 = vshll.u32 %v3626, 16
        %v3631 = vshrl.u32 %v3626, 16
        %vm3632 = vc.u32 %v3624, %v3628
        %v3633 = vsel %vm3632, 1, 0
        %v3634 = vadd.s32 %v3624, %v3628
        %v3635 = vadd.s32 %v3627, %v3633
        %vm3636 = vc.u32 %v3634, %v3630
        %v3637 = vsel %vm3636, 1, 0
        %v3638 = vadd.s32 %v3634, %v3630
        %v3639 = vadd.s32 %v3635, %v3637
        %v3640 = vadd.s32 %v3639, %v3629
        %v3641 = vadd.s32 %v3640, %v3631
        %v3642 = vand.u32 %v3619, 65535
        %v3643 = vshrl.u32 %v3619, 16
        %v3644 = vand.u32 %v3614, 65535
        %v3645 = vshrl.u32 %v3614, 16
        %v3646 = vmul.u32 %v3642, %v3644
        %v3647 = vmul.u32 %v3642, %v3645
        %v3648 = vmul.u32 %v3643, %v3644
        %v3649 = vmul.u32 %v3643, %v3645
        %v3650 = vshll.u32 %v3647, 16
        %v3651 = vshrl.u32 %v3647, 16
        %v3652 = vshll.u32 %v3648, 16
        %v3653 = vshrl.u32 %v3648, 16
        %vm3654 = vc.u32 %v3646, %v3650
        %v3655 = vsel %vm3654, 1, 0
        %v3656 = vadd.s32 %v3646, %v3650
        %v3657 = vadd.s32 %v3649, %v3655
        %vm3658 = vc.u32 %v3656, %v3652
        %v3659 = vsel %vm3658, 1, 0
        %v3660 = vadd.s32 %v3656, %v3652
        %v3661 = vadd.s32 %v3657, %v3659
        %v3662 = vadd.s32 %v3661, %v3651
        %v3663 = vadd.s32 %v3662, %v3653
        %v3664 = vmul.u32 %v3619, %v3610
        %v3665 = vadd.s32 %v3641, %v3660
        %vm3666 = vc.u32 %v3641, %v3660
        %v3667 = vadd.s32 %v3663, 1
        %v3668 = vsel %vm3666, %v3667, %v3663
        %v3669 = vadd.s32 %v3664, %v3668
        %v3670 = vadd.s32 %v3669, 536870912
        %v3671 = vshrl.u32 %v3670, 30
        %v3672 = vshll.u32 %v3671, 30
        %v3673 = vsub.s32 %v3669, %v3672
        %vm3674 = vcmp.lt.s32.totalorder %v3673, 0
        %v3675 = vsub.s32 0, %v3673
        %v3676 = vsel %vm3674, %v3675, %v3673
        %v3677 = vclz %v3676
        %v3678 = vsub.s32 %v3677, 2
        %vm3679 = vcmp.gt.s32.totalorder 0, %v3678
        %v3680 = vsel %vm3679, 0, %v3678
        %v3681 = vsub.s32 32, %v3680
        %v3682 = vshll.u32 %v3673, %v3680
        %v3683 = vshrl.u32 %v3665, %v3681
        %v3684 = vor.u32 %v3682, %v3683
        %v3685 = vsub.s32 4294967266, %v3680
        %v3686 = vadd.s32 %v3685, 127
        %v3687 = vshll.u32 %v3686, 23
        %v3688 = vor.u32 4788187, %v3687
        %v3689 = vand.u32 2147483647, %v3688
        %v3691 = vcvt.s32.f32 %v3684
        %v3692 = vmul.f32 %v3691, %v3689
        %v3693 = vxor.u32 %v3692, 2147483648
        %v3694 = vsel %vm3573, %v3693, %v3692
        %v3695 = vsub.s32 4, %v3671
        %v3696 = vsel %vm3573, %v3695, %v3671
        %v3697 = vsel %vm3572, %v3093, %v3694
        %v3698 = vsel %vm3572, 0, %v3696
        %v3699 = vmul.f32 %v3697, %v3697
        %v3700 = vmul.f32 %v3699, -0.001358992
        %v3701 = vadd.f32 %v3700, 0.041655596
        %v3702 = vmul.f32 %v3699, %v3701
        %v3703 = vadd.f32 %v3702, -0.4999988
        %v3704 = vmul.f32 %v3699, %v3703
        %v3705 = vadd.f32 1.0, %v3704
        %v3706 = vmul.f32 %v3697, %v3697
        %v3707 = vmul.f32 %v3706, -0.00019511016
        %v3708 = vadd.f32 %v3707, 0.008332121
        %v3709 = vmul.f32 %v3706, %v3708
        %v3710 = vadd.f32 %v3709, -0.16666654
        %v3711 = vmul.f32 %v3706, %v3710
        %v3712 = vadd.f32 %v3711, 1.0
        %v3713 = vmul.f32 %v3712, %v3697
        %vm3714 = vweird.f32 %v3093
        %v3715 = vadd.s32 %v3698, 3
        %v3716 = vand.u32 %v3715, 3
        %vm3717 = vcmp.lt.s32.totalorder %v3716, 2
        %vm3718 = vcmp.eq.s32.totalorder %v3716, 0
        %v3719 = vxor.u32 %v3713, 2147483648
        %v3720 = vsel %vm3718, %v3705, %v3719
        %vm3721 = vcmp.eq.s32.totalorder %v3716, 2
        %v3722 = vxor.u32 %v3705, 2147483648
        %v3723 = vsel %vm3721, %v3722, %v3713
        %v3724 = vsel %vm3717, %v3720, %v3723
        %v3725 = vsel %vm3714, nan, %v3724
        %v3726 = vand.u32 2147483647, %v3094
        %vm3727 = vcmp.le.f32.partialorder %v3726, 0.7853982
        %vm3728 = vcmp.lt.s32.totalorder %v3094, 0
        %v3729 = vand.u32 %v3094, 2139095040
        %v3730 = vshrl.u32 %v3729, 23
        %v3731 = vsub.s32 %v3730, 127
        %v3732 = vand.u32 2147483647, %v3094
        %v3733 = vand.u32 %v3732, 8388607
        %v3734 = vor.u32 %v3733, 8388608
        %v3735 = vsub.s32 0, %v3734
        %v3736 = vadd.s32 %v3731, 1
        %vm3737 = vcmp.gt.s32.totalorder %v3736, 0
        %v3738 = vsel %vm3737, %v3736, 0
        %v3739 = vshrl.u32 %v3738, 5
        %v3740 = vand.u32 %v3738, 31
        %v3741 = vsub.s32 32, %v3740
        %v3742 = vshrl.u32 683565275, %v3741
        %v3743 = vshll.u32 683565275, %v3740
        %v3744 = vshrl.u32 2475754826, %v3741
        %v3745 = vor.u32 %v3743, %v3744
        %v3746 = vshll.u32 2475754826, %v3740
        %v3747 = vshrl.u32 2131351028, %v3741
        %v3748 = vor.u32 %v3746, %v3747
        %v3749 = vshll.u32 2131351028, %v3740
        %v3750 = vshrl.u32 2102212464, %v3741
        %v3751 = vor.u32 %v3749, %v3750
        %v3752 = vshll.u32 2102212464, %v3740
        %v3753 = vshrl.u32 920167782, %v3741
        %v3754 = vor.u32 %v3752, %v3753
        %v3755 = vshll.u32 920167782, %v3740
        %v3756 = vshrl.u32 1326507024, %v3741
        %v3757 = vor.u32 %v3755, %v3756
        %vm3758 = vcmp.lt.s32.totalorder %v3739, 1
        %vm3759 = vcmp.lt.s32.totalorder %v3739, 2
        %vm3760 = vcmp.lt.s32.totalorder %v3739, 3
        %vm3761 = vcmp.lt.s32.totalorder %v3739, 4
        %v3762 = vsel %vm3758, %v3742, %v3745
        %v3763 = vsel %vm3761, %v3751, 2102212464
        %v3764 = vsel %vm3760, %v3748, %v3763
        %v3765 = vsel %vm3759, %v3762, %v3764
        %v3766 = vsel %vm3758, %v3745, %v3748
        %v3767 = vsel %vm3761, %v3754, 920167782
        %v3768 = vsel %vm3760, %v3751, %v3767
        %v3769 = vsel %vm3759, %v3766, %v3768
        %v3770 = vsel %vm3758, %v3748, %v3751
        %v3771 = vsel %vm3761, %v3757, 1326507024
        %v3772 = vsel %vm3760, %v3754, %v3771
        %v3773 = vsel %vm3759, %v3770, %v3772
        %v3774 = vshll.u32 %v3734, 8
        %v3775 = vand.u32 %v3774, 65535
        %v3776 = vshrl.u32 %v3774, 16
        %v3777 = vand.u32 %v3773, 65535
        %v3778 = vshrl.u32 %v3773, 16
        %v3779 = vmul.u32 %v3775, %v3777
        %v3780 = vmul.u32 %v3775, %v3778
        %v3781 = vmul.u32 %v3776, %v3777
        %v3782 = vmul.u32 %v3776, %v3778
        %v3783 = vshll.u32 %v3780, 16
        %v3784 = vshrl.u32 %v3780, 16
        %v3785 = vshll.u32 %v3781, 16
        %v3786 = vshrl.u32 %v3781, 16
        %vm3787 = vc.u32 %v3779, %v3783
        %v3788 = vsel %vm3787, 1, 0
        %v3789 = vadd.s32 %v3779, %v3783
        %v3790 = vadd.s32 %v3782, %v3788
        %vm3791 = vc.u32 %v3789, %v3785
        %v3792 = vsel %vm3791, 1, 0
        %v3793 = vadd.s32 %v3789, %v3785
        %v3794 = vadd.s32 %v3790, %v3792
        %v3795 = vadd.s32 %v3794, %v3784
        %v3796 = vadd.s32 %v3795, %v3786
        %v3797 = vand.u32 %v3774, 65535
        %v3798 = vshrl.u32 %v3774, 16
        %v3799 = vand.u32 %v3769, 65535
        %v3800 = vshrl.u32 %v3769, 16
        %v3801 = vmul.u32 %v3797, %v3799
        %v3802 = vmul.u32 %v3797, %v3800
        %v3803 = vmul.u32 %v3798, %v3799
        %v3804 = vmul.u32 %v3798, %v3800
        %v3805 = vshll.u32 %v3802, 16
        %v3806 = vshrl.u32 %v3802, 16
        %v3807 = vshll.u32 %v3803, 16
        %v3808 = vshrl.u32 %v3803, 16
        %vm3809 = vc.u32 %v3801, %v3805
        %v3810 = vsel %vm3809, 1, 0
        %v3811 = vadd.s32 %v3801, %v3805
        %v3812 = vadd.s32 %v3804, %v3810
        %vm3813 = vc.u32 %v3811, %v3807
        %v3814 = vsel %vm3813, 1, 0
        %v3815 = vadd.s32 %v3811, %v3807
        %v3816 = vadd.s32 %v3812, %v3814
        %v3817 = vadd.s32 %v3816, %v3806
        %v3818 = vadd.s32 %v3817, %v3808
        %v3819 = vmul.u32 %v3774, %v3765
        %v3820 = vadd.s32 %v3796, %v3815
        %vm3821 = vc.u32 %v3796, %v3815
        %v3822 = vadd.s32 %v3818, 1
        %v3823 = vsel %vm3821, %v3822, %v3818
        %v3824 = vadd.s32 %v3819, %v3823
        %v3825 = vadd.s32 %v3824, 536870912
        %v3826 = vshrl.u32 %v3825, 30
        %v3827 = vshll.u32 %v3826, 30
        %v3828 = vsub.s32 %v3824, %v3827
        %vm3829 = vcmp.lt.s32.totalorder %v3828, 0
        %v3830 = vsub.s32 0, %v3828
        %v3831 = vsel %vm3829, %v3830, %v3828
        %v3832 = vclz %v3831
        %v3833 = vsub.s32 %v3832, 2
        %vm3834 = vcmp.gt.s32.totalorder 0, %v3833
        %v3835 = vsel %vm3834, 0, %v3833
        %v3836 = vsub.s32 32, %v3835
        %v3837 = vshll.u32 %v3828, %v3835
        %v3838 = vshrl.u32 %v3820, %v3836
        %v3839 = vor.u32 %v3837, %v3838
        %v3840 = vsub.s32 4294967266, %v3835
        %v3841 = vadd.s32 %v3840, 127
        %v3842 = vshll.u32 %v3841, 23
        %v3843 = vor.u32 4788187, %v3842
        %v3844 = vand.u32 2147483647, %v3843
        %v3846 = vcvt.s32.f32 %v3839
        %v3847 = vmul.f32 %v3846, %v3844
        %v3848 = vxor.u32 %v3847, 2147483648
        %v3849 = vsel %vm3728, %v3848, %v3847
        %v3850 = vsub.s32 4, %v3826
        %v3851 = vsel %vm3728, %v3850, %v3826
        %v3852 = vsel %vm3727, %v3094, %v3849
        %v3853 = vsel %vm3727, 0, %v3851
        %v3854 = vmul.f32 %v3852, %v3852
        %v3855 = vmul.f32 %v3854, -0.001358992
        %v3856 = vadd.f32 %v3855, 0.041655596
        %v3857 = vmul.f32 %v3854, %v3856
        %v3858 = vadd.f32 %v3857, -0.4999988
        %v3859 = vmul.f32 %v3854, %v3858
        %v3860 = vadd.f32 1.0, %v3859
        %v3861 = vmul.f32 %v3852, %v3852
        %v3862 = vmul.f32 %v3861, -0.00019511016
        %v3863 = vadd.f32 %v3862, 0.008332121
        %v3864 = vmul.f32 %v3861, %v3863
        %v3865 = vadd.f32 %v3864, -0.16666654
        %v3866 = vmul.f32 %v3861, %v3865
        %v3867 = vadd.f32 %v3866, 1.0
        %v3868 = vmul.f32 %v3867, %v3852
        %vm3869 = vweird.f32 %v3094
        %v3870 = vadd.s32 %v3853, 3
        %v3871 = vand.u32 %v3870, 3
        %vm3872 = vcmp.lt.s32.totalorder %v3871, 2
        %vm3873 = vcmp.eq.s32.totalorder %v3871, 0
        %v3874 = vxor.u32 %v3868, 2147483648
        %v3875 = vsel %vm3873, %v3860, %v3874
        %vm3876 = vcmp.eq.s32.totalorder %v3871, 2
        %v3877 = vxor.u32 %v3860, 2147483648
        %v3878 = vsel %vm3876, %v3877, %v3868
        %v3879 = vsel %vm3872, %v3875, %v3878
        %v3880 = vsel %vm3869, nan, %v3879
        %v3881 = vand.u32 2147483647, %v3095
        %vm3882 = vcmp.le.f32.partialorder %v3881, 0.7853982
        %vm3883 = vcmp.lt.s32.totalorder %v3095, 0
        %v3884 = vand.u32 %v3095, 2139095040
        %v3885 = vshrl.u32 %v3884, 23
        %v3886 = vsub.s32 %v3885, 127
        %v3887 = vand.u32 2147483647, %v3095
        %v3888 = vand.u32 %v3887, 8388607
        %v3889 = vor.u32 %v3888, 8388608
        %v3890 = vsub.s32 0, %v3889
        %v3891 = vadd.s32 %v3886, 1
        %vm3892 = vcmp.gt.s32.totalorder %v3891, 0
        %v3893 = vsel %vm3892, %v3891, 0
        %v3894 = vshrl.u32 %v3893, 5
        %v3895 = vand.u32 %v3893, 31
        %v3896 = vsub.s32 32, %v3895
        %v3897 = vshrl.u32 683565275, %v3896
        %v3898 = vshll.u32 683565275, %v3895
        %v3899 = vshrl.u32 2475754826, %v3896
        %v3900 = vor.u32 %v3898, %v3899
        %v3901 = vshll.u32 2475754826, %v3895
        %v3902 = vshrl.u32 2131351028, %v3896
        %v3903 = vor.u32 %v3901, %v3902
        %v3904 = vshll.u32 2131351028, %v3895
        %v3905 = vshrl.u32 2102212464, %v3896
        %v3906 = vor.u32 %v3904, %v3905
        %v3907 = vshll.u32 2102212464, %v3895
        %v3908 = vshrl.u32 920167782, %v3896
        %v3909 = vor.u32 %v3907, %v3908
        %v3910 = vshll.u32 920167782, %v3895
        %v3911 = vshrl.u32 1326507024, %v3896
        %v3912 = vor.u32 %v3910, %v3911
        %vm3913 = vcmp.lt.s32.totalorder %v3894, 1
        %vm3914 = vcmp.lt.s32.totalorder %v3894, 2
        %vm3915 = vcmp.lt.s32.totalorder %v3894, 3
        %vm3916 = vcmp.lt.s32.totalorder %v3894, 4
        %v3917 = vsel %vm3913, %v3897, %v3900
        %v3918 = vsel %vm3916, %v3906, 2102212464
        %v3919 = vsel %vm3915, %v3903, %v3918
        %v3920 = vsel %vm3914, %v3917, %v3919
        %v3921 = vsel %vm3913, %v3900, %v3903
        %v3922 = vsel %vm3916, %v3909, 920167782
        %v3923 = vsel %vm3915, %v3906, %v3922
        %v3924 = vsel %vm3914, %v3921, %v3923
        %v3925 = vsel %vm3913, %v3903, %v3906
        %v3926 = vsel %vm3916, %v3912, 1326507024
        %v3927 = vsel %vm3915, %v3909, %v3926
        %v3928 = vsel %vm3914, %v3925, %v3927
        %v3929 = vshll.u32 %v3889, 8
        %v3930 = vand.u32 %v3929, 65535
        %v3931 = vshrl.u32 %v3929, 16
        %v3932 = vand.u32 %v3928, 65535
        %v3933 = vshrl.u32 %v3928, 16
        %v3934 = vmul.u32 %v3930, %v3932
        %v3935 = vmul.u32 %v3930, %v3933
        %v3936 = vmul.u32 %v3931, %v3932
        %v3937 = vmul.u32 %v3931, %v3933
        %v3938 = vshll.u32 %v3935, 16
        %v3939 = vshrl.u32 %v3935, 16
        %v3940 = vshll.u32 %v3936, 16
        %v3941 = vshrl.u32 %v3936, 16
        %vm3942 = vc.u32 %v3934, %v3938
        %v3943 = vsel %vm3942, 1, 0
        %v3944 = vadd.s32 %v3934, %v3938
        %v3945 = vadd.s32 %v3937, %v3943
        %vm3946 = vc.u32 %v3944, %v3940
        %v3947 = vsel %vm3946, 1, 0
        %v3948 = vadd.s32 %v3944, %v3940
        %v3949 = vadd.s32 %v3945, %v3947
        %v3950 = vadd.s32 %v3949, %v3939
        %v3951 = vadd.s32 %v3950, %v3941
        %v3952 = vand.u32 %v3929, 65535
        %v3953 = vshrl.u32 %v3929, 16
        %v3954 = vand.u32 %v3924, 65535
        %v3955 = vshrl.u32 %v3924, 16
        %v3956 = vmul.u32 %v3952, %v3954
        %v3957 = vmul.u32 %v3952, %v3955
        %v3958 = vmul.u32 %v3953, %v3954
        %v3959 = vmul.u32 %v3953, %v3955
        %v3960 = vshll.u32 %v3957, 16
        %v3961 = vshrl.u32 %v3957, 16
        %v3962 = vshll.u32 %v3958, 16
        %v3963 = vshrl.u32 %v3958, 16
        %vm3964 = vc.u32 %v3956, %v3960
        %v3965 = vsel %vm3964, 1, 0
        %v3966 = vadd.s32 %v3956, %v3960
        %v3967 = vadd.s32 %v3959, %v3965
        %vm3968 = vc.u32 %v3966, %v3962
        %v3969 = vsel %vm3968, 1, 0
        %v3970 = vadd.s32 %v3966, %v3962
        %v3971 = vadd.s32 %v3967, %v3969
        %v3972 = vadd.s32 %v3971, %v3961
        %v3973 = vadd.s32 %v3972, %v3963
        %v3974 = vmul.u32 %v3929, %v3920
        %v3975 = vadd.s32 %v3951, %v3970
        %vm3976 = vc.u32 %v3951, %v3970
        %v3977 = vadd.s32 %v3973, 1
        %v3978 = vsel %vm3976, %v3977, %v3973
        %v3979 = vadd.s32 %v3974, %v3978
        %v3980 = vadd.s32 %v3979, 536870912
        %v3981 = vshrl.u32 %v3980, 30
        %v3982 = vshll.u32 %v3981, 30
        %v3983 = vsub.s32 %v3979, %v3982
        %vm3984 = vcmp.lt.s32.totalorder %v3983, 0
        %v3985 = vsub.s32 0, %v3983
        %v3986 = vsel %vm3984, %v3985, %v3983
        %v3987 = vclz %v3986
        %v3988 = vsub.s32 %v3987, 2
        %vm3989 = vcmp.gt.s32.totalorder 0, %v3988
        %v3990 = vsel %vm3989, 0, %v3988
        %v3991 = vsub.s32 32, %v3990
        %v3992 = vshll.u32 %v3983, %v3990
        %v3993 = vshrl.u32 %v3975, %v3991
        %v3994 = vor.u32 %v3992, %v3993
        %v3995 = vsub.s32 4294967266, %v3990
        %v3996 = vadd.s32 %v3995, 127
        %v3997 = vshll.u32 %v3996, 23
        %v3998 = vor.u32 4788187, %v3997
        %v3999 = vand.u32 2147483647, %v3998
        %v4001 = vcvt.s32.f32 %v3994
        %v4002 = vmul.f32 %v4001, %v3999
        %v4003 = vxor.u32 %v4002, 2147483648
        %v4004 = vsel %vm3883, %v4003, %v4002
        %v4005 = vsub.s32 4, %v3981
        %v4006 = vsel %vm3883, %v4005, %v3981
        %v4007 = vsel %vm3882, %v3095, %v4004
        %v4008 = vsel %vm3882, 0, %v4006
        %v4009 = vmul.f32 %v4007, %v4007
        %v4010 = vmul.f32 %v4009, -0.001358992
        %v4011 = vadd.f32 %v4010, 0.041655596
        %v4012 = vmul.f32 %v4009, %v4011
        %v4013 = vadd.f32 %v4012, -0.4999988
        %v4014 = vmul.f32 %v4009, %v4013
        %v4015 = vadd.f32 1.0, %v4014
        %v4016 = vmul.f32 %v4007, %v4007
        %v4017 = vmul.f32 %v4016, -0.00019511016
        %v4018 = vadd.f32 %v4017, 0.008332121
        %v4019 = vmul.f32 %v4016, %v4018
        %v4020 = vadd.f32 %v4019, -0.16666654
        %v4021 = vmul.f32 %v4016, %v4020
        %v4022 = vadd.f32 %v4021, 1.0
        %v4023 = vmul.f32 %v4022, %v4007
        %vm4024 = vweird.f32 %v3095
        %v4025 = vadd.s32 %v4008, 3
        %v4026 = vand.u32 %v4025, 3
        %vm4027 = vcmp.lt.s32.totalorder %v4026, 2
        %vm4028 = vcmp.eq.s32.totalorder %v4026, 0
        %v4029 = vxor.u32 %v4023, 2147483648
        %v4030 = vsel %vm4028, %v4015, %v4029
        %vm4031 = vcmp.eq.s32.totalorder %v4026, 2
        %v4032 = vxor.u32 %v4015, 2147483648
        %v4033 = vsel %vm4031, %v4032, %v4023
        %v4034 = vsel %vm4027, %v4030, %v4033
        %v4035 = vsel %vm4024, nan, %v4034
        %v4036 = vand.u32 2147483647, %v3096
        %vm4037 = vcmp.le.f32.partialorder %v4036, 0.7853982
        %vm4038 = vcmp.lt.s32.totalorder %v3096, 0
        %v4039 = vand.u32 %v3096, 2139095040
        %v4040 = vshrl.u32 %v4039, 23
        %v4041 = vsub.s32 %v4040, 127
        %v4042 = vand.u32 2147483647, %v3096
        %v4043 = vand.u32 %v4042, 8388607
        %v4044 = vor.u32 %v4043, 8388608
        %v4045 = vsub.s32 0, %v4044
        %v4046 = vadd.s32 %v4041, 1
        %vm4047 = vcmp.gt.s32.totalorder %v4046, 0
        %v4048 = vsel %vm4047, %v4046, 0
        %v4049 = vshrl.u32 %v4048, 5
        %v4050 = vand.u32 %v4048, 31
        %v4051 = vsub.s32 32, %v4050
        %v4052 = vshrl.u32 683565275, %v4051
        %v4053 = vshll.u32 683565275, %v4050
        %v4054 = vshrl.u32 2475754826, %v4051
        %v4055 = vor.u32 %v4053, %v4054
        %v4056 = vshll.u32 2475754826, %v4050
        %v4057 = vshrl.u32 2131351028, %v4051
        %v4058 = vor.u32 %v4056, %v4057
        %v4059 = vshll.u32 2131351028, %v4050
        %v4060 = vshrl.u32 2102212464, %v4051
        %v4061 = vor.u32 %v4059, %v4060
        %v4062 = vshll.u32 2102212464, %v4050
        %v4063 = vshrl.u32 920167782, %v4051
        %v4064 = vor.u32 %v4062, %v4063
        %v4065 = vshll.u32 920167782, %v4050
        %v4066 = vshrl.u32 1326507024, %v4051
        %v4067 = vor.u32 %v4065, %v4066
        %vm4068 = vcmp.lt.s32.totalorder %v4049, 1
        %vm4069 = vcmp.lt.s32.totalorder %v4049, 2
        %vm4070 = vcmp.lt.s32.totalorder %v4049, 3
        %vm4071 = vcmp.lt.s32.totalorder %v4049, 4
        %v4072 = vsel %vm4068, %v4052, %v4055
        %v4073 = vsel %vm4071, %v4061, 2102212464
        %v4074 = vsel %vm4070, %v4058, %v4073
        %v4075 = vsel %vm4069, %v4072, %v4074
        %v4076 = vsel %vm4068, %v4055, %v4058
        %v4077 = vsel %vm4071, %v4064, 920167782
        %v4078 = vsel %vm4070, %v4061, %v4077
        %v4079 = vsel %vm4069, %v4076, %v4078
        %v4080 = vsel %vm4068, %v4058, %v4061
        %v4081 = vsel %vm4071, %v4067, 1326507024
        %v4082 = vsel %vm4070, %v4064, %v4081
        %v4083 = vsel %vm4069, %v4080, %v4082
        %v4084 = vshll.u32 %v4044, 8
        %v4085 = vand.u32 %v4084, 65535
        %v4086 = vshrl.u32 %v4084, 16
        %v4087 = vand.u32 %v4083, 65535
        %v4088 = vshrl.u32 %v4083, 16
        %v4089 = vmul.u32 %v4085, %v4087
        %v4090 = vmul.u32 %v4085, %v4088
        %v4091 = vmul.u32 %v4086, %v4087
        %v4092 = vmul.u32 %v4086, %v4088
        %v4093 = vshll.u32 %v4090, 16
        %v4094 = vshrl.u32 %v4090, 16
        %v4095 = vshll.u32 %v4091, 16
        %v4096 = vshrl.u32 %v4091, 16
        %vm4097 = vc.u32 %v4089, %v4093
        %v4098 = vsel %vm4097, 1, 0
        %v4099 = vadd.s32 %v4089, %v4093
        %v4100 = vadd.s32 %v4092, %v4098
        %vm4101 = vc.u32 %v4099, %v4095
        %v4102 = vsel %vm4101, 1, 0
        %v4103 = vadd.s32 %v4099, %v4095
        %v4104 = vadd.s32 %v4100, %v4102
        %v4105 = vadd.s32 %v4104, %v4094
        %v4106 = vadd.s32 %v4105, %v4096
        %v4107 = vand.u32 %v4084, 65535
        %v4108 = vshrl.u32 %v4084, 16
        %v4109 = vand.u32 %v4079, 65535
        %v4110 = vshrl.u32 %v4079, 16
        %v4111 = vmul.u32 %v4107, %v4109
        %v4112 = vmul.u32 %v4107, %v4110
        %v4113 = vmul.u32 %v4108, %v4109
        %v4114 = vmul.u32 %v4108, %v4110
        %v4115 = vshll.u32 %v4112, 16
        %v4116 = vshrl.u32 %v4112, 16
        %v4117 = vshll.u32 %v4113, 16
        %v4118 = vshrl.u32 %v4113, 16
        %vm4119 = vc.u32 %v4111, %v4115
        %v4120 = vsel %vm4119, 1, 0
        %v4121 = vadd.s32 %v4111, %v4115
        %v4122 = vadd.s32 %v4114, %v4120
        %vm4123 = vc.u32 %v4121, %v4117
        %v4124 = vsel %vm4123, 1, 0
        %v4125 = vadd.s32 %v4121, %v4117
        %v4126 = vadd.s32 %v4122, %v4124
        %v4127 = vadd.s32 %v4126, %v4116
        %v4128 = vadd.s32 %v4127, %v4118
        %v4129 = vmul.u32 %v4084, %v4075
        %v4130 = vadd.s32 %v4106, %v4125
        %vm4131 = vc.u32 %v4106, %v4125
        %v4132 = vadd.s32 %v4128, 1
        %v4133 = vsel %vm4131, %v4132, %v4128
        %v4134 = vadd.s32 %v4129, %v4133
        %v4135 = vadd.s32 %v4134, 536870912
        %v4136 = vshrl.u32 %v4135, 30
        %v4137 = vshll.u32 %v4136, 30
        %v4138 = vsub.s32 %v4134, %v4137
        %vm4139 = vcmp.lt.s32.totalorder %v4138, 0
        %v4140 = vsub.s32 0, %v4138
        %v4141 = vsel %vm4139, %v4140, %v4138
        %v4142 = vclz %v4141
        %v4143 = vsub.s32 %v4142, 2
        %vm4144 = vcmp.gt.s32.totalorder 0, %v4143
        %v4145 = vsel %vm4144, 0, %v4143
        %v4146 = vsub.s32 32, %v4145
        %v4147 = vshll.u32 %v4138, %v4145
        %v4148 = vshrl.u32 %v4130, %v4146
        %v4149 = vor.u32 %v4147, %v4148
        %v4150 = vsub.s32 4294967266, %v4145
        %v4151 = vadd.s32 %v4150, 127
        %v4152 = vshll.u32 %v4151, 23
        %v4153 = vor.u32 4788187, %v4152
        %v4154 = vand.u32 2147483647, %v4153
        %v4156 = vcvt.s32.f32 %v4149
        %v4157 = vmul.f32 %v4156, %v4154
        %v4158 = vxor.u32 %v4157, 2147483648
        %v4159 = vsel %vm4038, %v4158, %v4157
        %v4160 = vsub.s32 4, %v4136
        %v4161 = vsel %vm4038, %v4160, %v4136
        %v4162 = vsel %vm4037, %v3096, %v4159
        %v4163 = vsel %vm4037, 0, %v4161
        %v4164 = vmul.f32 %v4162, %v4162
        %v4165 = vmul.f32 %v4164, -0.001358992
        %v4166 = vadd.f32 %v4165, 0.041655596
        %v4167 = vmul.f32 %v4164, %v4166
        %v4168 = vadd.f32 %v4167, -0.4999988
        %v4169 = vmul.f32 %v4164, %v4168
        %v4170 = vadd.f32 1.0, %v4169
        %v4171 = vmul.f32 %v4162, %v4162
        %v4172 = vmul.f32 %v4171, -0.00019511016
        %v4173 = vadd.f32 %v4172, 0.008332121
        %v4174 = vmul.f32 %v4171, %v4173
        %v4175 = vadd.f32 %v4174, -0.16666654
        %v4176 = vmul.f32 %v4171, %v4175
        %v4177 = vadd.f32 %v4176, 1.0
        %v4178 = vmul.f32 %v4177, %v4162
        %vm4179 = vweird.f32 %v3096
        %v4180 = vadd.s32 %v4163, 3
        %v4181 = vand.u32 %v4180, 3
        %vm4182 = vcmp.lt.s32.totalorder %v4181, 2
        %vm4183 = vcmp.eq.s32.totalorder %v4181, 0
        %v4184 = vxor.u32 %v4178, 2147483648
        %v4185 = vsel %vm4183, %v4170, %v4184
        %vm4186 = vcmp.eq.s32.totalorder %v4181, 2
        %v4187 = vxor.u32 %v4170, 2147483648
        %v4188 = vsel %vm4186, %v4187, %v4178
        %v4189 = vsel %vm4182, %v4185, %v4188
        %v4190 = vsel %vm4179, nan, %v4189
        %v4191 = vand.u32 2147483647, %v3097
        %vm4192 = vcmp.le.f32.partialorder %v4191, 0.7853982
        %vm4193 = vcmp.lt.s32.totalorder %v3097, 0
        %v4194 = vand.u32 %v3097, 2139095040
        %v4195 = vshrl.u32 %v4194, 23
        %v4196 = vsub.s32 %v4195, 127
        %v4197 = vand.u32 2147483647, %v3097
        %v4198 = vand.u32 %v4197, 8388607
        %v4199 = vor.u32 %v4198, 8388608
        %v4200 = vsub.s32 0, %v4199
        %v4201 = vadd.s32 %v4196, 1
        %vm4202 = vcmp.gt.s32.totalorder %v4201, 0
        %v4203 = vsel %vm4202, %v4201, 0
        %v4204 = vshrl.u32 %v4203, 5
        %v4205 = vand.u32 %v4203, 31
        %v4206 = vsub.s32 32, %v4205
        %v4207 = vshrl.u32 683565275, %v4206
        %v4208 = vshll.u32 683565275, %v4205
        %v4209 = vshrl.u32 2475754826, %v4206
        %v4210 = vor.u32 %v4208, %v4209
        %v4211 = vshll.u32 2475754826, %v4205
        %v4212 = vshrl.u32 2131351028, %v4206
        %v4213 = vor.u32 %v4211, %v4212
        %v4214 = vshll.u32 2131351028, %v4205
        %v4215 = vshrl.u32 2102212464, %v4206
        %v4216 = vor.u32 %v4214, %v4215
        %v4217 = vshll.u32 2102212464, %v4205
        %v4218 = vshrl.u32 920167782, %v4206
        %v4219 = vor.u32 %v4217, %v4218
        %v4220 = vshll.u32 920167782, %v4205
        %v4221 = vshrl.u32 1326507024, %v4206
        %v4222 = vor.u32 %v4220, %v4221
        %vm4223 = vcmp.lt.s32.totalorder %v4204, 1
        %vm4224 = vcmp.lt.s32.totalorder %v4204, 2
        %vm4225 = vcmp.lt.s32.totalorder %v4204, 3
        %vm4226 = vcmp.lt.s32.totalorder %v4204, 4
        %v4227 = vsel %vm4223, %v4207, %v4210
        %v4228 = vsel %vm4226, %v4216, 2102212464
        %v4229 = vsel %vm4225, %v4213, %v4228
        %v4230 = vsel %vm4224, %v4227, %v4229
        %v4231 = vsel %vm4223, %v4210, %v4213
        %v4232 = vsel %vm4226, %v4219, 920167782
        %v4233 = vsel %vm4225, %v4216, %v4232
        %v4234 = vsel %vm4224, %v4231, %v4233
        %v4235 = vsel %vm4223, %v4213, %v4216
        %v4236 = vsel %vm4226, %v4222, 1326507024
        %v4237 = vsel %vm4225, %v4219, %v4236
        %v4238 = vsel %vm4224, %v4235, %v4237
        %v4239 = vshll.u32 %v4199, 8
        %v4240 = vand.u32 %v4239, 65535
        %v4241 = vshrl.u32 %v4239, 16
        %v4242 = vand.u32 %v4238, 65535
        %v4243 = vshrl.u32 %v4238, 16
        %v4244 = vmul.u32 %v4240, %v4242
        %v4245 = vmul.u32 %v4240, %v4243
        %v4246 = vmul.u32 %v4241, %v4242
        %v4247 = vmul.u32 %v4241, %v4243
        %v4248 = vshll.u32 %v4245, 16
        %v4249 = vshrl.u32 %v4245, 16
        %v4250 = vshll.u32 %v4246, 16
        %v4251 = vshrl.u32 %v4246, 16
        %vm4252 = vc.u32 %v4244, %v4248
        %v4253 = vsel %vm4252, 1, 0
        %v4254 = vadd.s32 %v4244, %v4248
        %v4255 = vadd.s32 %v4247, %v4253
        %vm4256 = vc.u32 %v4254, %v4250
        %v4257 = vsel %vm4256, 1, 0
        %v4258 = vadd.s32 %v4254, %v4250
        %v4259 = vadd.s32 %v4255, %v4257
        %v4260 = vadd.s32 %v4259, %v4249
        %v4261 = vadd.s32 %v4260, %v4251
        %v4262 = vand.u32 %v4239, 65535
        %v4263 = vshrl.u32 %v4239, 16
        %v4264 = vand.u32 %v4234, 65535
        %v4265 = vshrl.u32 %v4234, 16
        %v4266 = vmul.u32 %v4262, %v4264
        %v4267 = vmul.u32 %v4262, %v4265
        %v4268 = vmul.u32 %v4263, %v4264
        %v4269 = vmul.u32 %v4263, %v4265
        %v4270 = vshll.u32 %v4267, 16
        %v4271 = vshrl.u32 %v4267, 16
        %v4272 = vshll.u32 %v4268, 16
        %v4273 = vshrl.u32 %v4268, 16
        %vm4274 = vc.u32 %v4266, %v4270
        %v4275 = vsel %vm4274, 1, 0
        %v4276 = vadd.s32 %v4266, %v4270
        %v4277 = vadd.s32 %v4269, %v4275
        %vm4278 = vc.u32 %v4276, %v4272
        %v4279 = vsel %vm4278, 1, 0
        %v4280 = vadd.s32 %v4276, %v4272
        %v4281 = vadd.s32 %v4277, %v4279
        %v4282 = vadd.s32 %v4281, %v4271
        %v4283 = vadd.s32 %v4282, %v4273
        %v4284 = vmul.u32 %v4239, %v4230
        %v4285 = vadd.s32 %v4261, %v4280
        %vm4286 = vc.u32 %v4261, %v4280
        %v4287 = vadd.s32 %v4283, 1
        %v4288 = vsel %vm4286, %v4287, %v4283
        %v4289 = vadd.s32 %v4284, %v4288
        %v4290 = vadd.s32 %v4289, 536870912
        %v4291 = vshrl.u32 %v4290, 30
        %v4292 = vshll.u32 %v4291, 30
        %v4293 = vsub.s32 %v4289, %v4292
        %vm4294 = vcmp.lt.s32.totalorder %v4293, 0
        %v4295 = vsub.s32 0, %v4293
        %v4296 = vsel %vm4294, %v4295, %v4293
        %v4297 = vclz %v4296
        %v4298 = vsub.s32 %v4297, 2
        %vm4299 = vcmp.gt.s32.totalorder 0, %v4298
        %v4300 = vsel %vm4299, 0, %v4298
        %v4301 = vsub.s32 32, %v4300
        %v4302 = vshll.u32 %v4293, %v4300
        %v4303 = vshrl.u32 %v4285, %v4301
        %v4304 = vor.u32 %v4302, %v4303
        %v4305 = vsub.s32 4294967266, %v4300
        %v4306 = vadd.s32 %v4305, 127
        %v4307 = vshll.u32 %v4306, 23
        %v4308 = vor.u32 4788187, %v4307
        %v4309 = vand.u32 2147483647, %v4308
        %v4311 = vcvt.s32.f32 %v4304
        %v4312 = vmul.f32 %v4311, %v4309
        %v4313 = vxor.u32 %v4312, 2147483648
        %v4314 = vsel %vm4193, %v4313, %v4312
        %v4315 = vsub.s32 4, %v4291
        %v4316 = vsel %vm4193, %v4315, %v4291
        %v4317 = vsel %vm4192, %v3097, %v4314
        %v4318 = vsel %vm4192, 0, %v4316
        %v4319 = vmul.f32 %v4317, %v4317
        %v4320 = vmul.f32 %v4319, -0.001358992
        %v4321 = vadd.f32 %v4320, 0.041655596
        %v4322 = vmul.f32 %v4319, %v4321
        %v4323 = vadd.f32 %v4322, -0.4999988
        %v4324 = vmul.f32 %v4319, %v4323
        %v4325 = vadd.f32 1.0, %v4324
        %v4326 = vmul.f32 %v4317, %v4317
        %v4327 = vmul.f32 %v4326, -0.00019511016
        %v4328 = vadd.f32 %v4327, 0.008332121
        %v4329 = vmul.f32 %v4326, %v4328
        %v4330 = vadd.f32 %v4329, -0.16666654
        %v4331 = vmul.f32 %v4326, %v4330
        %v4332 = vadd.f32 %v4331, 1.0
        %v4333 = vmul.f32 %v4332, %v4317
        %vm4334 = vweird.f32 %v3097
        %v4335 = vadd.s32 %v4318, 3
        %v4336 = vand.u32 %v4335, 3
        %vm4337 = vcmp.lt.s32.totalorder %v4336, 2
        %vm4338 = vcmp.eq.s32.totalorder %v4336, 0
        %v4339 = vxor.u32 %v4333, 2147483648
        %v4340 = vsel %vm4338, %v4325, %v4339
        %vm4341 = vcmp.eq.s32.totalorder %v4336, 2
        %v4342 = vxor.u32 %v4325, 2147483648
        %v4343 = vsel %vm4341, %v4342, %v4333
        %v4344 = vsel %vm4337, %v4340, %v4343
        %v4345 = vsel %vm4334, nan, %v4344
        %v4346 = vand.u32 2147483647, %v3098
        %vm4347 = vcmp.le.f32.partialorder %v4346, 0.7853982
        %vm4348 = vcmp.lt.s32.totalorder %v3098, 0
        %v4349 = vand.u32 %v3098, 2139095040
        %v4350 = vshrl.u32 %v4349, 23
        %v4351 = vsub.s32 %v4350, 127
        %v4352 = vand.u32 2147483647, %v3098
        %v4353 = vand.u32 %v4352, 8388607
        %v4354 = vor.u32 %v4353, 8388608
        %v4355 = vsub.s32 0, %v4354
        %v4356 = vadd.s32 %v4351, 1
        %vm4357 = vcmp.gt.s32.totalorder %v4356, 0
        %v4358 = vsel %vm4357, %v4356, 0
        %v4359 = vshrl.u32 %v4358, 5
        %v4360 = vand.u32 %v4358, 31
        %v4361 = vsub.s32 32, %v4360
        %v4362 = vshrl.u32 683565275, %v4361
        %v4363 = vshll.u32 683565275, %v4360
        %v4364 = vshrl.u32 2475754826, %v4361
        %v4365 = vor.u32 %v4363, %v4364
        %v4366 = vshll.u32 2475754826, %v4360
        %v4367 = vshrl.u32 2131351028, %v4361
        %v4368 = vor.u32 %v4366, %v4367
        %v4369 = vshll.u32 2131351028, %v4360
        %v4370 = vshrl.u32 2102212464, %v4361
        %v4371 = vor.u32 %v4369, %v4370
        %v4372 = vshll.u32 2102212464, %v4360
        %v4373 = vshrl.u32 920167782, %v4361
        %v4374 = vor.u32 %v4372, %v4373
        %v4375 = vshll.u32 920167782, %v4360
        %v4376 = vshrl.u32 1326507024, %v4361
        %v4377 = vor.u32 %v4375, %v4376
        %vm4378 = vcmp.lt.s32.totalorder %v4359, 1
        %vm4379 = vcmp.lt.s32.totalorder %v4359, 2
        %vm4380 = vcmp.lt.s32.totalorder %v4359, 3
        %vm4381 = vcmp.lt.s32.totalorder %v4359, 4
        %v4382 = vsel %vm4378, %v4362, %v4365
        %v4383 = vsel %vm4381, %v4371, 2102212464
        %v4384 = vsel %vm4380, %v4368, %v4383
        %v4385 = vsel %vm4379, %v4382, %v4384
        %v4386 = vsel %vm4378, %v4365, %v4368
        %v4387 = vsel %vm4381, %v4374, 920167782
        %v4388 = vsel %vm4380, %v4371, %v4387
        %v4389 = vsel %vm4379, %v4386, %v4388
        %v4390 = vsel %vm4378, %v4368, %v4371
        %v4391 = vsel %vm4381, %v4377, 1326507024
        %v4392 = vsel %vm4380, %v4374, %v4391
        %v4393 = vsel %vm4379, %v4390, %v4392
        %v4394 = vshll.u32 %v4354, 8
        %v4395 = vand.u32 %v4394, 65535
        %v4396 = vshrl.u32 %v4394, 16
        %v4397 = vand.u32 %v4393, 65535
        %v4398 = vshrl.u32 %v4393, 16
        %v4399 = vmul.u32 %v4395, %v4397
        %v4400 = vmul.u32 %v4395, %v4398
        %v4401 = vmul.u32 %v4396, %v4397
        %v4402 = vmul.u32 %v4396, %v4398
        %v4403 = vshll.u32 %v4400, 16
        %v4404 = vshrl.u32 %v4400, 16
        %v4405 = vshll.u32 %v4401, 16
        %v4406 = vshrl.u32 %v4401, 16
        %vm4407 = vc.u32 %v4399, %v4403
        %v4408 = vsel %vm4407, 1, 0
        %v4409 = vadd.s32 %v4399, %v4403
        %v4410 = vadd.s32 %v4402, %v4408
        %vm4411 = vc.u32 %v4409, %v4405
        %v4412 = vsel %vm4411, 1, 0
        %v4413 = vadd.s32 %v4409, %v4405
        %v4414 = vadd.s32 %v4410, %v4412
        %v4415 = vadd.s32 %v4414, %v4404
        %v4416 = vadd.s32 %v4415, %v4406
        %v4417 = vand.u32 %v4394, 65535
        %v4418 = vshrl.u32 %v4394, 16
        %v4419 = vand.u32 %v4389, 65535
        %v4420 = vshrl.u32 %v4389, 16
        %v4421 = vmul.u32 %v4417, %v4419
        %v4422 = vmul.u32 %v4417, %v4420
        %v4423 = vmul.u32 %v4418, %v4419
        %v4424 = vmul.u32 %v4418, %v4420
        %v4425 = vshll.u32 %v4422, 16
        %v4426 = vshrl.u32 %v4422, 16
        %v4427 = vshll.u32 %v4423, 16
        %v4428 = vshrl.u32 %v4423, 16
        %vm4429 = vc.u32 %v4421, %v4425
        %v4430 = vsel %vm4429, 1, 0
        %v4431 = vadd.s32 %v4421, %v4425
        %v4432 = vadd.s32 %v4424, %v4430
        %vm4433 = vc.u32 %v4431, %v4427
        %v4434 = vsel %vm4433, 1, 0
        %v4435 = vadd.s32 %v4431, %v4427
        %v4436 = vadd.s32 %v4432, %v4434
        %v4437 = vadd.s32 %v4436, %v4426
        %v4438 = vadd.s32 %v4437, %v4428
        %v4439 = vmul.u32 %v4394, %v4385
        %v4440 = vadd.s32 %v4416, %v4435
        %vm4441 = vc.u32 %v4416, %v4435
        %v4442 = vadd.s32 %v4438, 1
        %v4443 = vsel %vm4441, %v4442, %v4438
        %v4444 = vadd.s32 %v4439, %v4443
        %v4445 = vadd.s32 %v4444, 536870912
        %v4446 = vshrl.u32 %v4445, 30
        %v4447 = vshll.u32 %v4446, 30
        %v4448 = vsub.s32 %v4444, %v4447
        %vm4449 = vcmp.lt.s32.totalorder %v4448, 0
        %v4450 = vsub.s32 0, %v4448
        %v4451 = vsel %vm4449, %v4450, %v4448
        %v4452 = vclz %v4451
        %v4453 = vsub.s32 %v4452, 2
        %vm4454 = vcmp.gt.s32.totalorder 0, %v4453
        %v4455 = vsel %vm4454, 0, %v4453
        %v4456 = vsub.s32 32, %v4455
        %v4457 = vshll.u32 %v4448, %v4455
        %v4458 = vshrl.u32 %v4440, %v4456
        %v4459 = vor.u32 %v4457, %v4458
        %v4460 = vsub.s32 4294967266, %v4455
        %v4461 = vadd.s32 %v4460, 127
        %v4462 = vshll.u32 %v4461, 23
        %v4463 = vor.u32 4788187, %v4462
        %v4464 = vand.u32 2147483647, %v4463
        %v4466 = vcvt.s32.f32 %v4459
        %v4467 = vmul.f32 %v4466, %v4464
        %v4468 = vxor.u32 %v4467, 2147483648
        %v4469 = vsel %vm4348, %v4468, %v4467
        %v4470 = vsub.s32 4, %v4446
        %v4471 = vsel %vm4348, %v4470, %v4446
        %v4472 = vsel %vm4347, %v3098, %v4469
        %v4473 = vsel %vm4347, 0, %v4471
        %v4474 = vmul.f32 %v4472, %v4472
        %v4475 = vmul.f32 %v4474, -0.001358992
        %v4476 = vadd.f32 %v4475, 0.041655596
        %v4477 = vmul.f32 %v4474, %v4476
        %v4478 = vadd.f32 %v4477, -0.4999988
        %v4479 = vmul.f32 %v4474, %v4478
        %v4480 = vadd.f32 1.0, %v4479
        %v4481 = vmul.f32 %v4472, %v4472
        %v4482 = vmul.f32 %v4481, -0.00019511016
        %v4483 = vadd.f32 %v4482, 0.008332121
        %v4484 = vmul.f32 %v4481, %v4483
        %v4485 = vadd.f32 %v4484, -0.16666654
        %v4486 = vmul.f32 %v4481, %v4485
        %v4487 = vadd.f32 %v4486, 1.0
        %v4488 = vmul.f32 %v4487, %v4472
        %vm4489 = vweird.f32 %v3098
        %v4490 = vadd.s32 %v4473, 3
        %v4491 = vand.u32 %v4490, 3
        %vm4492 = vcmp.lt.s32.totalorder %v4491, 2
        %vm4493 = vcmp.eq.s32.totalorder %v4491, 0
        %v4494 = vxor.u32 %v4488, 2147483648
        %v4495 = vsel %vm4493, %v4480, %v4494
        %vm4496 = vcmp.eq.s32.totalorder %v4491, 2
        %v4497 = vxor.u32 %v4480, 2147483648
        %v4498 = vsel %vm4496, %v4497, %v4488
        %v4499 = vsel %vm4492, %v4495, %v4498
        %v4500 = vsel %vm4489, nan, %v4499
        %v4501 = vand.u32 2147483647, %v3099
        %vm4502 = vcmp.le.f32.partialorder %v4501, 0.7853982
        %vm4503 = vcmp.lt.s32.totalorder %v3099, 0
        %v4504 = vand.u32 %v3099, 2139095040
        %v4505 = vshrl.u32 %v4504, 23
        %v4506 = vsub.s32 %v4505, 127
        %v4507 = vand.u32 2147483647, %v3099
        %v4508 = vand.u32 %v4507, 8388607
        %v4509 = vor.u32 %v4508, 8388608
        %v4510 = vsub.s32 0, %v4509
        %v4511 = vadd.s32 %v4506, 1
        %vm4512 = vcmp.gt.s32.totalorder %v4511, 0
        %v4513 = vsel %vm4512, %v4511, 0
        %v4514 = vshrl.u32 %v4513, 5
        %v4515 = vand.u32 %v4513, 31
        %v4516 = vsub.s32 32, %v4515
        %v4517 = vshrl.u32 683565275, %v4516
        %v4518 = vshll.u32 683565275, %v4515
        %v4519 = vshrl.u32 2475754826, %v4516
        %v4520 = vor.u32 %v4518, %v4519
        %v4521 = vshll.u32 2475754826, %v4515
        %v4522 = vshrl.u32 2131351028, %v4516
        %v4523 = vor.u32 %v4521, %v4522
        %v4524 = vshll.u32 2131351028, %v4515
        %v4525 = vshrl.u32 2102212464, %v4516
        %v4526 = vor.u32 %v4524, %v4525
        %v4527 = vshll.u32 2102212464, %v4515
        %v4528 = vshrl.u32 920167782, %v4516
        %v4529 = vor.u32 %v4527, %v4528
        %v4530 = vshll.u32 920167782, %v4515
        %v4531 = vshrl.u32 1326507024, %v4516
        %v4532 = vor.u32 %v4530, %v4531
        %vm4533 = vcmp.lt.s32.totalorder %v4514, 1
        %vm4534 = vcmp.lt.s32.totalorder %v4514, 2
        %vm4535 = vcmp.lt.s32.totalorder %v4514, 3
        %vm4536 = vcmp.lt.s32.totalorder %v4514, 4
        %v4537 = vsel %vm4533, %v4517, %v4520
        %v4538 = vsel %vm4536, %v4526, 2102212464
        %v4539 = vsel %vm4535, %v4523, %v4538
        %v4540 = vsel %vm4534, %v4537, %v4539
        %v4541 = vsel %vm4533, %v4520, %v4523
        %v4542 = vsel %vm4536, %v4529, 920167782
        %v4543 = vsel %vm4535, %v4526, %v4542
        %v4544 = vsel %vm4534, %v4541, %v4543
        %v4545 = vsel %vm4533, %v4523, %v4526
        %v4546 = vsel %vm4536, %v4532, 1326507024
        %v4547 = vsel %vm4535, %v4529, %v4546
        %v4548 = vsel %vm4534, %v4545, %v4547
        %v4549 = vshll.u32 %v4509, 8
        %v4550 = vand.u32 %v4549, 65535
        %v4551 = vshrl.u32 %v4549, 16
        %v4552 = vand.u32 %v4548, 65535
        %v4553 = vshrl.u32 %v4548, 16
        %v4554 = vmul.u32 %v4550, %v4552
        %v4555 = vmul.u32 %v4550, %v4553
        %v4556 = vmul.u32 %v4551, %v4552
        %v4557 = vmul.u32 %v4551, %v4553
        %v4558 = vshll.u32 %v4555, 16
        %v4559 = vshrl.u32 %v4555, 16
        %v4560 = vshll.u32 %v4556, 16
        %v4561 = vshrl.u32 %v4556, 16
        %vm4562 = vc.u32 %v4554, %v4558
        %v4563 = vsel %vm4562, 1, 0
        %v4564 = vadd.s32 %v4554, %v4558
        %v4565 = vadd.s32 %v4557, %v4563
        %vm4566 = vc.u32 %v4564, %v4560
        %v4567 = vsel %vm4566, 1, 0
        %v4568 = vadd.s32 %v4564, %v4560
        %v4569 = vadd.s32 %v4565, %v4567
        %v4570 = vadd.s32 %v4569, %v4559
        %v4571 = vadd.s32 %v4570, %v4561
        %v4572 = vand.u32 %v4549, 65535
        %v4573 = vshrl.u32 %v4549, 16
        %v4574 = vand.u32 %v4544, 65535
        %v4575 = vshrl.u32 %v4544, 16
        %v4576 = vmul.u32 %v4572, %v4574
        %v4577 = vmul.u32 %v4572, %v4575
        %v4578 = vmul.u32 %v4573, %v4574
        %v4579 = vmul.u32 %v4573, %v4575
        %v4580 = vshll.u32 %v4577, 16
        %v4581 = vshrl.u32 %v4577, 16
        %v4582 = vshll.u32 %v4578, 16
        %v4583 = vshrl.u32 %v4578, 16
        %vm4584 = vc.u32 %v4576, %v4580
        %v4585 = vsel %vm4584, 1, 0
        %v4586 = vadd.s32 %v4576, %v4580
        %v4587 = vadd.s32 %v4579, %v4585
        %vm4588 = vc.u32 %v4586, %v4582
        %v4589 = vsel %vm4588, 1, 0
        %v4590 = vadd.s32 %v4586, %v4582
        %v4591 = vadd.s32 %v4587, %v4589
        %v4592 = vadd.s32 %v4591, %v4581
        %v4593 = vadd.s32 %v4592, %v4583
        %v4594 = vmul.u32 %v4549, %v4540
        %v4595 = vadd.s32 %v4571, %v4590
        %vm4596 = vc.u32 %v4571, %v4590
        %v4597 = vadd.s32 %v4593, 1
        %v4598 = vsel %vm4596, %v4597, %v4593
        %v4599 = vadd.s32 %v4594, %v4598
        %v4600 = vadd.s32 %v4599, 536870912
        %v4601 = vshrl.u32 %v4600, 30
        %v4602 = vshll.u32 %v4601, 30
        %v4603 = vsub.s32 %v4599, %v4602
        %vm4604 = vcmp.lt.s32.totalorder %v4603, 0
        %v4605 = vsub.s32 0, %v4603
        %v4606 = vsel %vm4604, %v4605, %v4603
        %v4607 = vclz %v4606
        %v4608 = vsub.s32 %v4607, 2
        %vm4609 = vcmp.gt.s32.totalorder 0, %v4608
        %v4610 = vsel %vm4609, 0, %v4608
        %v4611 = vsub.s32 32, %v4610
        %v4612 = vshll.u32 %v4603, %v4610
        %v4613 = vshrl.u32 %v4595, %v4611
        %v4614 = vor.u32 %v4612, %v4613
        %v4615 = vsub.s32 4294967266, %v4610
        %v4616 = vadd.s32 %v4615, 127
        %v4617 = vshll.u32 %v4616, 23
        %v4618 = vor.u32 4788187, %v4617
        %v4619 = vand.u32 2147483647, %v4618
        %v4621 = vcvt.s32.f32 %v4614
        %v4622 = vmul.f32 %v4621, %v4619
        %v4623 = vxor.u32 %v4622, 2147483648
        %v4624 = vsel %vm4503, %v4623, %v4622
        %v4625 = vsub.s32 4, %v4601
        %v4626 = vsel %vm4503, %v4625, %v4601
        %v4627 = vsel %vm4502, %v3099, %v4624
        %v4628 = vsel %vm4502, 0, %v4626
        %v4629 = vmul.f32 %v4627, %v4627
        %v4630 = vmul.f32 %v4629, -0.001358992
        %v4631 = vadd.f32 %v4630, 0.041655596
        %v4632 = vmul.f32 %v4629, %v4631
        %v4633 = vadd.f32 %v4632, -0.4999988
        %v4634 = vmul.f32 %v4629, %v4633
        %v4635 = vadd.f32 1.0, %v4634
        %v4636 = vmul.f32 %v4627, %v4627
        %v4637 = vmul.f32 %v4636, -0.00019511016
        %v4638 = vadd.f32 %v4637, 0.008332121
        %v4639 = vmul.f32 %v4636, %v4638
        %v4640 = vadd.f32 %v4639, -0.16666654
        %v4641 = vmul.f32 %v4636, %v4640
        %v4642 = vadd.f32 %v4641, 1.0
        %v4643 = vmul.f32 %v4642, %v4627
        %vm4644 = vweird.f32 %v3099
        %v4645 = vadd.s32 %v4628, 3
        %v4646 = vand.u32 %v4645, 3
        %vm4647 = vcmp.lt.s32.totalorder %v4646, 2
        %vm4648 = vcmp.eq.s32.totalorder %v4646, 0
        %v4649 = vxor.u32 %v4643, 2147483648
        %v4650 = vsel %vm4648, %v4635, %v4649
        %vm4651 = vcmp.eq.s32.totalorder %v4646, 2
        %v4652 = vxor.u32 %v4635, 2147483648
        %v4653 = vsel %vm4651, %v4652, %v4643
        %v4654 = vsel %vm4647, %v4650, %v4653
        %v4655 = vsel %vm4644, nan, %v4654
        %v4656 = vand.u32 2147483647, %v3100
        %vm4657 = vcmp.le.f32.partialorder %v4656, 0.7853982
        %vm4658 = vcmp.lt.s32.totalorder %v3100, 0
        %v4659 = vand.u32 %v3100, 2139095040
        %v4660 = vshrl.u32 %v4659, 23
        %v4661 = vsub.s32 %v4660, 127
        %v4662 = vand.u32 2147483647, %v3100
        %v4663 = vand.u32 %v4662, 8388607
        %v4664 = vor.u32 %v4663, 8388608
        %v4665 = vsub.s32 0, %v4664
        %v4666 = vadd.s32 %v4661, 1
        %vm4667 = vcmp.gt.s32.totalorder %v4666, 0
        %v4668 = vsel %vm4667, %v4666, 0
        %v4669 = vshrl.u32 %v4668, 5
        %v4670 = vand.u32 %v4668, 31
        %v4671 = vsub.s32 32, %v4670
        %v4672 = vshrl.u32 683565275, %v4671
        %v4673 = vshll.u32 683565275, %v4670
        %v4674 = vshrl.u32 2475754826, %v4671
        %v4675 = vor.u32 %v4673, %v4674
        %v4676 = vshll.u32 2475754826, %v4670
        %v4677 = vshrl.u32 2131351028, %v4671
        %v4678 = vor.u32 %v4676, %v4677
        %v4679 = vshll.u32 2131351028, %v4670
        %v4680 = vshrl.u32 2102212464, %v4671
        %v4681 = vor.u32 %v4679, %v4680
        %v4682 = vshll.u32 2102212464, %v4670
        %v4683 = vshrl.u32 920167782, %v4671
        %v4684 = vor.u32 %v4682, %v4683
        %v4685 = vshll.u32 920167782, %v4670
        %v4686 = vshrl.u32 1326507024, %v4671
        %v4687 = vor.u32 %v4685, %v4686
        %vm4688 = vcmp.lt.s32.totalorder %v4669, 1
        %vm4689 = vcmp.lt.s32.totalorder %v4669, 2
        %vm4690 = vcmp.lt.s32.totalorder %v4669, 3
        %vm4691 = vcmp.lt.s32.totalorder %v4669, 4
        %v4692 = vsel %vm4688, %v4672, %v4675
        %v4693 = vsel %vm4691, %v4681, 2102212464
        %v4694 = vsel %vm4690, %v4678, %v4693
        %v4695 = vsel %vm4689, %v4692, %v4694
        %v4696 = vsel %vm4688, %v4675, %v4678
        %v4697 = vsel %vm4691, %v4684, 920167782
        %v4698 = vsel %vm4690, %v4681, %v4697
        %v4699 = vsel %vm4689, %v4696, %v4698
        %v4700 = vsel %vm4688, %v4678, %v4681
        %v4701 = vsel %vm4691, %v4687, 1326507024
        %v4702 = vsel %vm4690, %v4684, %v4701
        %v4703 = vsel %vm4689, %v4700, %v4702
        %v4704 = vshll.u32 %v4664, 8
        %v4705 = vand.u32 %v4704, 65535
        %v4706 = vshrl.u32 %v4704, 16
        %v4707 = vand.u32 %v4703, 65535
        %v4708 = vshrl.u32 %v4703, 16
        %v4709 = vmul.u32 %v4705, %v4707
        %v4710 = vmul.u32 %v4705, %v4708
        %v4711 = vmul.u32 %v4706, %v4707
        %v4712 = vmul.u32 %v4706, %v4708
        %v4713 = vshll.u32 %v4710, 16
        %v4714 = vshrl.u32 %v4710, 16
        %v4715 = vshll.u32 %v4711, 16
        %v4716 = vshrl.u32 %v4711, 16
        %vm4717 = vc.u32 %v4709, %v4713
        %v4718 = vsel %vm4717, 1, 0
        %v4719 = vadd.s32 %v4709, %v4713
        %v4720 = vadd.s32 %v4712, %v4718
        %vm4721 = vc.u32 %v4719, %v4715
        %v4722 = vsel %vm4721, 1, 0
        %v4723 = vadd.s32 %v4719, %v4715
        %v4724 = vadd.s32 %v4720, %v4722
        %v4725 = vadd.s32 %v4724, %v4714
        %v4726 = vadd.s32 %v4725, %v4716
        %v4727 = vand.u32 %v4704, 65535
        %v4728 = vshrl.u32 %v4704, 16
        %v4729 = vand.u32 %v4699, 65535
        %v4730 = vshrl.u32 %v4699, 16
        %v4731 = vmul.u32 %v4727, %v4729
        %v4732 = vmul.u32 %v4727, %v4730
        %v4733 = vmul.u32 %v4728, %v4729
        %v4734 = vmul.u32 %v4728, %v4730
        %v4735 = vshll.u32 %v4732, 16
        %v4736 = vshrl.u32 %v4732, 16
        %v4737 = vshll.u32 %v4733, 16
        %v4738 = vshrl.u32 %v4733, 16
        %vm4739 = vc.u32 %v4731, %v4735
        %v4740 = vsel %vm4739, 1, 0
        %v4741 = vadd.s32 %v4731, %v4735
        %v4742 = vadd.s32 %v4734, %v4740
        %vm4743 = vc.u32 %v4741, %v4737
        %v4744 = vsel %vm4743, 1, 0
        %v4745 = vadd.s32 %v4741, %v4737
        %v4746 = vadd.s32 %v4742, %v4744
        %v4747 = vadd.s32 %v4746, %v4736
        %v4748 = vadd.s32 %v4747, %v4738
        %v4749 = vmul.u32 %v4704, %v4695
        %v4750 = vadd.s32 %v4726, %v4745
        %vm4751 = vc.u32 %v4726, %v4745
        %v4752 = vadd.s32 %v4748, 1
        %v4753 = vsel %vm4751, %v4752, %v4748
        %v4754 = vadd.s32 %v4749, %v4753
        %v4755 = vadd.s32 %v4754, 536870912
        %v4756 = vshrl.u32 %v4755, 30
        %v4757 = vshll.u32 %v4756, 30
        %v4758 = vsub.s32 %v4754, %v4757
        %vm4759 = vcmp.lt.s32.totalorder %v4758, 0
        %v4760 = vsub.s32 0, %v4758
        %v4761 = vsel %vm4759, %v4760, %v4758
        %v4762 = vclz %v4761
        %v4763 = vsub.s32 %v4762, 2
        %vm4764 = vcmp.gt.s32.totalorder 0, %v4763
        %v4765 = vsel %vm4764, 0, %v4763
        %v4766 = vsub.s32 32, %v4765
        %v4767 = vshll.u32 %v4758, %v4765
        %v4768 = vshrl.u32 %v4750, %v4766
        %v4769 = vor.u32 %v4767, %v4768
        %v4770 = vsub.s32 4294967266, %v4765
        %v4771 = vadd.s32 %v4770, 127
        %v4772 = vshll.u32 %v4771, 23
        %v4773 = vor.u32 4788187, %v4772
        %v4774 = vand.u32 2147483647, %v4773
        %v4776 = vcvt.s32.f32 %v4769
        %v4777 = vmul.f32 %v4776, %v4774
        %v4778 = vxor.u32 %v4777, 2147483648
        %v4779 = vsel %vm4658, %v4778, %v4777
        %v4780 = vsub.s32 4, %v4756
        %v4781 = vsel %vm4658, %v4780, %v4756
        %v4782 = vsel %vm4657, %v3100, %v4779
        %v4783 = vsel %vm4657, 0, %v4781
        %v4784 = vmul.f32 %v4782, %v4782
        %v4785 = vmul.f32 %v4784, -0.001358992
        %v4786 = vadd.f32 %v4785, 0.041655596
        %v4787 = vmul.f32 %v4784, %v4786
        %v4788 = vadd.f32 %v4787, -0.4999988
        %v4789 = vmul.f32 %v4784, %v4788
        %v4790 = vadd.f32 1.0, %v4789
        %v4791 = vmul.f32 %v4782, %v4782
        %v4792 = vmul.f32 %v4791, -0.00019511016
        %v4793 = vadd.f32 %v4792, 0.008332121
        %v4794 = vmul.f32 %v4791, %v4793
        %v4795 = vadd.f32 %v4794, -0.16666654
        %v4796 = vmul.f32 %v4791, %v4795
        %v4797 = vadd.f32 %v4796, 1.0
        %v4798 = vmul.f32 %v4797, %v4782
        %vm4799 = vweird.f32 %v3100
        %v4800 = vadd.s32 %v4783, 3
        %v4801 = vand.u32 %v4800, 3
        %vm4802 = vcmp.lt.s32.totalorder %v4801, 2
        %vm4803 = vcmp.eq.s32.totalorder %v4801, 0
        %v4804 = vxor.u32 %v4798, 2147483648
        %v4805 = vsel %vm4803, %v4790, %v4804
        %vm4806 = vcmp.eq.s32.totalorder %v4801, 2
        %v4807 = vxor.u32 %v4790, 2147483648
        %v4808 = vsel %vm4806, %v4807, %v4798
        %v4809 = vsel %vm4802, %v4805, %v4808
        %v4810 = vsel %vm4799, nan, %v4809
        %v4811 = vand.u32 2147483647, %v3101
        %vm4812 = vcmp.le.f32.partialorder %v4811, 0.7853982
        %vm4813 = vcmp.lt.s32.totalorder %v3101, 0
        %v4814 = vand.u32 %v3101, 2139095040
        %v4815 = vshrl.u32 %v4814, 23
        %v4816 = vsub.s32 %v4815, 127
        %v4817 = vand.u32 2147483647, %v3101
        %v4818 = vand.u32 %v4817, 8388607
        %v4819 = vor.u32 %v4818, 8388608
        %v4820 = vsub.s32 0, %v4819
        %v4821 = vadd.s32 %v4816, 1
        %vm4822 = vcmp.gt.s32.totalorder %v4821, 0
        %v4823 = vsel %vm4822, %v4821, 0
        %v4824 = vshrl.u32 %v4823, 5
        %v4825 = vand.u32 %v4823, 31
        %v4826 = vsub.s32 32, %v4825
        %v4827 = vshrl.u32 683565275, %v4826
        %v4828 = vshll.u32 683565275, %v4825
        %v4829 = vshrl.u32 2475754826, %v4826
        %v4830 = vor.u32 %v4828, %v4829
        %v4831 = vshll.u32 2475754826, %v4825
        %v4832 = vshrl.u32 2131351028, %v4826
        %v4833 = vor.u32 %v4831, %v4832
        %v4834 = vshll.u32 2131351028, %v4825
        %v4835 = vshrl.u32 2102212464, %v4826
        %v4836 = vor.u32 %v4834, %v4835
        %v4837 = vshll.u32 2102212464, %v4825
        %v4838 = vshrl.u32 920167782, %v4826
        %v4839 = vor.u32 %v4837, %v4838
        %v4840 = vshll.u32 920167782, %v4825
        %v4841 = vshrl.u32 1326507024, %v4826
        %v4842 = vor.u32 %v4840, %v4841
        %vm4843 = vcmp.lt.s32.totalorder %v4824, 1
        %vm4844 = vcmp.lt.s32.totalorder %v4824, 2
        %vm4845 = vcmp.lt.s32.totalorder %v4824, 3
        %vm4846 = vcmp.lt.s32.totalorder %v4824, 4
        %v4847 = vsel %vm4843, %v4827, %v4830
        %v4848 = vsel %vm4846, %v4836, 2102212464
        %v4849 = vsel %vm4845, %v4833, %v4848
        %v4850 = vsel %vm4844, %v4847, %v4849
        %v4851 = vsel %vm4843, %v4830, %v4833
        %v4852 = vsel %vm4846, %v4839, 920167782
        %v4853 = vsel %vm4845, %v4836, %v4852
        %v4854 = vsel %vm4844, %v4851, %v4853
        %v4855 = vsel %vm4843, %v4833, %v4836
        %v4856 = vsel %vm4846, %v4842, 1326507024
        %v4857 = vsel %vm4845, %v4839, %v4856
        %v4858 = vsel %vm4844, %v4855, %v4857
        %v4859 = vshll.u32 %v4819, 8
        %v4860 = vand.u32 %v4859, 65535
        %v4861 = vshrl.u32 %v4859, 16
        %v4862 = vand.u32 %v4858, 65535
        %v4863 = vshrl.u32 %v4858, 16
        %v4864 = vmul.u32 %v4860, %v4862
        %v4865 = vmul.u32 %v4860, %v4863
        %v4866 = vmul.u32 %v4861, %v4862
        %v4867 = vmul.u32 %v4861, %v4863
        %v4868 = vshll.u32 %v4865, 16
        %v4869 = vshrl.u32 %v4865, 16
        %v4870 = vshll.u32 %v4866, 16
        %v4871 = vshrl.u32 %v4866, 16
        %vm4872 = vc.u32 %v4864, %v4868
        %v4873 = vsel %vm4872, 1, 0
        %v4874 = vadd.s32 %v4864, %v4868
        %v4875 = vadd.s32 %v4867, %v4873
        %vm4876 = vc.u32 %v4874, %v4870
        %v4877 = vsel %vm4876, 1, 0
        %v4878 = vadd.s32 %v4874, %v4870
        %v4879 = vadd.s32 %v4875, %v4877
        %v4880 = vadd.s32 %v4879, %v4869
        %v4881 = vadd.s32 %v4880, %v4871
        %v4882 = vand.u32 %v4859, 65535
        %v4883 = vshrl.u32 %v4859, 16
        %v4884 = vand.u32 %v4854, 65535
        %v4885 = vshrl.u32 %v4854, 16
        %v4886 = vmul.u32 %v4882, %v4884
        %v4887 = vmul.u32 %v4882, %v4885
        %v4888 = vmul.u32 %v4883, %v4884
        %v4889 = vmul.u32 %v4883, %v4885
        %v4890 = vshll.u32 %v4887, 16
        %v4891 = vshrl.u32 %v4887, 16
        %v4892 = vshll.u32 %v4888, 16
        %v4893 = vshrl.u32 %v4888, 16
        %vm4894 = vc.u32 %v4886, %v4890
        %v4895 = vsel %vm4894, 1, 0
        %v4896 = vadd.s32 %v4886, %v4890
        %v4897 = vadd.s32 %v4889, %v4895
        %vm4898 = vc.u32 %v4896, %v4892
        %v4899 = vsel %vm4898, 1, 0
        %v4900 = vadd.s32 %v4896, %v4892
        %v4901 = vadd.s32 %v4897, %v4899
        %v4902 = vadd.s32 %v4901, %v4891
        %v4903 = vadd.s32 %v4902, %v4893
        %v4904 = vmul.u32 %v4859, %v4850
        %v4905 = vadd.s32 %v4881, %v4900
        %vm4906 = vc.u32 %v4881, %v4900
        %v4907 = vadd.s32 %v4903, 1
        %v4908 = vsel %vm4906, %v4907, %v4903
        %v4909 = vadd.s32 %v4904, %v4908
        %v4910 = vadd.s32 %v4909, 536870912
        %v4911 = vshrl.u32 %v4910, 30
        %v4912 = vshll.u32 %v4911, 30
        %v4913 = vsub.s32 %v4909, %v4912
        %vm4914 = vcmp.lt.s32.totalorder %v4913, 0
        %v4915 = vsub.s32 0, %v4913
        %v4916 = vsel %vm4914, %v4915, %v4913
        %v4917 = vclz %v4916
        %v4918 = vsub.s32 %v4917, 2
        %vm4919 = vcmp.gt.s32.totalorder 0, %v4918
        %v4920 = vsel %vm4919, 0, %v4918
        %v4921 = vsub.s32 32, %v4920
        %v4922 = vshll.u32 %v4913, %v4920
        %v4923 = vshrl.u32 %v4905, %v4921
        %v4924 = vor.u32 %v4922, %v4923
        %v4925 = vsub.s32 4294967266, %v4920
        %v4926 = vadd.s32 %v4925, 127
        %v4927 = vshll.u32 %v4926, 23
        %v4928 = vor.u32 4788187, %v4927
        %v4929 = vand.u32 2147483647, %v4928
        %v4931 = vcvt.s32.f32 %v4924
        %v4932 = vmul.f32 %v4931, %v4929
        %v4933 = vxor.u32 %v4932, 2147483648
        %v4934 = vsel %vm4813, %v4933, %v4932
        %v4935 = vsub.s32 4, %v4911
        %v4936 = vsel %vm4813, %v4935, %v4911
        %v4937 = vsel %vm4812, %v3101, %v4934
        %v4938 = vsel %vm4812, 0, %v4936
        %v4939 = vmul.f32 %v4937, %v4937
        %v4940 = vmul.f32 %v4939, -0.001358992
        %v4941 = vadd.f32 %v4940, 0.041655596
        %v4942 = vmul.f32 %v4939, %v4941
        %v4943 = vadd.f32 %v4942, -0.4999988
        %v4944 = vmul.f32 %v4939, %v4943
        %v4945 = vadd.f32 1.0, %v4944
        %v4946 = vmul.f32 %v4937, %v4937
        %v4947 = vmul.f32 %v4946, -0.00019511016
        %v4948 = vadd.f32 %v4947, 0.008332121
        %v4949 = vmul.f32 %v4946, %v4948
        %v4950 = vadd.f32 %v4949, -0.16666654
        %v4951 = vmul.f32 %v4946, %v4950
        %v4952 = vadd.f32 %v4951, 1.0
        %v4953 = vmul.f32 %v4952, %v4937
        %vm4954 = vweird.f32 %v3101
        %v4955 = vadd.s32 %v4938, 3
        %v4956 = vand.u32 %v4955, 3
        %vm4957 = vcmp.lt.s32.totalorder %v4956, 2
        %vm4958 = vcmp.eq.s32.totalorder %v4956, 0
        %v4959 = vxor.u32 %v4953, 2147483648
        %v4960 = vsel %vm4958, %v4945, %v4959
        %vm4961 = vcmp.eq.s32.totalorder %v4956, 2
        %v4962 = vxor.u32 %v4945, 2147483648
        %v4963 = vsel %vm4961, %v4962, %v4953
        %v4964 = vsel %vm4957, %v4960, %v4963
        %v4965 = vsel %vm4954, nan, %v4964
        %v4966 = vand.u32 2147483647, %v3102
        %vm4967 = vcmp.le.f32.partialorder %v4966, 0.7853982
        %vm4968 = vcmp.lt.s32.totalorder %v3102, 0
        %v4969 = vand.u32 %v3102, 2139095040
        %v4970 = vshrl.u32 %v4969, 23
        %v4971 = vsub.s32 %v4970, 127
        %v4972 = vand.u32 2147483647, %v3102
        %v4973 = vand.u32 %v4972, 8388607
        %v4974 = vor.u32 %v4973, 8388608
        %v4975 = vsub.s32 0, %v4974
        %v4976 = vadd.s32 %v4971, 1
        %vm4977 = vcmp.gt.s32.totalorder %v4976, 0
        %v4978 = vsel %vm4977, %v4976, 0
        %v4979 = vshrl.u32 %v4978, 5
        %v4980 = vand.u32 %v4978, 31
        %v4981 = vsub.s32 32, %v4980
        %v4982 = vshrl.u32 683565275, %v4981
        %v4983 = vshll.u32 683565275, %v4980
        %v4984 = vshrl.u32 2475754826, %v4981
        %v4985 = vor.u32 %v4983, %v4984
        %v4986 = vshll.u32 2475754826, %v4980
        %v4987 = vshrl.u32 2131351028, %v4981
        %v4988 = vor.u32 %v4986, %v4987
        %v4989 = vshll.u32 2131351028, %v4980
        %v4990 = vshrl.u32 2102212464, %v4981
        %v4991 = vor.u32 %v4989, %v4990
        %v4992 = vshll.u32 2102212464, %v4980
        %v4993 = vshrl.u32 920167782, %v4981
        %v4994 = vor.u32 %v4992, %v4993
        %v4995 = vshll.u32 920167782, %v4980
        %v4996 = vshrl.u32 1326507024, %v4981
        %v4997 = vor.u32 %v4995, %v4996
        %vm4998 = vcmp.lt.s32.totalorder %v4979, 1
        %vm4999 = vcmp.lt.s32.totalorder %v4979, 2
        %vm5000 = vcmp.lt.s32.totalorder %v4979, 3
        %vm5001 = vcmp.lt.s32.totalorder %v4979, 4
        %v5002 = vsel %vm4998, %v4982, %v4985
        %v5003 = vsel %vm5001, %v4991, 2102212464
        %v5004 = vsel %vm5000, %v4988, %v5003
        %v5005 = vsel %vm4999, %v5002, %v5004
        %v5006 = vsel %vm4998, %v4985, %v4988
        %v5007 = vsel %vm5001, %v4994, 920167782
        %v5008 = vsel %vm5000, %v4991, %v5007
        %v5009 = vsel %vm4999, %v5006, %v5008
        %v5010 = vsel %vm4998, %v4988, %v4991
        %v5011 = vsel %vm5001, %v4997, 1326507024
        %v5012 = vsel %vm5000, %v4994, %v5011
        %v5013 = vsel %vm4999, %v5010, %v5012
        %v5014 = vshll.u32 %v4974, 8
        %v5015 = vand.u32 %v5014, 65535
        %v5016 = vshrl.u32 %v5014, 16
        %v5017 = vand.u32 %v5013, 65535
        %v5018 = vshrl.u32 %v5013, 16
        %v5019 = vmul.u32 %v5015, %v5017
        %v5020 = vmul.u32 %v5015, %v5018
        %v5021 = vmul.u32 %v5016, %v5017
        %v5022 = vmul.u32 %v5016, %v5018
        %v5023 = vshll.u32 %v5020, 16
        %v5024 = vshrl.u32 %v5020, 16
        %v5025 = vshll.u32 %v5021, 16
        %v5026 = vshrl.u32 %v5021, 16
        %vm5027 = vc.u32 %v5019, %v5023
        %v5028 = vsel %vm5027, 1, 0
        %v5029 = vadd.s32 %v5019, %v5023
        %v5030 = vadd.s32 %v5022, %v5028
        %vm5031 = vc.u32 %v5029, %v5025
        %v5032 = vsel %vm5031, 1, 0
        %v5033 = vadd.s32 %v5029, %v5025
        %v5034 = vadd.s32 %v5030, %v5032
        %v5035 = vadd.s32 %v5034, %v5024
        %v5036 = vadd.s32 %v5035, %v5026
        %v5037 = vand.u32 %v5014, 65535
        %v5038 = vshrl.u32 %v5014, 16
        %v5039 = vand.u32 %v5009, 65535
        %v5040 = vshrl.u32 %v5009, 16
        %v5041 = vmul.u32 %v5037, %v5039
        %v5042 = vmul.u32 %v5037, %v5040
        %v5043 = vmul.u32 %v5038, %v5039
        %v5044 = vmul.u32 %v5038, %v5040
        %v5045 = vshll.u32 %v5042, 16
        %v5046 = vshrl.u32 %v5042, 16
        %v5047 = vshll.u32 %v5043, 16
        %v5048 = vshrl.u32 %v5043, 16
        %vm5049 = vc.u32 %v5041, %v5045
        %v5050 = vsel %vm5049, 1, 0
        %v5051 = vadd.s32 %v5041, %v5045
        %v5052 = vadd.s32 %v5044, %v5050
        %vm5053 = vc.u32 %v5051, %v5047
        %v5054 = vsel %vm5053, 1, 0
        %v5055 = vadd.s32 %v5051, %v5047
        %v5056 = vadd.s32 %v5052, %v5054
        %v5057 = vadd.s32 %v5056, %v5046
        %v5058 = vadd.s32 %v5057, %v5048
        %v5059 = vmul.u32 %v5014, %v5005
        %v5060 = vadd.s32 %v5036, %v5055
        %vm5061 = vc.u32 %v5036, %v5055
        %v5062 = vadd.s32 %v5058, 1
        %v5063 = vsel %vm5061, %v5062, %v5058
        %v5064 = vadd.s32 %v5059, %v5063
        %v5065 = vadd.s32 %v5064, 536870912
        %v5066 = vshrl.u32 %v5065, 30
        %v5067 = vshll.u32 %v5066, 30
        %v5068 = vsub.s32 %v5064, %v5067
        %vm5069 = vcmp.lt.s32.totalorder %v5068, 0
        %v5070 = vsub.s32 0, %v5068
        %v5071 = vsel %vm5069, %v5070, %v5068
        %v5072 = vclz %v5071
        %v5073 = vsub.s32 %v5072, 2
        %vm5074 = vcmp.gt.s32.totalorder 0, %v5073
        %v5075 = vsel %vm5074, 0, %v5073
        %v5076 = vsub.s32 32, %v5075
        %v5077 = vshll.u32 %v5068, %v5075
        %v5078 = vshrl.u32 %v5060, %v5076
        %v5079 = vor.u32 %v5077, %v5078
        %v5080 = vsub.s32 4294967266, %v5075
        %v5081 = vadd.s32 %v5080, 127
        %v5082 = vshll.u32 %v5081, 23
        %v5083 = vor.u32 4788187, %v5082
        %v5084 = vand.u32 2147483647, %v5083
        %v5086 = vcvt.s32.f32 %v5079
        %v5087 = vmul.f32 %v5086, %v5084
        %v5088 = vxor.u32 %v5087, 2147483648
        %v5089 = vsel %vm4968, %v5088, %v5087
        %v5090 = vsub.s32 4, %v5066
        %v5091 = vsel %vm4968, %v5090, %v5066
        %v5092 = vsel %vm4967, %v3102, %v5089
        %v5093 = vsel %vm4967, 0, %v5091
        %v5094 = vmul.f32 %v5092, %v5092
        %v5095 = vmul.f32 %v5094, -0.001358992
        %v5096 = vadd.f32 %v5095, 0.041655596
        %v5097 = vmul.f32 %v5094, %v5096
        %v5098 = vadd.f32 %v5097, -0.4999988
        %v5099 = vmul.f32 %v5094, %v5098
        %v5100 = vadd.f32 1.0, %v5099
        %v5101 = vmul.f32 %v5092, %v5092
        %v5102 = vmul.f32 %v5101, -0.00019511016
        %v5103 = vadd.f32 %v5102, 0.008332121
        %v5104 = vmul.f32 %v5101, %v5103
        %v5105 = vadd.f32 %v5104, -0.16666654
        %v5106 = vmul.f32 %v5101, %v5105
        %v5107 = vadd.f32 %v5106, 1.0
        %v5108 = vmul.f32 %v5107, %v5092
        %vm5109 = vweird.f32 %v3102
        %v5110 = vadd.s32 %v5093, 3
        %v5111 = vand.u32 %v5110, 3
        %vm5112 = vcmp.lt.s32.totalorder %v5111, 2
        %vm5113 = vcmp.eq.s32.totalorder %v5111, 0
        %v5114 = vxor.u32 %v5108, 2147483648
        %v5115 = vsel %vm5113, %v5100, %v5114
        %vm5116 = vcmp.eq.s32.totalorder %v5111, 2
        %v5117 = vxor.u32 %v5100, 2147483648
        %v5118 = vsel %vm5116, %v5117, %v5108
        %v5119 = vsel %vm5112, %v5115, %v5118
        %v5120 = vsel %vm5109, nan, %v5119
        %v5121 = vand.u32 2147483647, %v3103
        %vm5122 = vcmp.le.f32.partialorder %v5121, 0.7853982
        %vm5123 = vcmp.lt.s32.totalorder %v3103, 0
        %v5124 = vand.u32 %v3103, 2139095040
        %v5125 = vshrl.u32 %v5124, 23
        %v5126 = vsub.s32 %v5125, 127
        %v5127 = vand.u32 2147483647, %v3103
        %v5128 = vand.u32 %v5127, 8388607
        %v5129 = vor.u32 %v5128, 8388608
        %v5130 = vsub.s32 0, %v5129
        %v5131 = vadd.s32 %v5126, 1
        %vm5132 = vcmp.gt.s32.totalorder %v5131, 0
        %v5133 = vsel %vm5132, %v5131, 0
        %v5134 = vshrl.u32 %v5133, 5
        %v5135 = vand.u32 %v5133, 31
        %v5136 = vsub.s32 32, %v5135
        %v5137 = vshrl.u32 683565275, %v5136
        %v5138 = vshll.u32 683565275, %v5135
        %v5139 = vshrl.u32 2475754826, %v5136
        %v5140 = vor.u32 %v5138, %v5139
        %v5141 = vshll.u32 2475754826, %v5135
        %v5142 = vshrl.u32 2131351028, %v5136
        %v5143 = vor.u32 %v5141, %v5142
        %v5144 = vshll.u32 2131351028, %v5135
        %v5145 = vshrl.u32 2102212464, %v5136
        %v5146 = vor.u32 %v5144, %v5145
        %v5147 = vshll.u32 2102212464, %v5135
        %v5148 = vshrl.u32 920167782, %v5136
        %v5149 = vor.u32 %v5147, %v5148
        %v5150 = vshll.u32 920167782, %v5135
        %v5151 = vshrl.u32 1326507024, %v5136
        %v5152 = vor.u32 %v5150, %v5151
        %vm5153 = vcmp.lt.s32.totalorder %v5134, 1
        %vm5154 = vcmp.lt.s32.totalorder %v5134, 2
        %vm5155 = vcmp.lt.s32.totalorder %v5134, 3
        %vm5156 = vcmp.lt.s32.totalorder %v5134, 4
        %v5157 = vsel %vm5153, %v5137, %v5140
        %v5158 = vsel %vm5156, %v5146, 2102212464
        %v5159 = vsel %vm5155, %v5143, %v5158
        %v5160 = vsel %vm5154, %v5157, %v5159
        %v5161 = vsel %vm5153, %v5140, %v5143
        %v5162 = vsel %vm5156, %v5149, 920167782
        %v5163 = vsel %vm5155, %v5146, %v5162
        %v5164 = vsel %vm5154, %v5161, %v5163
        %v5165 = vsel %vm5153, %v5143, %v5146
        %v5166 = vsel %vm5156, %v5152, 1326507024
        %v5167 = vsel %vm5155, %v5149, %v5166
        %v5168 = vsel %vm5154, %v5165, %v5167
        %v5169 = vshll.u32 %v5129, 8
        %v5170 = vand.u32 %v5169, 65535
        %v5171 = vshrl.u32 %v5169, 16
        %v5172 = vand.u32 %v5168, 65535
        %v5173 = vshrl.u32 %v5168, 16
        %v5174 = vmul.u32 %v5170, %v5172
        %v5175 = vmul.u32 %v5170, %v5173
        %v5176 = vmul.u32 %v5171, %v5172
        %v5177 = vmul.u32 %v5171, %v5173
        %v5178 = vshll.u32 %v5175, 16
        %v5179 = vshrl.u32 %v5175, 16
        %v5180 = vshll.u32 %v5176, 16
        %v5181 = vshrl.u32 %v5176, 16
        %vm5182 = vc.u32 %v5174, %v5178
        %v5183 = vsel %vm5182, 1, 0
        %v5184 = vadd.s32 %v5174, %v5178
        %v5185 = vadd.s32 %v5177, %v5183
        %vm5186 = vc.u32 %v5184, %v5180
        %v5187 = vsel %vm5186, 1, 0
        %v5188 = vadd.s32 %v5184, %v5180
        %v5189 = vadd.s32 %v5185, %v5187
        %v5190 = vadd.s32 %v5189, %v5179
        %v5191 = vadd.s32 %v5190, %v5181
        %v5192 = vand.u32 %v5169, 65535
        %v5193 = vshrl.u32 %v5169, 16
        %v5194 = vand.u32 %v5164, 65535
        %v5195 = vshrl.u32 %v5164, 16
        %v5196 = vmul.u32 %v5192, %v5194
        %v5197 = vmul.u32 %v5192, %v5195
        %v5198 = vmul.u32 %v5193, %v5194
        %v5199 = vmul.u32 %v5193, %v5195
        %v5200 = vshll.u32 %v5197, 16
        %v5201 = vshrl.u32 %v5197, 16
        %v5202 = vshll.u32 %v5198, 16
        %v5203 = vshrl.u32 %v5198, 16
        %vm5204 = vc.u32 %v5196, %v5200
        %v5205 = vsel %vm5204, 1, 0
        %v5206 = vadd.s32 %v5196, %v5200
        %v5207 = vadd.s32 %v5199, %v5205
        %vm5208 = vc.u32 %v5206, %v5202
        %v5209 = vsel %vm5208, 1, 0
        %v5210 = vadd.s32 %v5206, %v5202
        %v5211 = vadd.s32 %v5207, %v5209
        %v5212 = vadd.s32 %v5211, %v5201
        %v5213 = vadd.s32 %v5212, %v5203
        %v5214 = vmul.u32 %v5169, %v5160
        %v5215 = vadd.s32 %v5191, %v5210
        %vm5216 = vc.u32 %v5191, %v5210
        %v5217 = vadd.s32 %v5213, 1
        %v5218 = vsel %vm5216, %v5217, %v5213
        %v5219 = vadd.s32 %v5214, %v5218
        %v5220 = vadd.s32 %v5219, 536870912
        %v5221 = vshrl.u32 %v5220, 30
        %v5222 = vshll.u32 %v5221, 30
        %v5223 = vsub.s32 %v5219, %v5222
        %vm5224 = vcmp.lt.s32.totalorder %v5223, 0
        %v5225 = vsub.s32 0, %v5223
        %v5226 = vsel %vm5224, %v5225, %v5223
        %v5227 = vclz %v5226
        %v5228 = vsub.s32 %v5227, 2
        %vm5229 = vcmp.gt.s32.totalorder 0, %v5228
        %v5230 = vsel %vm5229, 0, %v5228
        %v5231 = vsub.s32 32, %v5230
        %v5232 = vshll.u32 %v5223, %v5230
        %v5233 = vshrl.u32 %v5215, %v5231
        %v5234 = vor.u32 %v5232, %v5233
        %v5235 = vsub.s32 4294967266, %v5230
        %v5236 = vadd.s32 %v5235, 127
        %v5237 = vshll.u32 %v5236, 23
        %v5238 = vor.u32 4788187, %v5237
        %v5239 = vand.u32 2147483647, %v5238
        %v5241 = vcvt.s32.f32 %v5234
        %v5242 = vmul.f32 %v5241, %v5239
        %v5243 = vxor.u32 %v5242, 2147483648
        %v5244 = vsel %vm5123, %v5243, %v5242
        %v5245 = vsub.s32 4, %v5221
        %v5246 = vsel %vm5123, %v5245, %v5221
        %v5247 = vsel %vm5122, %v3103, %v5244
        %v5248 = vsel %vm5122, 0, %v5246
        %v5249 = vmul.f32 %v5247, %v5247
        %v5250 = vmul.f32 %v5249, -0.001358992
        %v5251 = vadd.f32 %v5250, 0.041655596
        %v5252 = vmul.f32 %v5249, %v5251
        %v5253 = vadd.f32 %v5252, -0.4999988
        %v5254 = vmul.f32 %v5249, %v5253
        %v5255 = vadd.f32 1.0, %v5254
        %v5256 = vmul.f32 %v5247, %v5247
        %v5257 = vmul.f32 %v5256, -0.00019511016
        %v5258 = vadd.f32 %v5257, 0.008332121
        %v5259 = vmul.f32 %v5256, %v5258
        %v5260 = vadd.f32 %v5259, -0.16666654
        %v5261 = vmul.f32 %v5256, %v5260
        %v5262 = vadd.f32 %v5261, 1.0
        %v5263 = vmul.f32 %v5262, %v5247
        %vm5264 = vweird.f32 %v3103
        %v5265 = vadd.s32 %v5248, 3
        %v5266 = vand.u32 %v5265, 3
        %vm5267 = vcmp.lt.s32.totalorder %v5266, 2
        %vm5268 = vcmp.eq.s32.totalorder %v5266, 0
        %v5269 = vxor.u32 %v5263, 2147483648
        %v5270 = vsel %vm5268, %v5255, %v5269
        %vm5271 = vcmp.eq.s32.totalorder %v5266, 2
        %v5272 = vxor.u32 %v5255, 2147483648
        %v5273 = vsel %vm5271, %v5272, %v5263
        %v5274 = vsel %vm5267, %v5270, %v5273
        %v5275 = vsel %vm5264, nan, %v5274
        %v5276 = vand.u32 2147483647, %v3104
        %vm5277 = vcmp.le.f32.partialorder %v5276, 0.7853982
        %vm5278 = vcmp.lt.s32.totalorder %v3104, 0
        %v5279 = vand.u32 %v3104, 2139095040
        %v5280 = vshrl.u32 %v5279, 23
        %v5281 = vsub.s32 %v5280, 127
        %v5282 = vand.u32 2147483647, %v3104
        %v5283 = vand.u32 %v5282, 8388607
        %v5284 = vor.u32 %v5283, 8388608
        %v5285 = vsub.s32 0, %v5284
        %v5286 = vadd.s32 %v5281, 1
        %vm5287 = vcmp.gt.s32.totalorder %v5286, 0
        %v5288 = vsel %vm5287, %v5286, 0
        %v5289 = vshrl.u32 %v5288, 5
        %v5290 = vand.u32 %v5288, 31
        %v5291 = vsub.s32 32, %v5290
        %v5292 = vshrl.u32 683565275, %v5291
        %v5293 = vshll.u32 683565275, %v5290
        %v5294 = vshrl.u32 2475754826, %v5291
        %v5295 = vor.u32 %v5293, %v5294
        %v5296 = vshll.u32 2475754826, %v5290
        %v5297 = vshrl.u32 2131351028, %v5291
        %v5298 = vor.u32 %v5296, %v5297
        %v5299 = vshll.u32 2131351028, %v5290
        %v5300 = vshrl.u32 2102212464, %v5291
        %v5301 = vor.u32 %v5299, %v5300
        %v5302 = vshll.u32 2102212464, %v5290
        %v5303 = vshrl.u32 920167782, %v5291
        %v5304 = vor.u32 %v5302, %v5303
        %v5305 = vshll.u32 920167782, %v5290
        %v5306 = vshrl.u32 1326507024, %v5291
        %v5307 = vor.u32 %v5305, %v5306
        %vm5308 = vcmp.lt.s32.totalorder %v5289, 1
        %vm5309 = vcmp.lt.s32.totalorder %v5289, 2
        %vm5310 = vcmp.lt.s32.totalorder %v5289, 3
        %vm5311 = vcmp.lt.s32.totalorder %v5289, 4
        %v5312 = vsel %vm5308, %v5292, %v5295
        %v5313 = vsel %vm5311, %v5301, 2102212464
        %v5314 = vsel %vm5310, %v5298, %v5313
        %v5315 = vsel %vm5309, %v5312, %v5314
        %v5316 = vsel %vm5308, %v5295, %v5298
        %v5317 = vsel %vm5311, %v5304, 920167782
        %v5318 = vsel %vm5310, %v5301, %v5317
        %v5319 = vsel %vm5309, %v5316, %v5318
        %v5320 = vsel %vm5308, %v5298, %v5301
        %v5321 = vsel %vm5311, %v5307, 1326507024
        %v5322 = vsel %vm5310, %v5304, %v5321
        %v5323 = vsel %vm5309, %v5320, %v5322
        %v5324 = vshll.u32 %v5284, 8
        %v5325 = vand.u32 %v5324, 65535
        %v5326 = vshrl.u32 %v5324, 16
        %v5327 = vand.u32 %v5323, 65535
        %v5328 = vshrl.u32 %v5323, 16
        %v5329 = vmul.u32 %v5325, %v5327
        %v5330 = vmul.u32 %v5325, %v5328
        %v5331 = vmul.u32 %v5326, %v5327
        %v5332 = vmul.u32 %v5326, %v5328
        %v5333 = vshll.u32 %v5330, 16
        %v5334 = vshrl.u32 %v5330, 16
        %v5335 = vshll.u32 %v5331, 16
        %v5336 = vshrl.u32 %v5331, 16
        %vm5337 = vc.u32 %v5329, %v5333
        %v5338 = vsel %vm5337, 1, 0
        %v5339 = vadd.s32 %v5329, %v5333
        %v5340 = vadd.s32 %v5332, %v5338
        %vm5341 = vc.u32 %v5339, %v5335
        %v5342 = vsel %vm5341, 1, 0
        %v5343 = vadd.s32 %v5339, %v5335
        %v5344 = vadd.s32 %v5340, %v5342
        %v5345 = vadd.s32 %v5344, %v5334
        %v5346 = vadd.s32 %v5345, %v5336
        %v5347 = vand.u32 %v5324, 65535
        %v5348 = vshrl.u32 %v5324, 16
        %v5349 = vand.u32 %v5319, 65535
        %v5350 = vshrl.u32 %v5319, 16
        %v5351 = vmul.u32 %v5347, %v5349
        %v5352 = vmul.u32 %v5347, %v5350
        %v5353 = vmul.u32 %v5348, %v5349
        %v5354 = vmul.u32 %v5348, %v5350
        %v5355 = vshll.u32 %v5352, 16
        %v5356 = vshrl.u32 %v5352, 16
        %v5357 = vshll.u32 %v5353, 16
        %v5358 = vshrl.u32 %v5353, 16
        %vm5359 = vc.u32 %v5351, %v5355
        %v5360 = vsel %vm5359, 1, 0
        %v5361 = vadd.s32 %v5351, %v5355
        %v5362 = vadd.s32 %v5354, %v5360
        %vm5363 = vc.u32 %v5361, %v5357
        %v5364 = vsel %vm5363, 1, 0
        %v5365 = vadd.s32 %v5361, %v5357
        %v5366 = vadd.s32 %v5362, %v5364
        %v5367 = vadd.s32 %v5366, %v5356
        %v5368 = vadd.s32 %v5367, %v5358
        %v5369 = vmul.u32 %v5324, %v5315
        %v5370 = vadd.s32 %v5346, %v5365
        %vm5371 = vc.u32 %v5346, %v5365
        %v5372 = vadd.s32 %v5368, 1
        %v5373 = vsel %vm5371, %v5372, %v5368
        %v5374 = vadd.s32 %v5369, %v5373
        %v5375 = vadd.s32 %v5374, 536870912
        %v5376 = vshrl.u32 %v5375, 30
        %v5377 = vshll.u32 %v5376, 30
        %v5378 = vsub.s32 %v5374, %v5377
        %vm5379 = vcmp.lt.s32.totalorder %v5378, 0
        %v5380 = vsub.s32 0, %v5378
        %v5381 = vsel %vm5379, %v5380, %v5378
        %v5382 = vclz %v5381
        %v5383 = vsub.s32 %v5382, 2
        %vm5384 = vcmp.gt.s32.totalorder 0, %v5383
        %v5385 = vsel %vm5384, 0, %v5383
        %v5386 = vsub.s32 32, %v5385
        %v5387 = vshll.u32 %v5378, %v5385
        %v5388 = vshrl.u32 %v5370, %v5386
        %v5389 = vor.u32 %v5387, %v5388
        %v5390 = vsub.s32 4294967266, %v5385
        %v5391 = vadd.s32 %v5390, 127
        %v5392 = vshll.u32 %v5391, 23
        %v5393 = vor.u32 4788187, %v5392
        %v5394 = vand.u32 2147483647, %v5393
        %v5396 = vcvt.s32.f32 %v5389
        %v5397 = vmul.f32 %v5396, %v5394
        %v5398 = vxor.u32 %v5397, 2147483648
        %v5399 = vsel %vm5278, %v5398, %v5397
        %v5400 = vsub.s32 4, %v5376
        %v5401 = vsel %vm5278, %v5400, %v5376
        %v5402 = vsel %vm5277, %v3104, %v5399
        %v5403 = vsel %vm5277, 0, %v5401
        %v5404 = vmul.f32 %v5402, %v5402
        %v5405 = vmul.f32 %v5404, -0.001358992
        %v5406 = vadd.f32 %v5405, 0.041655596
        %v5407 = vmul.f32 %v5404, %v5406
        %v5408 = vadd.f32 %v5407, -0.4999988
        %v5409 = vmul.f32 %v5404, %v5408
        %v5410 = vadd.f32 1.0, %v5409
        %v5411 = vmul.f32 %v5402, %v5402
        %v5412 = vmul.f32 %v5411, -0.00019511016
        %v5413 = vadd.f32 %v5412, 0.008332121
        %v5414 = vmul.f32 %v5411, %v5413
        %v5415 = vadd.f32 %v5414, -0.16666654
        %v5416 = vmul.f32 %v5411, %v5415
        %v5417 = vadd.f32 %v5416, 1.0
        %v5418 = vmul.f32 %v5417, %v5402
        %vm5419 = vweird.f32 %v3104
        %v5420 = vadd.s32 %v5403, 3
        %v5421 = vand.u32 %v5420, 3
        %vm5422 = vcmp.lt.s32.totalorder %v5421, 2
        %vm5423 = vcmp.eq.s32.totalorder %v5421, 0
        %v5424 = vxor.u32 %v5418, 2147483648
        %v5425 = vsel %vm5423, %v5410, %v5424
        %vm5426 = vcmp.eq.s32.totalorder %v5421, 2
        %v5427 = vxor.u32 %v5410, 2147483648
        %v5428 = vsel %vm5426, %v5427, %v5418
        %v5429 = vsel %vm5422, %v5425, %v5428
        %v5430 = vsel %vm5419, nan, %v5429
        %v5431 = vand.u32 2147483647, %v3105
        %vm5432 = vcmp.le.f32.partialorder %v5431, 0.7853982
        %vm5433 = vcmp.lt.s32.totalorder %v3105, 0
        %v5434 = vand.u32 %v3105, 2139095040
        %v5435 = vshrl.u32 %v5434, 23
        %v5436 = vsub.s32 %v5435, 127
        %v5437 = vand.u32 2147483647, %v3105
        %v5438 = vand.u32 %v5437, 8388607
        %v5439 = vor.u32 %v5438, 8388608
        %v5440 = vsub.s32 0, %v5439
        %v5441 = vadd.s32 %v5436, 1
        %vm5442 = vcmp.gt.s32.totalorder %v5441, 0
        %v5443 = vsel %vm5442, %v5441, 0
        %v5444 = vshrl.u32 %v5443, 5
        %v5445 = vand.u32 %v5443, 31
        %v5446 = vsub.s32 32, %v5445
        %v5447 = vshrl.u32 683565275, %v5446
        %v5448 = vshll.u32 683565275, %v5445
        %v5449 = vshrl.u32 2475754826, %v5446
        %v5450 = vor.u32 %v5448, %v5449
        %v5451 = vshll.u32 2475754826, %v5445
        %v5452 = vshrl.u32 2131351028, %v5446
        %v5453 = vor.u32 %v5451, %v5452
        %v5454 = vshll.u32 2131351028, %v5445
        %v5455 = vshrl.u32 2102212464, %v5446
        %v5456 = vor.u32 %v5454, %v5455
        %v5457 = vshll.u32 2102212464, %v5445
        %v5458 = vshrl.u32 920167782, %v5446
        %v5459 = vor.u32 %v5457, %v5458
        %v5460 = vshll.u32 920167782, %v5445
        %v5461 = vshrl.u32 1326507024, %v5446
        %v5462 = vor.u32 %v5460, %v5461
        %vm5463 = vcmp.lt.s32.totalorder %v5444, 1
        %vm5464 = vcmp.lt.s32.totalorder %v5444, 2
        %vm5465 = vcmp.lt.s32.totalorder %v5444, 3
        %vm5466 = vcmp.lt.s32.totalorder %v5444, 4
        %v5467 = vsel %vm5463, %v5447, %v5450
        %v5468 = vsel %vm5466, %v5456, 2102212464
        %v5469 = vsel %vm5465, %v5453, %v5468
        %v5470 = vsel %vm5464, %v5467, %v5469
        %v5471 = vsel %vm5463, %v5450, %v5453
        %v5472 = vsel %vm5466, %v5459, 920167782
        %v5473 = vsel %vm5465, %v5456, %v5472
        %v5474 = vsel %vm5464, %v5471, %v5473
        %v5475 = vsel %vm5463, %v5453, %v5456
        %v5476 = vsel %vm5466, %v5462, 1326507024
        %v5477 = vsel %vm5465, %v5459, %v5476
        %v5478 = vsel %vm5464, %v5475, %v5477
        %v5479 = vshll.u32 %v5439, 8
        %v5480 = vand.u32 %v5479, 65535
        %v5481 = vshrl.u32 %v5479, 16
        %v5482 = vand.u32 %v5478, 65535
        %v5483 = vshrl.u32 %v5478, 16
        %v5484 = vmul.u32 %v5480, %v5482
        %v5485 = vmul.u32 %v5480, %v5483
        %v5486 = vmul.u32 %v5481, %v5482
        %v5487 = vmul.u32 %v5481, %v5483
        %v5488 = vshll.u32 %v5485, 16
        %v5489 = vshrl.u32 %v5485, 16
        %v5490 = vshll.u32 %v5486, 16
        %v5491 = vshrl.u32 %v5486, 16
        %vm5492 = vc.u32 %v5484, %v5488
        %v5493 = vsel %vm5492, 1, 0
        %v5494 = vadd.s32 %v5484, %v5488
        %v5495 = vadd.s32 %v5487, %v5493
        %vm5496 = vc.u32 %v5494, %v5490
        %v5497 = vsel %vm5496, 1, 0
        %v5498 = vadd.s32 %v5494, %v5490
        %v5499 = vadd.s32 %v5495, %v5497
        %v5500 = vadd.s32 %v5499, %v5489
        %v5501 = vadd.s32 %v5500, %v5491
        %v5502 = vand.u32 %v5479, 65535
        %v5503 = vshrl.u32 %v5479, 16
        %v5504 = vand.u32 %v5474, 65535
        %v5505 = vshrl.u32 %v5474, 16
        %v5506 = vmul.u32 %v5502, %v5504
        %v5507 = vmul.u32 %v5502, %v5505
        %v5508 = vmul.u32 %v5503, %v5504
        %v5509 = vmul.u32 %v5503, %v5505
        %v5510 = vshll.u32 %v5507, 16
        %v5511 = vshrl.u32 %v5507, 16
        %v5512 = vshll.u32 %v5508, 16
        %v5513 = vshrl.u32 %v5508, 16
        %vm5514 = vc.u32 %v5506, %v5510
        %v5515 = vsel %vm5514, 1, 0
        %v5516 = vadd.s32 %v5506, %v5510
        %v5517 = vadd.s32 %v5509, %v5515
        %vm5518 = vc.u32 %v5516, %v5512
        %v5519 = vsel %vm5518, 1, 0
        %v5520 = vadd.s32 %v5516, %v5512
        %v5521 = vadd.s32 %v5517, %v5519
        %v5522 = vadd.s32 %v5521, %v5511
        %v5523 = vadd.s32 %v5522, %v5513
        %v5524 = vmul.u32 %v5479, %v5470
        %v5525 = vadd.s32 %v5501, %v5520
        %vm5526 = vc.u32 %v5501, %v5520
        %v5527 = vadd.s32 %v5523, 1
        %v5528 = vsel %vm5526, %v5527, %v5523
        %v5529 = vadd.s32 %v5524, %v5528
        %v5530 = vadd.s32 %v5529, 536870912
        %v5531 = vshrl.u32 %v5530, 30
        %v5532 = vshll.u32 %v5531, 30
        %v5533 = vsub.s32 %v5529, %v5532
        %vm5534 = vcmp.lt.s32.totalorder %v5533, 0
        %v5535 = vsub.s32 0, %v5533
        %v5536 = vsel %vm5534, %v5535, %v5533
        %v5537 = vclz %v5536
        %v5538 = vsub.s32 %v5537, 2
        %vm5539 = vcmp.gt.s32.totalorder 0, %v5538
        %v5540 = vsel %vm5539, 0, %v5538
        %v5541 = vsub.s32 32, %v5540
        %v5542 = vshll.u32 %v5533, %v5540
        %v5543 = vshrl.u32 %v5525, %v5541
        %v5544 = vor.u32 %v5542, %v5543
        %v5545 = vsub.s32 4294967266, %v5540
        %v5546 = vadd.s32 %v5545, 127
        %v5547 = vshll.u32 %v5546, 23
        %v5548 = vor.u32 4788187, %v5547
        %v5549 = vand.u32 2147483647, %v5548
        %v5551 = vcvt.s32.f32 %v5544
        %v5552 = vmul.f32 %v5551, %v5549
        %v5553 = vxor.u32 %v5552, 2147483648
        %v5554 = vsel %vm5433, %v5553, %v5552
        %v5555 = vsub.s32 4, %v5531
        %v5556 = vsel %vm5433, %v5555, %v5531
        %v5557 = vsel %vm5432, %v3105, %v5554
        %v5558 = vsel %vm5432, 0, %v5556
        %v5559 = vmul.f32 %v5557, %v5557
        %v5560 = vmul.f32 %v5559, -0.001358992
        %v5561 = vadd.f32 %v5560, 0.041655596
        %v5562 = vmul.f32 %v5559, %v5561
        %v5563 = vadd.f32 %v5562, -0.4999988
        %v5564 = vmul.f32 %v5559, %v5563
        %v5565 = vadd.f32 1.0, %v5564
        %v5566 = vmul.f32 %v5557, %v5557
        %v5567 = vmul.f32 %v5566, -0.00019511016
        %v5568 = vadd.f32 %v5567, 0.008332121
        %v5569 = vmul.f32 %v5566, %v5568
        %v5570 = vadd.f32 %v5569, -0.16666654
        %v5571 = vmul.f32 %v5566, %v5570
        %v5572 = vadd.f32 %v5571, 1.0
        %v5573 = vmul.f32 %v5572, %v5557
        %vm5574 = vweird.f32 %v3105
        %v5575 = vadd.s32 %v5558, 3
        %v5576 = vand.u32 %v5575, 3
        %vm5577 = vcmp.lt.s32.totalorder %v5576, 2
        %vm5578 = vcmp.eq.s32.totalorder %v5576, 0
        %v5579 = vxor.u32 %v5573, 2147483648
        %v5580 = vsel %vm5578, %v5565, %v5579
        %vm5581 = vcmp.eq.s32.totalorder %v5576, 2
        %v5582 = vxor.u32 %v5565, 2147483648
        %v5583 = vsel %vm5581, %v5582, %v5573
        %v5584 = vsel %vm5577, %v5580, %v5583
        %v5585 = vsel %vm5574, nan, %v5584
        %v5586 = vld [vmem:[%s5] sm:$0xff]
        %v5587 = vld [vmem:[%s5 + $0x8] sm:$0xff]
        %v5588 = vld [vmem:[%s5 + $0x10] sm:$0xff]
        %v5589 = vld [vmem:[%s5 + $0x18] sm:$0xff]
        %v5590 = vld [vmem:[%s5 + $0x20] sm:$0xff]
        %v5591 = vld [vmem:[%s5 + $0x28] sm:$0xff]
        %v5592 = vld [vmem:[%s5 + $0x30] sm:$0xff]
        %v5593 = vld [vmem:[%s5 + $0x38] sm:$0xff]
        %v5594 = vld [vmem:[%s5 + $0x40] sm:$0xff]
        %v5595 = vld [vmem:[%s5 + $0x48] sm:$0xff]
        %v5596 = vld [vmem:[%s5 + $0x50] sm:$0xff]
        %v5597 = vld [vmem:[%s5 + $0x58] sm:$0xff]
        %v5598 = vld [vmem:[%s5 + $0x60] sm:$0xff]
        %v5599 = vld [vmem:[%s5 + $0x68] sm:$0xff]
        %v5600 = vld [vmem:[%s5 + $0x70] sm:$0xff]
        %v5601 = vld [vmem:[%s5 + $0x78] sm:$0xff]
        %5602 = vmatpush.msra.mxu0 %v5601
        %5603 = vmatpush.msra.mxu0 %v5600
        %5604 = vmatpush.msra.mxu0 %v5599
        %5605 = vmatpush.msra.mxu0 %v5598
        %5606 = vmatpush.msra.mxu0 %v5597
        %5607 = vmatpush.msra.mxu0 %v5596
        %5608 = vmatpush.msra.mxu0 %v5595
        %5609 = vmatpush.msra.mxu0 %v5594
        %5610 = vmatpush.msra.mxu0 %v5593
        %5611 = vmatpush.msra.mxu0 %v5592
        %5612 = vmatpush.msra.mxu0 %v5591
        %5613 = vmatpush.msra.mxu0 %v5590
        %5614 = vmatpush.msra.mxu0 %v5589
        %5615 = vmatpush.msra.mxu0 %v5588
        %5616 = vmatpush.msra.mxu0 %v5587
        %5617 = vmatpush.msra.mxu0 %v5586
        %5618 = vmatmul.f32.gmra.mxu0 %v709
        %v5619 = vpop.f32.mrf.mxu0
        %v5620 = vadd.f32 0.0, %v5619
        %5621 = vmatmul.f32.gmra.mxu0 %v864
        %v5622 = vpop.f32.mrf.mxu0
        %v5623 = vadd.f32 0.0, %v5622
        %5624 = vmatmul.f32.gmra.mxu0 %v1019
        %v5625 = vpop.f32.mrf.mxu0
        %v5626 = vadd.f32 0.0, %v5625
        %5627 = vmatmul.f32.gmra.mxu0 %v1174
        %v5628 = vpop.f32.mrf.mxu0
        %v5629 = vadd.f32 0.0, %v5628
        %5630 = vmatmul.f32.gmra.mxu0 %v1329
        %v5631 = vpop.f32.mrf.mxu0
        %v5632 = vadd.f32 0.0, %v5631
        %5633 = vmatmul.f32.gmra.mxu0 %v1484
        %v5634 = vpop.f32.mrf.mxu0
        %v5635 = vadd.f32 0.0, %v5634
        %5636 = vmatmul.f32.gmra.mxu0 %v1639
        %v5637 = vpop.f32.mrf.mxu0
        %v5638 = vadd.f32 0.0, %v5637
        %5639 = vmatmul.f32.gmra.mxu0 %v1794
        %v5640 = vpop.f32.mrf.mxu0
        %v5641 = vadd.f32 0.0, %v5640
        %5642 = vmatmul.f32.gmra.mxu0 %v1949
        %v5643 = vpop.f32.mrf.mxu0
        %v5644 = vadd.f32 0.0, %v5643
        %5645 = vmatmul.f32.gmra.mxu0 %v2104
        %v5646 = vpop.f32.mrf.mxu0
        %v5647 = vadd.f32 0.0, %v5646
        %5648 = vmatmul.f32.gmra.mxu0 %v2259
        %v5649 = vpop.f32.mrf.mxu0
        %v5650 = vadd.f32 0.0, %v5649
        %5651 = vmatmul.f32.gmra.mxu0 %v2414
        %v5652 = vpop.f32.mrf.mxu0
        %v5653 = vadd.f32 0.0, %v5652
        %5654 = vmatmul.f32.gmra.mxu0 %v2569
        %v5655 = vpop.f32.mrf.mxu0
        %v5656 = vadd.f32 0.0, %v5655
        %5657 = vmatmul.f32.gmra.mxu0 %v2724
        %v5658 = vpop.f32.mrf.mxu0
        %v5659 = vadd.f32 0.0, %v5658
        %5660 = vmatmul.f32.gmra.mxu0 %v2879
        %v5661 = vpop.f32.mrf.mxu0
        %v5662 = vadd.f32 0.0, %v5661
        %5663 = vmatmul.f32.gmra.mxu0 %v3034
        %v5664 = vpop.f32.mrf.mxu0
        %v5665 = vadd.f32 0.0, %v5664
        %5666 = vdwg.mxu0
        %v5667 = vmul.f32 %v5620, %v3260
        %v5668 = vmul.f32 %v5623, %v3415
        %v5669 = vmul.f32 %v5626, %v3570
        %v5670 = vmul.f32 %v5629, %v3725
        %v5671 = vmul.f32 %v5632, %v3880
        %v5672 = vmul.f32 %v5635, %v4035
        %v5673 = vmul.f32 %v5638, %v4190
        %v5674 = vmul.f32 %v5641, %v4345
        %v5675 = vmul.f32 %v5644, %v4500
        %v5676 = vmul.f32 %v5647, %v4655
        %v5677 = vmul.f32 %v5650, %v4810
        %v5678 = vmul.f32 %v5653, %v4965
        %v5679 = vmul.f32 %v5656, %v5120
        %v5680 = vmul.f32 %v5659, %v5275
        %v5681 = vmul.f32 %v5662, %v5430
        %v5682 = vmul.f32 %v5665, %v5585
        %v5683 = vld [vmem:[%s6] sm:$0xff]
        %v5684 = vld [vmem:[%s6 + $0x8] sm:$0xff]
        %v5685 = vld [vmem:[%s6 + $0x10] sm:$0xff]
        %v5686 = vld [vmem:[%s6 + $0x18] sm:$0xff]
        %v5687 = vld [vmem:[%s6 + $0x20] sm:$0xff]
        %v5688 = vld [vmem:[%s6 + $0x28] sm:$0xff]
        %v5689 = vld [vmem:[%s6 + $0x30] sm:$0xff]
        %v5690 = vld [vmem:[%s6 + $0x38] sm:$0xff]
        %v5691 = vld [vmem:[%s6 + $0x40] sm:$0xff]
        %v5692 = vld [vmem:[%s6 + $0x48] sm:$0xff]
        %v5693 = vld [vmem:[%s6 + $0x50] sm:$0xff]
        %v5694 = vld [vmem:[%s6 + $0x58] sm:$0xff]
        %v5695 = vld [vmem:[%s6 + $0x60] sm:$0xff]
        %v5696 = vld [vmem:[%s6 + $0x68] sm:$0xff]
        %v5697 = vld [vmem:[%s6 + $0x70] sm:$0xff]
        %v5698 = vld [vmem:[%s6 + $0x78] sm:$0xff]
        %v5699 = vld [vmem:[%s7] sm:$0x1]
        %v5701 = vperm.slane %v5699, 0
        %5703 = vmatpush.msra.mxu0 %v5698
        %5704 = vmatpush.msra.mxu0 %v5697
        %5705 = vmatpush.msra.mxu0 %v5696
        %5706 = vmatpush.msra.mxu0 %v5695
        %5707 = vmatpush.msra.mxu0 %v5694
        %5708 = vmatpush.msra.mxu0 %v5693
        %5709 = vmatpush.msra.mxu0 %v5692
        %5710 = vmatpush.msra.mxu0 %v5691
        %5711 = vmatpush.msra.mxu0 %v5690
        %5712 = vmatpush.msra.mxu0 %v5689
        %5713 = vmatpush.msra.mxu0 %v5688
        %5714 = vmatpush.msra.mxu0 %v5687
        %5715 = vmatpush.msra.mxu0 %v5686
        %5716 = vmatpush.msra.mxu0 %v5685
        %5717 = vmatpush.msra.mxu0 %v5684
        %5718 = vmatpush.msra.mxu0 %v5683
        %5719 = vmatmul.f32.gmra.mxu0 %v5667
        %v5720 = vpop.f32.mrf.mxu0
        %v5721 = vadd.f32 %v5701, %v5720
        %5722 = vmatmul.f32.gmra.mxu0 %v5668
        %v5723 = vpop.f32.mrf.mxu0
        %v5724 = vadd.f32 %v5701, %v5723
        %5725 = vmatmul.f32.gmra.mxu0 %v5669
        %v5726 = vpop.f32.mrf.mxu0
        %v5727 = vadd.f32 %v5701, %v5726
        %5728 = vmatmul.f32.gmra.mxu0 %v5670
        %v5729 = vpop.f32.mrf.mxu0
        %v5730 = vadd.f32 %v5701, %v5729
        %5731 = vmatmul.f32.gmra.mxu0 %v5671
        %v5732 = vpop.f32.mrf.mxu0
        %v5733 = vadd.f32 %v5701, %v5732
        %5734 = vmatmul.f32.gmra.mxu0 %v5672
        %v5735 = vpop.f32.mrf.mxu0
        %v5736 = vadd.f32 %v5701, %v5735
        %5737 = vmatmul.f32.gmra.mxu0 %v5673
        %v5738 = vpop.f32.mrf.mxu0
        %v5739 = vadd.f32 %v5701, %v5738
        %5740 = vmatmul.f32.gmra.mxu0 %v5674
        %v5741 = vpop.f32.mrf.mxu0
        %v5742 = vadd.f32 %v5701, %v5741
        %5743 = vmatmul.f32.gmra.mxu0 %v5675
        %v5744 = vpop.f32.mrf.mxu0
        %v5745 = vadd.f32 %v5701, %v5744
        %5746 = vmatmul.f32.gmra.mxu0 %v5676
        %v5747 = vpop.f32.mrf.mxu0
        %v5748 = vadd.f32 %v5701, %v5747
        %5749 = vmatmul.f32.gmra.mxu0 %v5677
        %v5750 = vpop.f32.mrf.mxu0
        %v5751 = vadd.f32 %v5701, %v5750
        %5752 = vmatmul.f32.gmra.mxu0 %v5678
        %v5753 = vpop.f32.mrf.mxu0
        %v5754 = vadd.f32 %v5701, %v5753
        %5755 = vmatmul.f32.gmra.mxu0 %v5679
        %v5756 = vpop.f32.mrf.mxu0
        %v5757 = vadd.f32 %v5701, %v5756
        %5758 = vmatmul.f32.gmra.mxu0 %v5680
        %v5759 = vpop.f32.mrf.mxu0
        %v5760 = vadd.f32 %v5701, %v5759
        %5761 = vmatmul.f32.gmra.mxu0 %v5681
        %v5762 = vpop.f32.mrf.mxu0
        %v5763 = vadd.f32 %v5701, %v5762
        %5764 = vmatmul.f32.gmra.mxu0 %v5682
        %v5765 = vpop.f32.mrf.mxu0
        %v5766 = vadd.f32 %v5701, %v5765
        %5767 = vdwg.mxu0
        %vm5768 = vcmask 15360
        %5769 = vst.msk [vmem:[%s322] sm:$0xff] %vm5768, %v5721
        %5770 = vst.msk [vmem:[%s322 + $0x8] sm:$0xff] %vm5768, %v5724
        %5771 = vst.msk [vmem:[%s322 + $0x10] sm:$0xff] %vm5768, %v5727
        %5772 = vst.msk [vmem:[%s322 + $0x18] sm:$0xff] %vm5768, %v5730
        %5773 = vst.msk [vmem:[%s322 + $0x20] sm:$0xff] %vm5768, %v5733
        %5774 = vst.msk [vmem:[%s322 + $0x28] sm:$0xff] %vm5768, %v5736
        %5775 = vst.msk [vmem:[%s322 + $0x30] sm:$0xff] %vm5768, %v5739
        %5776 = vst.msk [vmem:[%s322 + $0x38] sm:$0xff] %vm5768, %v5742
        %5777 = vst.msk [vmem:[%s322 + $0x40] sm:$0xff] %vm5768, %v5745
        %5778 = vst.msk [vmem:[%s322 + $0x48] sm:$0xff] %vm5768, %v5748
        %5779 = vst.msk [vmem:[%s322 + $0x50] sm:$0xff] %vm5768, %v5751
        %5780 = vst.msk [vmem:[%s322 + $0x58] sm:$0xff] %vm5768, %v5754
        %5781 = vst.msk [vmem:[%s322 + $0x60] sm:$0xff] %vm5768, %v5757
        %5782 = vst.msk [vmem:[%s322 + $0x68] sm:$0xff] %vm5768, %v5760
        %5783 = vst.msk [vmem:[%s322 + $0x70] sm:$0xff] %vm5768, %v5763
        %5784 = vst.msk [vmem:[%s322 + $0x78] sm:$0xff] %vm5768, %v5766
        %s5785 = smul.u32 16, %s20
        %p5786 = scmp.lt.s32.totalorder %s5785, 31
        %s5787 = scalar_select %p5786, %s5785, 31
        %s5788 = smul.addr %s5787, 8
        %s5789 = scalar_lea.vmem %s8, %s5788
        // Predicated region
        $region57: #{tpu_custom_call.1} parent=51 // pred_check
          %p5790 = pneg %p211
        $region58: #{tpu_custom_call.1} parent=51 // pred_check_branch
          %5792 = sbr.rel (%p5790) target = $region60
        $region59: #{tpu_custom_call.1} parent=51 // pred_region
          %s5793 = smul.u32 16, %s20
        $region60: #{tpu_custom_call.1} parent=51 // pred_fallthru
          _
      $region52: #{tpu_custom_call.1} parent=5 // pred_fallthru
        _
      %p5794 = scmp.le.s32.totalorder 2, %s15
      // Predicated region
      $region61: #{tpu_custom_call.1} parent=5 // pred_check
        %p5795 = pneg %p5794
      $region62: #{tpu_custom_call.1} parent=5 // pred_check_branch
        %5797 = sbr.rel (%p5795) target = $region64
      $region63: #{tpu_custom_call.1} parent=5 // pred_region
        %s5798 = ssub.s32 %s15, 2
        // Predicated region
        $region65: #{tpu_custom_call.1} parent=63 // pred_check
          %p5799 = pneg %p217
        $region66: #{tpu_custom_call.1} parent=63 // pred_check_branch
          %5801 = sbr.rel (%p5799) target = $region68
        $region67: #{tpu_custom_call.1} parent=63 // pred_region
          %s5802 = smul.u32 16, %s21
          %p5803 = scmp.lt.s32.totalorder %s5802, 31
          %s5804 = scalar_select %p5803, %s5802, 31
          %s5805 = smul.addr %s5804, 8
          %s5806 = scalar_lea.vmem %s8, %s5805
        $region68: #{tpu_custom_call.1} parent=63 // pred_fallthru
          _
      $region64: #{tpu_custom_call.1} parent=5 // pred_fallthru
        _
    $region6: #{tpu_custom_call.1} parent=1 // loop_footer
      %s19 = sadd.s32 1, %s15
    $region7: #{tpu_custom_call.1} parent=1 // loop_footer_branch
      %14 = sbr.rel target = $region3
    $region8: #{tpu_custom_call.1} parent=1 // loop_exit
      _
    %5807 = vsyncpa [#allocation3], 1
    %s5808 = scalar_lea.sflag [#allocation3], 1
    %5809 = vsyncpa %s5808, 1

</llo_original>
